<compile_context>
chip_gen: v6e
topology: v6e:2x2x1
jax: 0.10.0
libtpu: 0.0.40
codegen_flags: <defaults>
</compile_context>

<pallas_src>
import functools

import jax
import jax.numpy as jnp
from jax import lax
from jax.experimental import pallas as pl
from jax.experimental.pallas import tpu as pltpu


# ----------------------------------------------------------------------------
# Small helpers
# ----------------------------------------------------------------------------
@functools.lru_cache(maxsize=None)
def _vmem_limit_bytes():
    """Scoped-VMEM budget derived from the actual chip (v5e/v6e: 128 MiB,
    v7x: 64 MiB per TC) with headroom, clamped to a safe range."""
    try:
        cap = int(pltpu.get_tpu_info().vmem_capacity_bytes)
    except Exception:
        cap = 64 * 1024 * 1024
    return max(16 * 1024 * 1024, min((cap * 3) // 4, 96 * 1024 * 1024))


def _compiler_params():
    return pltpu.CompilerParams(
        dimension_semantics=("parallel", "parallel"),
        vmem_limit_bytes=_vmem_limit_bytes())


def _pick_tile(n, max_tile, align):
    """Largest divisor of n that is a multiple of `align` and <= max_tile.
    Falls back to n itself (full dim is always a legal block)."""
    if n <= max_tile:
        return n
    t = (max_tile // align) * align
    while t >= align:
        if n % t == 0:
            return t
        t -= align
    return n


def _interp_tile(n, s):
    # Smaller N-tile when S is large: the 3-NN loop keeps ~4 live [tile, S]
    # f32 arrays; keep the working set near the vreg/VMEM sweet spot.
    if s >= 1024:
        m = 128
    elif s >= 512:
        m = 256
    else:
        m = 512
    return _pick_tile(n, m, 8)


# ----------------------------------------------------------------------------
# Kernel 1: square_distance + 3-NN inverse-distance interpolation
# ----------------------------------------------------------------------------
def _interp_kernel(xyz1_ref, xyz2_ref, p2_ref, out_ref, *, s_bits):
    # xyz1_ref: [TILE_N, 3] f32      one N-tile of batch b
    # xyz2_ref: [3, S]      f32      sampled positions (VMEM-resident over N)
    # p2_ref:   [3, S, D2]  bf16     3 vector components of points2 (resident)
    # out_ref:  [3, TILE_N, D2] bf16
    x1 = xyz1_ref[...]
    x2 = xyz2_ref[...]
    tn = x1.shape[0]
    s = x2.shape[1]

    # Pairwise squared distances on the VPU (always >= 0 by construction).
    d = jnp.zeros((tn, s), jnp.float32)
    for c in range(3):
        diff = x1[:, c:c + 1] - x2[c:c + 1, :]
        d = d + diff * diff

    # Pack (distance, column) into ONE monotone int32 sort key: for d >= 0 the
    # IEEE-754 bits are monotone as int32; clear the low `s_bits` mantissa bits
    # and OR in the column index.  A single lane-min then yields both the
    # (quantised to <= S ulps) min distance and its first arg-min, i.e. one XLU
    # reduction per neighbour instead of two.
    col = lax.broadcasted_iota(jnp.int32, (tn, s), 1)
    mask = jnp.int32((1 << s_bits) - 1)
    key = (pltpu.bitcast(d, jnp.int32) & ~mask) | col
    sentinel = jnp.int32(jnp.iinfo(jnp.int32).max)

    w_sparse = jnp.zeros((tn, s), jnp.float32)   # row-sparse weights (3/row)
    w_sum = jnp.zeros((tn, 1), jnp.float32)
    for _ in range(3):
        kmin = jnp.min(key, axis=-1, keepdims=True)              # [tn, 1]
        idx = kmin & mask                                        # first argmin
        dmin = pltpu.bitcast(kmin & ~mask, jnp.float32)          # min distance
        wk = 1.0 / jnp.maximum(dmin, 1e-10)                      # exact, as ref
        sel = col == idx
        w_sparse = w_sparse + jnp.where(sel, wk, 0.0)
        w_sum = w_sum + wk                                       # no S-wide sum
        key = jnp.where(sel, sentinel, key)
    w_sparse = (w_sparse / w_sum).astype(jnp.bfloat16)           # exact norm

    # Per-component MXU matmul (p2_ref[c] is a free leading-axis view), stored
    # straight into the layout the MLP consumes.
    for c in range(3):
        out_ref[c, :, :] = jnp.dot(
            w_sparse, p2_ref[c], preferred_element_type=jnp.float32
        ).astype(out_ref.dtype)


def _interp_call(xyz1, xyz2, points2, b, n, s, d2):
    xyz1_t = jnp.transpose(xyz1, (0, 2, 1))                       # [B, N, 3]
    # points2 [3B, D2, S] -> [B, 3, S, D2] bf16 (tiny, done once).
    p2 = jnp.transpose(points2.reshape(b, 3, d2, s),
                       (0, 1, 3, 2)).astype(jnp.bfloat16)
    tile_n = _interp_tile(n, s)
    s_bits = max(1, (s - 1).bit_length())
    kernel = functools.partial(_interp_kernel, s_bits=s_bits)
    return pl.pallas_call(
        kernel,
        grid=(b, n // tile_n),
        out_shape=jax.ShapeDtypeStruct((b, 3, n, d2), jnp.bfloat16),
        in_specs=[
            pl.BlockSpec((None, tile_n, 3), lambda bb, t: (bb, t, 0)),
            pl.BlockSpec((None, 3, s), lambda bb, t: (bb, 0, 0)),
            pl.BlockSpec((None, 3, s, d2), lambda bb, t: (bb, 0, 0, 0)),
        ],
        out_specs=pl.BlockSpec((None, 3, tile_n, d2), lambda bb, t: (bb, 0, t, 0)),
        compiler_params=_compiler_params(),
    )(xyz1_t, xyz2, p2)


# ----------------------------------------------------------------------------
# Kernel 2: layer-0 1x1 conv (split inputs) + channel sum-of-squares partials
# ----------------------------------------------------------------------------
def _matmul_ss_kernel(*refs, n_in):
    # refs = x_0..x_{k-1} ([3, TILE_N, C_k] bf16), w_0..w_{k-1} ([C_k, C] bf16),
    #        y_ref [3, TILE_N, C] bf16, ss_ref [1, C] f32
    x_refs = refs[:n_in]
    w_refs = refs[n_in:2 * n_in]
    y_ref, ss_ref = refs[2 * n_in], refs[2 * n_in + 1]
    tn = y_ref.shape[1]
    cout = y_ref.shape[-1]
    ss = jnp.zeros((1, cout), jnp.float32)
    for c in range(3):                       # 3 dots of M=TILE_N: no reshape,
        y = jnp.zeros((tn, cout), jnp.float32)   # no risk of a VMEM relayout
        for k in range(n_in):
            y = y + jnp.dot(x_refs[k][c], w_refs[k][...],
                            preferred_element_type=jnp.float32)
        y_ref[c, :, :] = y.astype(y_ref.dtype)
        ss = ss + jnp.sum(y * y, axis=0, keepdims=True)
    ss_ref[...] = ss


def _conv_ss_call(inputs, weights, b, n, cout, tile_n):
    nt = n // tile_n
    n_in = len(inputs)
    kernel = functools.partial(_matmul_ss_kernel, n_in=n_in)
    in_specs = []
    for x in inputs:
        ck = x.shape[-1]
        in_specs.append(
            pl.BlockSpec((None, 3, tile_n, ck), lambda g, t: (g, 0, t, 0)))
    for w in weights:
        ck = w.shape[0]
        in_specs.append(pl.BlockSpec((ck, cout), lambda g, t: (0, 0)))
    return pl.pallas_call(
        kernel,
        grid=(b, nt),
        out_shape=(jax.ShapeDtypeStruct((b, 3, n, cout), jnp.bfloat16),
                   jax.ShapeDtypeStruct((b, nt, 1, cout), jnp.float32)),
        in_specs=in_specs,
        out_specs=(pl.BlockSpec((None, 3, tile_n, cout), lambda g, t: (g, 0, t, 0)),
                   pl.BlockSpec((None, None, 1, cout), lambda g, t: (g, t, 0, 0))),
        compiler_params=_compiler_params(),
    )(*inputs, *weights)


# ----------------------------------------------------------------------------
# Kernel 3: fused [QBN_RM1d normalize + Qrelu of layer i] + [conv of layer i+1]
# ----------------------------------------------------------------------------
def _fused_layer_kernel(y_prev_ref, inv_ref, w_ref, y_ref, ss_ref):
    # y_prev_ref: [3, TILE_N, Cin] bf16, inv_ref: [1, Cin] f32,
    # w_ref: [Cin, Cout] bf16, y_ref: [3, TILE_N, Cout] bf16, ss_ref: [1, Cout]
    xn = y_prev_ref[...].astype(jnp.float32) * inv_ref[...][None, :, :]
    mod = jnp.sqrt(jnp.sum(xn * xn, axis=0, keepdims=True))     # [1, TILE_N, Cin]
    # Qrelu1d: coef = mod / max(1, mod) == min(mod, 1)  (bit-exact)
    act = (xn * jnp.minimum(mod, 1.0)).astype(jnp.bfloat16)
    cout = y_ref.shape[-1]
    ss = jnp.zeros((1, cout), jnp.float32)
    for c in range(3):
        y = jnp.dot(act[c], w_ref[...], preferred_element_type=jnp.float32)
        y_ref[c, :, :] = y.astype(y_ref.dtype)
        ss = ss + jnp.sum(y * y, axis=0, keepdims=True)
    ss_ref[...] = ss


def _fused_layer_call(y_prev, inv_rms, w_t, b, n, tile_n):
    cin = y_prev.shape[-1]
    cout = w_t.shape[-1]
    nt = n // tile_n
    return pl.pallas_call(
        _fused_layer_kernel,
        grid=(b, nt),
        out_shape=(jax.ShapeDtypeStruct((b, 3, n, cout), jnp.bfloat16),
                   jax.ShapeDtypeStruct((b, nt, 1, cout), jnp.float32)),
        in_specs=[pl.BlockSpec((None, 3, tile_n, cin), lambda g, t: (g, 0, t, 0)),
                  pl.BlockSpec((1, cin), lambda g, t: (0, 0)),
                  pl.BlockSpec((cin, cout), lambda g, t: (0, 0))],
        out_specs=(pl.BlockSpec((None, 3, tile_n, cout), lambda g, t: (g, 0, t, 0)),
                   pl.BlockSpec((None, None, 1, cout), lambda g, t: (g, t, 0, 0))),
        compiler_params=_compiler_params(),
    )(y_prev, inv_rms, w_t)


# ----------------------------------------------------------------------------
# Kernel 4: final normalize + Qrelu; (a) transposed store to [3B, C, N] or
#            (b) channels-last (fallback for awkward N / optional on v5e).
# ----------------------------------------------------------------------------
def _final_norm_act_kernel(y_prev_ref, inv_ref, out_ref):
    # out_ref: [3, Cout, TILE_N] f32 — PyTorch layout written directly.
    # NOTE(v5e): if the single vector-store slot binds here, prefer the
    # channels-last variant below + one XLA transpose.
    xn = y_prev_ref[...].astype(jnp.float32) * inv_ref[...][None, :, :]
    mod = jnp.sqrt(jnp.sum(xn * xn, axis=0, keepdims=True))
    act = xn * jnp.minimum(mod, 1.0)
    for c in range(3):
        out_ref[c, :, :] = jnp.transpose(act[c], (1, 0))   # XLU per-tile transpose


def _final_norm_act_cl_kernel(y_prev_ref, inv_ref, out_ref):
    # out_ref: [3, TILE_N, Cout] f32, channels-last.
    xn = y_prev_ref[...].astype(jnp.float32) * inv_ref[...][None, :, :]
    mod = jnp.sqrt(jnp.sum(xn * xn, axis=0, keepdims=True))
    out_ref[...] = xn * jnp.minimum(mod, 1.0)


def _final_layer_call(y_prev, inv_rms, b, n, tile_n):
    cout = y_prev.shape[-1]
    return pl.pallas_call(
        _final_norm_act_kernel,
        grid=(b, n // tile_n),
        out_shape=jax.ShapeDtypeStruct((3 * b, cout, n), jnp.float32),
        in_specs=[pl.BlockSpec((None, 3, tile_n, cout), lambda g, t: (g, 0, t, 0)),
                  pl.BlockSpec((1, cout), lambda g, t: (0, 0))],
        out_specs=pl.BlockSpec((3, cout, tile_n), lambda g, t: (g, 0, t)),
        compiler_params=_compiler_params(),
    )(y_prev, inv_rms)


def _final_layer_cl_call(y_prev, inv_rms, b, n, tile_n):
    cout = y_prev.shape[-1]
    return pl.pallas_call(
        _final_norm_act_cl_kernel,
        grid=(b, n // tile_n),
        out_shape=jax.ShapeDtypeStruct((b, 3, n, cout), jnp.float32),
        in_specs=[pl.BlockSpec((None, 3, tile_n, cout), lambda g, t: (g, 0, t, 0)),
                  pl.BlockSpec((1, cout), lambda g, t: (0, 0))],
        out_specs=pl.BlockSpec((None, 3, tile_n, cout), lambda g, t: (g, 0, t, 0)),
        compiler_params=_compiler_params(),
    )(y_prev, inv_rms)


# ----------------------------------------------------------------------------
# QBN_RM1d statistics finish (tiny [B*nt, C] reduction, done in XLA)
# ----------------------------------------------------------------------------
def _inv_rms(ss, denom):
    mean2 = jnp.sum(ss, axis=(0, 1, 2)) / jnp.float32(denom)
    return (1.0 / jnp.sqrt(mean2 + 1e-5)).reshape(1, -1).astype(jnp.float32)


# ----------------------------------------------------------------------------
# Module wrapper (parameters + glue)
# ----------------------------------------------------------------------------
def init_params(key, in_channel, mlp):
    """Deterministic synthetic 1x1-conv weights, PyTorch layout [Cout, Cin]."""
    params = []
    last = in_channel
    for out_ch in mlp:
        key, sub = jax.random.split(key)
        w = jax.random.normal(sub, (out_ch, last), jnp.float32) / jnp.sqrt(
            jnp.float32(last))
        params.append(w)
        last = out_ch
    return params


def pointnet_fp_q_forward(params, xyz1, xyz2, points1, points2):
    """
    xyz1:    [B, 3, N]     dense point positions
    xyz2:    [B, 3, S]     sampled point positions
    points1: [3B, D1, N]   or None
    points2: [3B, D2, S]
    returns: [3B, mlp[-1], N]
    """
    B, _, N = xyz1.shape
    S = xyz2.shape[2]
    D2 = points2.shape[1]

    if S == 1:
        interp = jnp.broadcast_to(
            jnp.transpose(points2.reshape(B, 3, D2, 1), (0, 1, 3, 2)),
            (B, 3, N, D2)).astype(jnp.bfloat16)
    else:
        interp = _interp_call(xyz1, xyz2, points2, B, N, S, D2)
    # interp: [B, 3, N, D2] bf16, already in the layout layer 0 consumes.

    feats = [interp]
    if points1 is not None:
        D1 = points1.shape[1]
        p1 = jnp.transpose(points1.reshape(B, 3, D1, N),
                           (0, 1, 3, 2)).astype(jnp.bfloat16)    # [B, 3, N, D1]
        feats = [p1, interp]        # reference concat order: [points1, interp]

    if not params:
        x = jnp.concatenate([f.astype(jnp.float32) for f in feats], axis=-1)
        return jnp.transpose(x, (0, 1, 3, 2)).reshape(3 * B, -1, N)

    tile_n = _pick_tile(N, 512, 8)

    # Layer 0 pass: conv matmul split over the (virtual) concat inputs + ss.
    w0 = params[0]
    cout0 = w0.shape[0]
    splits = []
    off = 0
    for f in feats:
        ck = f.shape[-1]
        splits.append(jnp.transpose(w0[:, off:off + ck], (1, 0)).astype(jnp.bfloat16))
        off += ck
    y, ss = _conv_ss_call(feats, splits, B, N, cout0, tile_n)
    inv = _inv_rms(ss, 3 * B * N)

    # Middle layers: normalize+Qrelu of layer i fused with conv of layer i+1.
    for w in params[1:]:
        w_t = jnp.transpose(w, (1, 0)).astype(jnp.bfloat16)      # Cout on lanes
        y, ss = _fused_layer_call(y, inv, w_t, B, N, tile_n)
        inv = _inv_rms(ss, 3 * B * N)

    # Final: normalize + Qrelu of the last layer.
    tile_f = _pick_tile(N, 512, 128)     # last dim of the transposed store
    if tile_f <= 1024:
        return _final_layer_call(y, inv, B, N, tile_f)
    # Awkward large N (no 128-aligned divisor): keep channels-last, pay one
    # XLA transpose instead of an oversized VMEM block (v7x VMEM guard).
    x = _final_layer_cl_call(y, inv, B, N, tile_n)
    return jnp.transpose(x, (0, 1, 3, 2)).reshape(3 * B, -1, N)


if __name__ == "__main__":
    key = jax.random.PRNGKey(0)
    B, N, S = 2, 16, 8          # position batch, dense points, sampled points
    D1, D2 = 4, 8               # feature channels of points1 / points2
    mlp = [32, 16]
    in_channel = D1 + D2

    k1, k2, k3, k4, kp = jax.random.split(key, 5)
    xyz1 = jax.random.normal(k1, (B, 3, N), jnp.float32)
    xyz2 = jax.random.normal(k2, (B, 3, S), jnp.float32)
    points1 = jax.random.normal(k3, (3 * B, D1, N), jnp.float32)
    points2 = jax.random.normal(k4, (3 * B, D2, S), jnp.float32)
    params = init_params(kp, in_channel, mlp)

    out = jax.jit(pointnet_fp_q_forward)(params, xyz1, xyz2, points1, points2)
    out = jax.block_until_ready(out)
    assert out.shape == (3 * B, mlp[-1], N), out.shape
    assert bool(jnp.all(jnp.isfinite(out)))
    print("KERNEL_OK")
</pallas_src>

<mosaic_0001>
module attributes {stable_mosaic.version = 11 : i64} {
  func.func @_fused_layer_kernel(%arg0: i32, %arg1: i32, %arg2: memref<1x3x16x32xbf16, #tpu.memory_space<vmem>>, %arg3: memref<1x32xf32, #tpu.memory_space<vmem>>, %arg4: memref<32x16xbf16, #tpu.memory_space<vmem>>, %arg5: memref<1x3x16x16xbf16, #tpu.memory_space<vmem>>, %arg6: memref<1x1x1x16xf32, #tpu.memory_space<vmem>>) attributes {dimension_semantics = [#tpu.dimension_semantics<parallel>, #tpu.dimension_semantics<parallel>], iteration_bounds = array<i64: 2, 1>, scalar_prefetch = 0 : i64, scratch_operands = 0 : i64, tpu.core_type = #tpu.core_type<tc>, window_params = [{transform_indices = @transform_0, window_bounds = array<i64: 1, 3, 16, 32>}, {pipeline_mode = #tpu.pipeline_mode<synchronous>, transform_indices = @transform_1, window_bounds = array<i64: 1, 32>}, {pipeline_mode = #tpu.pipeline_mode<synchronous>, transform_indices = @transform_2, window_bounds = array<i64: 32, 16>}, {transform_indices = @transform_3, window_bounds = array<i64: 1, 3, 16, 16>}, {transform_indices = @transform_4, window_bounds = array<i64: 1, 1, 1, 16>}]} {
    %c0 = arith.constant 0 : index
    %c0_0 = arith.constant 0 : index
    %c0_1 = arith.constant 0 : index
    %c0_2 = arith.constant 0 : index
    %0 = vector.load %arg2[%c0, %c0_0, %c0_1, %c0_2] : memref<1x3x16x32xbf16, #tpu.memory_space<vmem>>, vector<1x3x16x32xbf16>
    %1 = vector.shape_cast %0 : vector<1x3x16x32xbf16> to vector<3x16x32xbf16>
    %2 = arith.extf %1 : vector<3x16x32xbf16> to vector<3x16x32xf32>
    %c0_3 = arith.constant 0 : index
    %c0_4 = arith.constant 0 : index
    %3 = vector.load %arg3[%c0_3, %c0_4] : memref<1x32xf32, #tpu.memory_space<vmem>>, vector<1x32xf32>
    %4 = vector.shape_cast %3 : vector<1x32xf32> to vector<1x1x32xf32>
    %5 = vector.broadcast %4 : vector<1x1x32xf32> to vector<3x16x32xf32>
    %6 = arith.mulf %2, %5 : vector<3x16x32xf32>
    %7 = arith.mulf %6, %6 : vector<3x16x32xf32>
    %cst = arith.constant dense<0.000000e+00> : vector<16x32xf32>
    %8 = vector.multi_reduction <add>, %7, %cst [0] : vector<3x16x32xf32> to vector<16x32xf32>
    %9 = vector.shape_cast %8 : vector<16x32xf32> to vector<1x16x32xf32>
    %10 = math.sqrt %9 : vector<1x16x32xf32>
    %cst_5 = arith.constant 1.000000e+00 : f32
    %11 = vector.broadcast %cst_5 : f32 to vector<1x16x32xf32>
    %12 = arith.minimumf %10, %11 : vector<1x16x32xf32>
    %13 = vector.broadcast %12 : vector<1x16x32xf32> to vector<3x16x32xf32>
    %14 = arith.mulf %6, %13 : vector<3x16x32xf32>
    %15 = arith.truncf %14 : vector<3x16x32xf32> to vector<3x16x32xbf16>
    %cst_6 = arith.constant 0.000000e+00 : f32
    %16 = vector.broadcast %cst_6 : f32 to vector<1x16xf32>
    %17 = vector.extract_strided_slice %15 {offsets = [0, 0, 0], sizes = [1, 16, 32], strides = [1, 1, 1]} : vector<3x16x32xbf16> to vector<1x16x32xbf16>
    %18 = vector.shape_cast %17 : vector<1x16x32xbf16> to vector<16x32xbf16>
    %c0_7 = arith.constant 0 : index
    %c0_8 = arith.constant 0 : index
    %19 = vector.load %arg4[%c0_7, %c0_8] : memref<32x16xbf16, #tpu.memory_space<vmem>>, vector<32x16xbf16>
    %cst_9 = arith.constant dense<0.000000e+00> : vector<16x16xf32>
    %20 = tpu.matmul %18, %19, %cst_9 {dimension_numbers = #tpu.dot_dimension_numbers<[1], [0], [0], [1], [0, 0, 1, 1], [], []>} : vector<16x32xbf16>, vector<32x16xbf16>, vector<16x16xf32> -> vector<16x16xf32>
    %21 = arith.truncf %20 : vector<16x16xf32> to vector<16x16xbf16>
    %c0_10 = arith.constant 0 : index
    %c0_11 = arith.constant 0 : index
    %c0_12 = arith.constant 0 : index
    %c0_13 = arith.constant 0 : index
    %22 = vector.load %arg5[%c0_10, %c0_11, %c0_12, %c0_13] : memref<1x3x16x16xbf16, #tpu.memory_space<vmem>>, vector<1x1x16x16xbf16>
    %23 = vector.shape_cast %22 : vector<1x1x16x16xbf16> to vector<16x16xbf16>
    %24 = vector.shape_cast %21 : vector<16x16xbf16> to vector<1x1x16x16xbf16>
    tpu.vector_store %arg5[%c0_10, %c0_11, %c0_12, %c0_13], %24 {strides = array<i32>} : memref<1x3x16x16xbf16, #tpu.memory_space<vmem>>, vector<1x1x16x16xbf16>,
    %25 = arith.mulf %20, %20 : vector<16x16xf32>
    %cst_14 = arith.constant dense<0.000000e+00> : vector<16xf32>
    %26 = vector.multi_reduction <add>, %25, %cst_14 [0] : vector<16x16xf32> to vector<16xf32>
    %27 = vector.shape_cast %26 : vector<16xf32> to vector<1x16xf32>
    %28 = arith.addf %16, %27 : vector<1x16xf32>
    %29 = vector.extract_strided_slice %15 {offsets = [1, 0, 0], sizes = [1, 16, 32], strides = [1, 1, 1]} : vector<3x16x32xbf16> to vector<1x16x32xbf16>
    %30 = vector.shape_cast %29 : vector<1x16x32xbf16> to vector<16x32xbf16>
    %c0_15 = arith.constant 0 : index
    %c0_16 = arith.constant 0 : index
    %31 = vector.load %arg4[%c0_15, %c0_16] : memref<32x16xbf16, #tpu.memory_space<vmem>>, vector<32x16xbf16>
    %cst_17 = arith.constant dense<0.000000e+00> : vector<16x16xf32>
    %32 = tpu.matmul %30, %31, %cst_17 {dimension_numbers = #tpu.dot_dimension_numbers<[1], [0], [0], [1], [0, 0, 1, 1], [], []>} : vector<16x32xbf16>, vector<32x16xbf16>, vector<16x16xf32> -> vector<16x16xf32>
    %33 = arith.truncf %32 : vector<16x16xf32> to vector<16x16xbf16>
    %c0_18 = arith.constant 0 : index
    %c1 = arith.constant 1 : index
    %c0_19 = arith.constant 0 : index
    %c0_20 = arith.constant 0 : index
    %34 = vector.load %arg5[%c0_18, %c1, %c0_19, %c0_20] : memref<1x3x16x16xbf16, #tpu.memory_space<vmem>>, vector<1x1x16x16xbf16>
    %35 = vector.shape_cast %34 : vector<1x1x16x16xbf16> to vector<16x16xbf16>
    %36 = vector.shape_cast %33 : vector<16x16xbf16> to vector<1x1x16x16xbf16>
    tpu.vector_store %arg5[%c0_18, %c1, %c0_19, %c0_20], %36 {strides = array<i32>} : memref<1x3x16x16xbf16, #tpu.memory_space<vmem>>, vector<1x1x16x16xbf16>,
    %37 = arith.mulf %32, %32 : vector<16x16xf32>
    %cst_21 = arith.constant dense<0.000000e+00> : vector<16xf32>
    %38 = vector.multi_reduction <add>, %37, %cst_21 [0] : vector<16x16xf32> to vector<16xf32>
    %39 = vector.shape_cast %38 : vector<16xf32> to vector<1x16xf32>
    %40 = arith.addf %28, %39 : vector<1x16xf32>
    %41 = vector.extract_strided_slice %15 {offsets = [2, 0, 0], sizes = [1, 16, 32], strides = [1, 1, 1]} : vector<3x16x32xbf16> to vector<1x16x32xbf16>
    %42 = vector.shape_cast %41 : vector<1x16x32xbf16> to vector<16x32xbf16>
    %c0_22 = arith.constant 0 : index
    %c0_23 = arith.constant 0 : index
    %43 = vector.load %arg4[%c0_22, %c0_23] : memref<32x16xbf16, #tpu.memory_space<vmem>>, vector<32x16xbf16>
    %cst_24 = arith.constant dense<0.000000e+00> : vector<16x16xf32>
    %44 = tpu.matmul %42, %43, %cst_24 {dimension_numbers = #tpu.dot_dimension_numbers<[1], [0], [0], [1], [0, 0, 1, 1], [], []>} : vector<16x32xbf16>, vector<32x16xbf16>, vector<16x16xf32> -> vector<16x16xf32>
    %45 = arith.truncf %44 : vector<16x16xf32> to vector<16x16xbf16>
    %c0_25 = arith.constant 0 : index
    %c2 = arith.constant 2 : index
    %c0_26 = arith.constant 0 : index
    %c0_27 = arith.constant 0 : index
    %46 = vector.load %arg5[%c0_25, %c2, %c0_26, %c0_27] : memref<1x3x16x16xbf16, #tpu.memory_space<vmem>>, vector<1x1x16x16xbf16>
    %47 = vector.shape_cast %46 : vector<1x1x16x16xbf16> to vector<16x16xbf16>
    %48 = vector.shape_cast %45 : vector<16x16xbf16> to vector<1x1x16x16xbf16>
    tpu.vector_store %arg5[%c0_25, %c2, %c0_26, %c0_27], %48 {strides = array<i32>} : memref<1x3x16x16xbf16, #tpu.memory_space<vmem>>, vector<1x1x16x16xbf16>,
    %49 = arith.mulf %44, %44 : vector<16x16xf32>
    %cst_28 = arith.constant dense<0.000000e+00> : vector<16xf32>
    %50 = vector.multi_reduction <add>, %49, %cst_28 [0] : vector<16x16xf32> to vector<16xf32>
    %51 = vector.shape_cast %50 : vector<16xf32> to vector<1x16xf32>
    %52 = arith.addf %40, %51 : vector<1x16xf32>
    %c0_29 = arith.constant 0 : index
    %c0_30 = arith.constant 0 : index
    %c0_31 = arith.constant 0 : index
    %c0_32 = arith.constant 0 : index
    %53 = vector.load %arg6[%c0_29, %c0_30, %c0_31, %c0_32] : memref<1x1x1x16xf32, #tpu.memory_space<vmem>>, vector<1x1x1x16xf32>
    %54 = vector.shape_cast %53 : vector<1x1x1x16xf32> to vector<1x16xf32>
    %55 = vector.shape_cast %52 : vector<1x16xf32> to vector<1x1x1x16xf32>
    tpu.vector_store %arg6[%c0_29, %c0_30, %c0_31, %c0_32], %55 {strides = array<i32>} : memref<1x1x1x16xf32, #tpu.memory_space<vmem>>, vector<1x1x1x16xf32>,
    return
  }
  func.func @transform_0(%arg0: i32, %arg1: i32) -> (i32, i32, i32, i32) {
    %c0_i32 = arith.constant 0 : i32
    %c0_i32_0 = arith.constant 0 : i32
    %c0_i32_1 = arith.constant 0 : i32
    return %arg0, %c0_i32, %arg1, %c0_i32_0 : i32, i32, i32, i32
  }
  func.func @transform_1(%arg0: i32, %arg1: i32) -> (i32, i32) {
    %c0_i32 = arith.constant 0 : i32
    %c0_i32_0 = arith.constant 0 : i32
    %c0_i32_1 = arith.constant 0 : i32
    return %c0_i32, %c0_i32_0 : i32, i32
  }
  func.func @transform_2(%arg0: i32, %arg1: i32) -> (i32, i32) {
    %c0_i32 = arith.constant 0 : i32
    %c0_i32_0 = arith.constant 0 : i32
    %c0_i32_1 = arith.constant 0 : i32
    return %c0_i32, %c0_i32_0 : i32, i32
  }
  func.func @transform_3(%arg0: i32, %arg1: i32) -> (i32, i32, i32, i32) {
    %c0_i32 = arith.constant 0 : i32
    %c0_i32_0 = arith.constant 0 : i32
    %c0_i32_1 = arith.constant 0 : i32
    return %arg0, %c0_i32, %arg1, %c0_i32_0 : i32, i32, i32, i32
  }
  func.func @transform_4(%arg0: i32, %arg1: i32) -> (i32, i32, i32, i32) {
    %c0_i32 = arith.constant 0 : i32
    %c0_i32_0 = arith.constant 0 : i32
    %c0_i32_1 = arith.constant 0 : i32
    return %arg0, %arg1, %c0_i32, %c0_i32_0 : i32, i32, i32, i32
  }
}

module attributes {stable_mosaic.version = 11 : i64} {
  func.func @_interp_kernel(%arg0: i32, %arg1: i32, %arg2: memref<1x16x3xf32, #tpu.memory_space<vmem>>, %arg3: memref<1x3x8xf32, #tpu.memory_space<vmem>>, %arg4: memref<1x3x8x8xbf16, #tpu.memory_space<vmem>>, %arg5: memref<1x3x16x8xbf16, #tpu.memory_space<vmem>>) attributes {dimension_semantics = [#tpu.dimension_semantics<parallel>, #tpu.dimension_semantics<parallel>], iteration_bounds = array<i64: 2, 1>, scalar_prefetch = 0 : i64, scratch_operands = 0 : i64, tpu.core_type = #tpu.core_type<tc>, window_params = [{transform_indices = @transform_0, window_bounds = array<i64: 1, 16, 3>}, {transform_indices = @transform_1, window_bounds = array<i64: 1, 3, 8>}, {transform_indices = @transform_2, window_bounds = array<i64: 1, 3, 8, 8>}, {transform_indices = @transform_3, window_bounds = array<i64: 1, 3, 16, 8>}]} {
    %c0 = arith.constant 0 : index
    %c0_0 = arith.constant 0 : index
    %c0_1 = arith.constant 0 : index
    %0 = vector.load %arg2[%c0, %c0_0, %c0_1] : memref<1x16x3xf32, #tpu.memory_space<vmem>>, vector<1x16x3xf32>
    %1 = vector.shape_cast %0 : vector<1x16x3xf32> to vector<16x3xf32>
    %c0_2 = arith.constant 0 : index
    %c0_3 = arith.constant 0 : index
    %c0_4 = arith.constant 0 : index
    %2 = vector.load %arg3[%c0_2, %c0_3, %c0_4] : memref<1x3x8xf32, #tpu.memory_space<vmem>>, vector<1x3x8xf32>
    %3 = vector.shape_cast %2 : vector<1x3x8xf32> to vector<3x8xf32>
    %cst = arith.constant 0.000000e+00 : f32
    %4 = vector.broadcast %cst : f32 to vector<16x8xf32>
    %5 = vector.extract_strided_slice %1 {offsets = [0, 0], sizes = [16, 1], strides = [1, 1]} : vector<16x3xf32> to vector<16x1xf32>
    %6 = vector.extract_strided_slice %3 {offsets = [0, 0], sizes = [1, 8], strides = [1, 1]} : vector<3x8xf32> to vector<1x8xf32>
    %7 = vector.broadcast %5 : vector<16x1xf32> to vector<16x8xf32>
    %8 = vector.broadcast %6 : vector<1x8xf32> to vector<16x8xf32>
    %9 = arith.subf %7, %8 : vector<16x8xf32>
    %10 = arith.mulf %9, %9 : vector<16x8xf32>
    %11 = arith.addf %4, %10 : vector<16x8xf32>
    %12 = vector.extract_strided_slice %1 {offsets = [0, 1], sizes = [16, 1], strides = [1, 1]} : vector<16x3xf32> to vector<16x1xf32>
    %13 = vector.extract_strided_slice %3 {offsets = [1, 0], sizes = [1, 8], strides = [1, 1]} : vector<3x8xf32> to vector<1x8xf32>
    %14 = vector.broadcast %12 : vector<16x1xf32> to vector<16x8xf32>
    %15 = vector.broadcast %13 : vector<1x8xf32> to vector<16x8xf32>
    %16 = arith.subf %14, %15 : vector<16x8xf32>
    %17 = arith.mulf %16, %16 : vector<16x8xf32>
    %18 = arith.addf %11, %17 : vector<16x8xf32>
    %19 = vector.extract_strided_slice %1 {offsets = [0, 2], sizes = [16, 1], strides = [1, 1]} : vector<16x3xf32> to vector<16x1xf32>
    %20 = vector.extract_strided_slice %3 {offsets = [2, 0], sizes = [1, 8], strides = [1, 1]} : vector<3x8xf32> to vector<1x8xf32>
    %21 = vector.broadcast %19 : vector<16x1xf32> to vector<16x8xf32>
    %22 = vector.broadcast %20 : vector<1x8xf32> to vector<16x8xf32>
    %23 = arith.subf %21, %22 : vector<16x8xf32>
    %24 = arith.mulf %23, %23 : vector<16x8xf32>
    %25 = arith.addf %18, %24 : vector<16x8xf32>
    %26 = tpu.iota {dimensions = array<i32: 1>} : vector<16x8xi32>
    %27 = tpu.bitcast %25 : vector<16x8xf32> -> vector<16x8xi32>
    %c7_i32 = arith.constant 7 : i32
    %c-1_i32 = arith.constant -1 : i32
    %28 = arith.xori %c7_i32, %c-1_i32 : i32
    %29 = vector.broadcast %28 : i32 to vector<16x8xi32>
    %30 = arith.andi %27, %29 : vector<16x8xi32>
    %31 = arith.ori %30, %26 : vector<16x8xi32>
    %cst_5 = arith.constant 0.000000e+00 : f32
    %32 = vector.broadcast %cst_5 : f32 to vector<16x8xf32>
    %cst_6 = arith.constant 0.000000e+00 : f32
    %33 = vector.broadcast %cst_6 : f32 to vector<16x1xf32>
    %cst_7 = arith.constant dense<2147483647> : vector<16xi32>
    %34 = vector.multi_reduction <minsi>, %31, %cst_7 [1] : vector<16x8xi32> to vector<16xi32>
    %35 = vector.shape_cast %34 : vector<16xi32> to vector<16x1xi32>
    %c7_i32_8 = arith.constant 7 : i32
    %36 = vector.broadcast %c7_i32_8 : i32 to vector<16x1xi32>
    %37 = arith.andi %35, %36 : vector<16x1xi32>
    %c7_i32_9 = arith.constant 7 : i32
    %c-1_i32_10 = arith.constant -1 : i32
    %38 = arith.xori %c7_i32_9, %c-1_i32_10 : i32
    %39 = vector.broadcast %38 : i32 to vector<16x1xi32>
    %40 = arith.andi %35, %39 : vector<16x1xi32>
    %41 = tpu.bitcast %40 : vector<16x1xi32> -> vector<16x1xf32>
    %cst_11 = arith.constant 1.000000e-10 : f32
    %42 = vector.broadcast %cst_11 : f32 to vector<16x1xf32>
    %43 = arith.maximumf %41, %42 : vector<16x1xf32>
    %cst_12 = arith.constant 1.000000e+00 : f32
    %44 = vector.broadcast %cst_12 : f32 to vector<16x1xf32>
    %45 = arith.divf %44, %43 : vector<16x1xf32>
    %46 = vector.broadcast %37 : vector<16x1xi32> to vector<16x8xi32>
    %47 = arith.cmpi eq, %26, %46 : vector<16x8xi32>
    %cst_13 = arith.constant 0.000000e+00 : f32
    %48 = vector.shape_cast %45 : vector<16x1xf32> to vector<16x1xf32>
    %49 = vector.broadcast %48 : vector<16x1xf32> to vector<16x8xf32>
    %50 = vector.broadcast %cst_13 : f32 to vector<16x8xf32>
    %51 = arith.select %47, %49, %50 : vector<16x8xi1>, vector<16x8xf32>
    %52 = arith.addf %32, %51 : vector<16x8xf32>
    %53 = arith.addf %33, %45 : vector<16x1xf32>
    %c2147483647_i32 = arith.constant 2147483647 : i32
    %54 = vector.broadcast %c2147483647_i32 : i32 to vector<16x8xi32>
    %55 = arith.select %47, %54, %31 : vector<16x8xi1>, vector<16x8xi32>
    %cst_14 = arith.constant dense<2147483647> : vector<16xi32>
    %56 = vector.multi_reduction <minsi>, %55, %cst_14 [1] : vector<16x8xi32> to vector<16xi32>
    %57 = vector.shape_cast %56 : vector<16xi32> to vector<16x1xi32>
    %c7_i32_15 = arith.constant 7 : i32
    %58 = vector.broadcast %c7_i32_15 : i32 to vector<16x1xi32>
    %59 = arith.andi %57, %58 : vector<16x1xi32>
    %c7_i32_16 = arith.constant 7 : i32
    %c-1_i32_17 = arith.constant -1 : i32
    %60 = arith.xori %c7_i32_16, %c-1_i32_17 : i32
    %61 = vector.broadcast %60 : i32 to vector<16x1xi32>
    %62 = arith.andi %57, %61 : vector<16x1xi32>
    %63 = tpu.bitcast %62 : vector<16x1xi32> -> vector<16x1xf32>
    %cst_18 = arith.constant 1.000000e-10 : f32
    %64 = vector.broadcast %cst_18 : f32 to vector<16x1xf32>
    %65 = arith.maximumf %63, %64 : vector<16x1xf32>
    %cst_19 = arith.constant 1.000000e+00 : f32
    %66 = vector.broadcast %cst_19 : f32 to vector<16x1xf32>
    %67 = arith.divf %66, %65 : vector<16x1xf32>
    %68 = vector.broadcast %59 : vector<16x1xi32> to vector<16x8xi32>
    %69 = arith.cmpi eq, %26, %68 : vector<16x8xi32>
    %cst_20 = arith.constant 0.000000e+00 : f32
    %70 = vector.shape_cast %67 : vector<16x1xf32> to vector<16x1xf32>
    %71 = vector.broadcast %70 : vector<16x1xf32> to vector<16x8xf32>
    %72 = vector.broadcast %cst_20 : f32 to vector<16x8xf32>
    %73 = arith.select %69, %71, %72 : vector<16x8xi1>, vector<16x8xf32>
    %74 = arith.addf %52, %73 : vector<16x8xf32>
    %75 = arith.addf %53, %67 : vector<16x1xf32>
    %c2147483647_i32_21 = arith.constant 2147483647 : i32
    %76 = vector.broadcast %c2147483647_i32_21 : i32 to vector<16x8xi32>
    %77 = arith.select %69, %76, %55 : vector<16x8xi1>, vector<16x8xi32>
    %cst_22 = arith.constant dense<2147483647> : vector<16xi32>
    %78 = vector.multi_reduction <minsi>, %77, %cst_22 [1] : vector<16x8xi32> to vector<16xi32>
    %79 = vector.shape_cast %78 : vector<16xi32> to vector<16x1xi32>
    %c7_i32_23 = arith.constant 7 : i32
    %80 = vector.broadcast %c7_i32_23 : i32 to vector<16x1xi32>
    %81 = arith.andi %79, %80 : vector<16x1xi32>
    %c7_i32_24 = arith.constant 7 : i32
    %c-1_i32_25 = arith.constant -1 : i32
    %82 = arith.xori %c7_i32_24, %c-1_i32_25 : i32
    %83 = vector.broadcast %82 : i32 to vector<16x1xi32>
    %84 = arith.andi %79, %83 : vector<16x1xi32>
    %85 = tpu.bitcast %84 : vector<16x1xi32> -> vector<16x1xf32>
    %cst_26 = arith.constant 1.000000e-10 : f32
    %86 = vector.broadcast %cst_26 : f32 to vector<16x1xf32>
    %87 = arith.maximumf %85, %86 : vector<16x1xf32>
    %cst_27 = arith.constant 1.000000e+00 : f32
    %88 = vector.broadcast %cst_27 : f32 to vector<16x1xf32>
    %89 = arith.divf %88, %87 : vector<16x1xf32>
    %90 = vector.broadcast %81 : vector<16x1xi32> to vector<16x8xi32>
    %91 = arith.cmpi eq, %26, %90 : vector<16x8xi32>
    %cst_28 = arith.constant 0.000000e+00 : f32
    %92 = vector.shape_cast %89 : vector<16x1xf32> to vector<16x1xf32>
    %93 = vector.broadcast %92 : vector<16x1xf32> to vector<16x8xf32>
    %94 = vector.broadcast %cst_28 : f32 to vector<16x8xf32>
    %95 = arith.select %91, %93, %94 : vector<16x8xi1>, vector<16x8xf32>
    %96 = arith.addf %74, %95 : vector<16x8xf32>
    %97 = arith.addf %75, %89 : vector<16x1xf32>
    %98 = vector.broadcast %97 : vector<16x1xf32> to vector<16x8xf32>
    %99 = arith.divf %96, %98 : vector<16x8xf32>
    %100 = arith.truncf %99 : vector<16x8xf32> to vector<16x8xbf16>
    %c0_29 = arith.constant 0 : index
    %c0_30 = arith.constant 0 : index
    %c0_31 = arith.constant 0 : index
    %c0_32 = arith.constant 0 : index
    %101 = vector.load %arg4[%c0_29, %c0_30, %c0_31, %c0_32] : memref<1x3x8x8xbf16, #tpu.memory_space<vmem>>, vector<1x1x8x8xbf16>
    %102 = vector.shape_cast %101 : vector<1x1x8x8xbf16> to vector<8x8xbf16>
    %cst_33 = arith.constant dense<0.000000e+00> : vector<16x8xf32>
    %103 = tpu.matmul %100, %102, %cst_33 {dimension_numbers = #tpu.dot_dimension_numbers<[1], [0], [0], [1], [0, 0, 1, 1], [], []>} : vector<16x8xbf16>, vector<8x8xbf16>, vector<16x8xf32> -> vector<16x8xf32>
    %104 = arith.truncf %103 : vector<16x8xf32> to vector<16x8xbf16>
    %c0_34 = arith.constant 0 : index
    %c0_35 = arith.constant 0 : index
    %c0_36 = arith.constant 0 : index
    %c0_37 = arith.constant 0 : index
    %105 = vector.load %arg5[%c0_34, %c0_35, %c0_36, %c0_37] : memref<1x3x16x8xbf16, #tpu.memory_space<vmem>>, vector<1x1x16x8xbf16>
    %106 = vector.shape_cast %105 : vector<1x1x16x8xbf16> to vector<16x8xbf16>
    %107 = vector.shape_cast %104 : vector<16x8xbf16> to vector<1x1x16x8xbf16>
    tpu.vector_store %arg5[%c0_34, %c0_35, %c0_36, %c0_37], %107 {strides = array<i32>} : memref<1x3x16x8xbf16, #tpu.memory_space<vmem>>, vector<1x1x16x8xbf16>,
    %c0_38 = arith.constant 0 : index
    %c1 = arith.constant 1 : index
    %c0_39 = arith.constant 0 : index
    %c0_40 = arith.constant 0 : index
    %108 = vector.load %arg4[%c0_38, %c1, %c0_39, %c0_40] : memref<1x3x8x8xbf16, #tpu.memory_space<vmem>>, vector<1x1x8x8xbf16>
    %109 = vector.shape_cast %108 : vector<1x1x8x8xbf16> to vector<8x8xbf16>
    %cst_41 = arith.constant dense<0.000000e+00> : vector<16x8xf32>
    %110 = tpu.matmul %100, %109, %cst_41 {dimension_numbers = #tpu.dot_dimension_numbers<[1], [0], [0], [1], [0, 0, 1, 1], [], []>} : vector<16x8xbf16>, vector<8x8xbf16>, vector<16x8xf32> -> vector<16x8xf32>
    %111 = arith.truncf %110 : vector<16x8xf32> to vector<16x8xbf16>
    %c0_42 = arith.constant 0 : index
    %c1_43 = arith.constant 1 : index
    %c0_44 = arith.constant 0 : index
    %c0_45 = arith.constant 0 : index
    %112 = vector.load %arg5[%c0_42, %c1_43, %c0_44, %c0_45] : memref<1x3x16x8xbf16, #tpu.memory_space<vmem>>, vector<1x1x16x8xbf16>
    %113 = vector.shape_cast %112 : vector<1x1x16x8xbf16> to vector<16x8xbf16>
    %114 = vector.shape_cast %111 : vector<16x8xbf16> to vector<1x1x16x8xbf16>
    tpu.vector_store %arg5[%c0_42, %c1_43, %c0_44, %c0_45], %114 {strides = array<i32>} : memref<1x3x16x8xbf16, #tpu.memory_space<vmem>>, vector<1x1x16x8xbf16>,
    %c0_46 = arith.constant 0 : index
    %c2 = arith.constant 2 : index
    %c0_47 = arith.constant 0 : index
    %c0_48 = arith.constant 0 : index
    %115 = vector.load %arg4[%c0_46, %c2, %c0_47, %c0_48] : memref<1x3x8x8xbf16, #tpu.memory_space<vmem>>, vector<1x1x8x8xbf16>
    %116 = vector.shape_cast %115 : vector<1x1x8x8xbf16> to vector<8x8xbf16>
    %cst_49 = arith.constant dense<0.000000e+00> : vector<16x8xf32>
    %117 = tpu.matmul %100, %116, %cst_49 {dimension_numbers = #tpu.dot_dimension_numbers<[1], [0], [0], [1], [0, 0, 1, 1], [], []>} : vector<16x8xbf16>, vector<8x8xbf16>, vector<16x8xf32> -> vector<16x8xf32>
    %118 = arith.truncf %117 : vector<16x8xf32> to vector<16x8xbf16>
    %c0_50 = arith.constant 0 : index
    %c2_51 = arith.constant 2 : index
    %c0_52 = arith.constant 0 : index
    %c0_53 = arith.constant 0 : index
    %119 = vector.load %arg5[%c0_50, %c2_51, %c0_52, %c0_53] : memref<1x3x16x8xbf16, #tpu.memory_space<vmem>>, vector<1x1x16x8xbf16>
    %120 = vector.shape_cast %119 : vector<1x1x16x8xbf16> to vector<16x8xbf16>
    %121 = vector.shape_cast %118 : vector<16x8xbf16> to vector<1x1x16x8xbf16>
    tpu.vector_store %arg5[%c0_50, %c2_51, %c0_52, %c0_53], %121 {strides = array<i32>} : memref<1x3x16x8xbf16, #tpu.memory_space<vmem>>, vector<1x1x16x8xbf16>,
    return
  }
  func.func @transform_0(%arg0: i32, %arg1: i32) -> (i32, i32, i32) {
    %c0_i32 = arith.constant 0 : i32
    %c0_i32_0 = arith.constant 0 : i32
    return %arg0, %arg1, %c0_i32 : i32, i32, i32
  }
  func.func @transform_1(%arg0: i32, %arg1: i32) -> (i32, i32, i32) {
    %c0_i32 = arith.constant 0 : i32
    %c0_i32_0 = arith.constant 0 : i32
    %c0_i32_1 = arith.constant 0 : i32
    return %arg0, %c0_i32, %c0_i32_0 : i32, i32, i32
  }
  func.func @transform_2(%arg0: i32, %arg1: i32) -> (i32, i32, i32, i32) {
    %c0_i32 = arith.constant 0 : i32
    %c0_i32_0 = arith.constant 0 : i32
    %c0_i32_1 = arith.constant 0 : i32
    %c0_i32_2 = arith.constant 0 : i32
    return %arg0, %c0_i32, %c0_i32_0, %c0_i32_1 : i32, i32, i32, i32
  }
  func.func @transform_3(%arg0: i32, %arg1: i32) -> (i32, i32, i32, i32) {
    %c0_i32 = arith.constant 0 : i32
    %c0_i32_0 = arith.constant 0 : i32
    %c0_i32_1 = arith.constant 0 : i32
    return %arg0, %c0_i32, %arg1, %c0_i32_0 : i32, i32, i32, i32
  }
}

module attributes {stable_mosaic.version = 11 : i64} {
  func.func @_matmul_ss_kernel(%arg0: i32, %arg1: i32, %arg2: memref<1x3x16x4xbf16, #tpu.memory_space<vmem>>, %arg3: memref<1x3x16x8xbf16, #tpu.memory_space<vmem>>, %arg4: memref<4x32xbf16, #tpu.memory_space<vmem>>, %arg5: memref<8x32xbf16, #tpu.memory_space<vmem>>, %arg6: memref<1x3x16x32xbf16, #tpu.memory_space<vmem>>, %arg7: memref<1x1x1x32xf32, #tpu.memory_space<vmem>>) attributes {dimension_semantics = [#tpu.dimension_semantics<parallel>, #tpu.dimension_semantics<parallel>], iteration_bounds = array<i64: 2, 1>, scalar_prefetch = 0 : i64, scratch_operands = 0 : i64, tpu.core_type = #tpu.core_type<tc>, window_params = [{transform_indices = @transform_0, window_bounds = array<i64: 1, 3, 16, 4>}, {transform_indices = @transform_1, window_bounds = array<i64: 1, 3, 16, 8>}, {pipeline_mode = #tpu.pipeline_mode<synchronous>, transform_indices = @transform_2, window_bounds = array<i64: 4, 32>}, {pipeline_mode = #tpu.pipeline_mode<synchronous>, transform_indices = @transform_3, window_bounds = array<i64: 8, 32>}, {transform_indices = @transform_4, window_bounds = array<i64: 1, 3, 16, 32>}, {transform_indices = @transform_5, window_bounds = array<i64: 1, 1, 1, 32>}]} {
    %cst = arith.constant 0.000000e+00 : f32
    %0 = vector.broadcast %cst : f32 to vector<1x32xf32>
    %cst_0 = arith.constant 0.000000e+00 : f32
    %1 = vector.broadcast %cst_0 : f32 to vector<16x32xf32>
    %c0 = arith.constant 0 : index
    %c0_1 = arith.constant 0 : index
    %c0_2 = arith.constant 0 : index
    %c0_3 = arith.constant 0 : index
    %2 = vector.load %arg2[%c0, %c0_1, %c0_2, %c0_3] : memref<1x3x16x4xbf16, #tpu.memory_space<vmem>>, vector<1x1x16x4xbf16>
    %3 = vector.shape_cast %2 : vector<1x1x16x4xbf16> to vector<16x4xbf16>
    %c0_4 = arith.constant 0 : index
    %c0_5 = arith.constant 0 : index
    %4 = vector.load %arg4[%c0_4, %c0_5] : memref<4x32xbf16, #tpu.memory_space<vmem>>, vector<4x32xbf16>
    %cst_6 = arith.constant dense<0.000000e+00> : vector<16x32xf32>
    %5 = tpu.matmul %3, %4, %cst_6 {dimension_numbers = #tpu.dot_dimension_numbers<[1], [0], [0], [1], [0, 0, 1, 1], [], []>} : vector<16x4xbf16>, vector<4x32xbf16>, vector<16x32xf32> -> vector<16x32xf32>
    %6 = arith.addf %1, %5 : vector<16x32xf32>
    %c0_7 = arith.constant 0 : index
    %c0_8 = arith.constant 0 : index
    %c0_9 = arith.constant 0 : index
    %c0_10 = arith.constant 0 : index
    %7 = vector.load %arg3[%c0_7, %c0_8, %c0_9, %c0_10] : memref<1x3x16x8xbf16, #tpu.memory_space<vmem>>, vector<1x1x16x8xbf16>
    %8 = vector.shape_cast %7 : vector<1x1x16x8xbf16> to vector<16x8xbf16>
    %c0_11 = arith.constant 0 : index
    %c0_12 = arith.constant 0 : index
    %9 = vector.load %arg5[%c0_11, %c0_12] : memref<8x32xbf16, #tpu.memory_space<vmem>>, vector<8x32xbf16>
    %cst_13 = arith.constant dense<0.000000e+00> : vector<16x32xf32>
    %10 = tpu.matmul %8, %9, %cst_13 {dimension_numbers = #tpu.dot_dimension_numbers<[1], [0], [0], [1], [0, 0, 1, 1], [], []>} : vector<16x8xbf16>, vector<8x32xbf16>, vector<16x32xf32> -> vector<16x32xf32>
    %11 = arith.addf %6, %10 : vector<16x32xf32>
    %12 = arith.truncf %11 : vector<16x32xf32> to vector<16x32xbf16>
    %c0_14 = arith.constant 0 : index
    %c0_15 = arith.constant 0 : index
    %c0_16 = arith.constant 0 : index
    %c0_17 = arith.constant 0 : index
    %13 = vector.load %arg6[%c0_14, %c0_15, %c0_16, %c0_17] : memref<1x3x16x32xbf16, #tpu.memory_space<vmem>>, vector<1x1x16x32xbf16>
    %14 = vector.shape_cast %13 : vector<1x1x16x32xbf16> to vector<16x32xbf16>
    %15 = vector.shape_cast %12 : vector<16x32xbf16> to vector<1x1x16x32xbf16>
    tpu.vector_store %arg6[%c0_14, %c0_15, %c0_16, %c0_17], %15 {strides = array<i32>} : memref<1x3x16x32xbf16, #tpu.memory_space<vmem>>, vector<1x1x16x32xbf16>,
    %16 = arith.mulf %11, %11 : vector<16x32xf32>
    %cst_18 = arith.constant dense<0.000000e+00> : vector<32xf32>
    %17 = vector.multi_reduction <add>, %16, %cst_18 [0] : vector<16x32xf32> to vector<32xf32>
    %18 = vector.shape_cast %17 : vector<32xf32> to vector<1x32xf32>
    %19 = arith.addf %0, %18 : vector<1x32xf32>
    %cst_19 = arith.constant 0.000000e+00 : f32
    %20 = vector.broadcast %cst_19 : f32 to vector<16x32xf32>
    %c0_20 = arith.constant 0 : index
    %c1 = arith.constant 1 : index
    %c0_21 = arith.constant 0 : index
    %c0_22 = arith.constant 0 : index
    %21 = vector.load %arg2[%c0_20, %c1, %c0_21, %c0_22] : memref<1x3x16x4xbf16, #tpu.memory_space<vmem>>, vector<1x1x16x4xbf16>
    %22 = vector.shape_cast %21 : vector<1x1x16x4xbf16> to vector<16x4xbf16>
    %c0_23 = arith.constant 0 : index
    %c0_24 = arith.constant 0 : index
    %23 = vector.load %arg4[%c0_23, %c0_24] : memref<4x32xbf16, #tpu.memory_space<vmem>>, vector<4x32xbf16>
    %cst_25 = arith.constant dense<0.000000e+00> : vector<16x32xf32>
    %24 = tpu.matmul %22, %23, %cst_25 {dimension_numbers = #tpu.dot_dimension_numbers<[1], [0], [0], [1], [0, 0, 1, 1], [], []>} : vector<16x4xbf16>, vector<4x32xbf16>, vector<16x32xf32> -> vector<16x32xf32>
    %25 = arith.addf %20, %24 : vector<16x32xf32>
    %c0_26 = arith.constant 0 : index
    %c1_27 = arith.constant 1 : index
    %c0_28 = arith.constant 0 : index
    %c0_29 = arith.constant 0 : index
    %26 = vector.load %arg3[%c0_26, %c1_27, %c0_28, %c0_29] : memref<1x3x16x8xbf16, #tpu.memory_space<vmem>>, vector<1x1x16x8xbf16>
    %27 = vector.shape_cast %26 : vector<1x1x16x8xbf16> to vector<16x8xbf16>
    %c0_30 = arith.constant 0 : index
    %c0_31 = arith.constant 0 : index
    %28 = vector.load %arg5[%c0_30, %c0_31] : memref<8x32xbf16, #tpu.memory_space<vmem>>, vector<8x32xbf16>
    %cst_32 = arith.constant dense<0.000000e+00> : vector<16x32xf32>
    %29 = tpu.matmul %27, %28, %cst_32 {dimension_numbers = #tpu.dot_dimension_numbers<[1], [0], [0], [1], [0, 0, 1, 1], [], []>} : vector<16x8xbf16>, vector<8x32xbf16>, vector<16x32xf32> -> vector<16x32xf32>
    %30 = arith.addf %25, %29 : vector<16x32xf32>
    %31 = arith.truncf %30 : vector<16x32xf32> to vector<16x32xbf16>
    %c0_33 = arith.constant 0 : index
    %c1_34 = arith.constant 1 : index
    %c0_35 = arith.constant 0 : index
    %c0_36 = arith.constant 0 : index
    %32 = vector.load %arg6[%c0_33, %c1_34, %c0_35, %c0_36] : memref<1x3x16x32xbf16, #tpu.memory_space<vmem>>, vector<1x1x16x32xbf16>
    %33 = vector.shape_cast %32 : vector<1x1x16x32xbf16> to vector<16x32xbf16>
    %34 = vector.shape_cast %31 : vector<16x32xbf16> to vector<1x1x16x32xbf16>
    tpu.vector_store %arg6[%c0_33, %c1_34, %c0_35, %c0_36], %34 {strides = array<i32>} : memref<1x3x16x32xbf16, #tpu.memory_space<vmem>>, vector<1x1x16x32xbf16>,
    %35 = arith.mulf %30, %30 : vector<16x32xf32>
    %cst_37 = arith.constant dense<0.000000e+00> : vector<32xf32>
    %36 = vector.multi_reduction <add>, %35, %cst_37 [0] : vector<16x32xf32> to vector<32xf32>
    %37 = vector.shape_cast %36 : vector<32xf32> to vector<1x32xf32>
    %38 = arith.addf %19, %37 : vector<1x32xf32>
    %cst_38 = arith.constant 0.000000e+00 : f32
    %39 = vector.broadcast %cst_38 : f32 to vector<16x32xf32>
    %c0_39 = arith.constant 0 : index
    %c2 = arith.constant 2 : index
    %c0_40 = arith.constant 0 : index
    %c0_41 = arith.constant 0 : index
    %40 = vector.load %arg2[%c0_39, %c2, %c0_40, %c0_41] : memref<1x3x16x4xbf16, #tpu.memory_space<vmem>>, vector<1x1x16x4xbf16>
    %41 = vector.shape_cast %40 : vector<1x1x16x4xbf16> to vector<16x4xbf16>
    %c0_42 = arith.constant 0 : index
    %c0_43 = arith.constant 0 : index
    %42 = vector.load %arg4[%c0_42, %c0_43] : memref<4x32xbf16, #tpu.memory_space<vmem>>, vector<4x32xbf16>
    %cst_44 = arith.constant dense<0.000000e+00> : vector<16x32xf32>
    %43 = tpu.matmul %41, %42, %cst_44 {dimension_numbers = #tpu.dot_dimension_numbers<[1], [0], [0], [1], [0, 0, 1, 1], [], []>} : vector<16x4xbf16>, vector<4x32xbf16>, vector<16x32xf32> -> vector<16x32xf32>
    %44 = arith.addf %39, %43 : vector<16x32xf32>
    %c0_45 = arith.constant 0 : index
    %c2_46 = arith.constant 2 : index
    %c0_47 = arith.constant 0 : index
    %c0_48 = arith.constant 0 : index
    %45 = vector.load %arg3[%c0_45, %c2_46, %c0_47, %c0_48] : memref<1x3x16x8xbf16, #tpu.memory_space<vmem>>, vector<1x1x16x8xbf16>
    %46 = vector.shape_cast %45 : vector<1x1x16x8xbf16> to vector<16x8xbf16>
    %c0_49 = arith.constant 0 : index
    %c0_50 = arith.constant 0 : index
    %47 = vector.load %arg5[%c0_49, %c0_50] : memref<8x32xbf16, #tpu.memory_space<vmem>>, vector<8x32xbf16>
    %cst_51 = arith.constant dense<0.000000e+00> : vector<16x32xf32>
    %48 = tpu.matmul %46, %47, %cst_51 {dimension_numbers = #tpu.dot_dimension_numbers<[1], [0], [0], [1], [0, 0, 1, 1], [], []>} : vector<16x8xbf16>, vector<8x32xbf16>, vector<16x32xf32> -> vector<16x32xf32>
    %49 = arith.addf %44, %48 : vector<16x32xf32>
    %50 = arith.truncf %49 : vector<16x32xf32> to vector<16x32xbf16>
    %c0_52 = arith.constant 0 : index
    %c2_53 = arith.constant 2 : index
    %c0_54 = arith.constant 0 : index
    %c0_55 = arith.constant 0 : index
    %51 = vector.load %arg6[%c0_52, %c2_53, %c0_54, %c0_55] : memref<1x3x16x32xbf16, #tpu.memory_space<vmem>>, vector<1x1x16x32xbf16>
    %52 = vector.shape_cast %51 : vector<1x1x16x32xbf16> to vector<16x32xbf16>
    %53 = vector.shape_cast %50 : vector<16x32xbf16> to vector<1x1x16x32xbf16>
    tpu.vector_store %arg6[%c0_52, %c2_53, %c0_54, %c0_55], %53 {strides = array<i32>} : memref<1x3x16x32xbf16, #tpu.memory_space<vmem>>, vector<1x1x16x32xbf16>,
    %54 = arith.mulf %49, %49 : vector<16x32xf32>
    %cst_56 = arith.constant dense<0.000000e+00> : vector<32xf32>
    %55 = vector.multi_reduction <add>, %54, %cst_56 [0] : vector<16x32xf32> to vector<32xf32>
    %56 = vector.shape_cast %55 : vector<32xf32> to vector<1x32xf32>
    %57 = arith.addf %38, %56 : vector<1x32xf32>
    %c0_57 = arith.constant 0 : index
    %c0_58 = arith.constant 0 : index
    %c0_59 = arith.constant 0 : index
    %c0_60 = arith.constant 0 : index
    %58 = vector.load %arg7[%c0_57, %c0_58, %c0_59, %c0_60] : memref<1x1x1x32xf32, #tpu.memory_space<vmem>>, vector<1x1x1x32xf32>
    %59 = vector.shape_cast %58 : vector<1x1x1x32xf32> to vector<1x32xf32>
    %60 = vector.shape_cast %57 : vector<1x32xf32> to vector<1x1x1x32xf32>
    tpu.vector_store %arg7[%c0_57, %c0_58, %c0_59, %c0_60], %60 {strides = array<i32>} : memref<1x1x1x32xf32, #tpu.memory_space<vmem>>, vector<1x1x1x32xf32>,
    return
  }
  func.func @transform_0(%arg0: i32, %arg1: i32) -> (i32, i32, i32, i32) {
    %c0_i32 = arith.constant 0 : i32
    %c0_i32_0 = arith.constant 0 : i32
    %c0_i32_1 = arith.constant 0 : i32
    return %arg0, %c0_i32, %arg1, %c0_i32_0 : i32, i32, i32, i32
  }
  func.func @transform_1(%arg0: i32, %arg1: i32) -> (i32, i32, i32, i32) {
    %c0_i32 = arith.constant 0 : i32
    %c0_i32_0 = arith.constant 0 : i32
    %c0_i32_1 = arith.constant 0 : i32
    return %arg0, %c0_i32, %arg1, %c0_i32_0 : i32, i32, i32, i32
  }
  func.func @transform_2(%arg0: i32, %arg1: i32) -> (i32, i32) {
    %c0_i32 = arith.constant 0 : i32
    %c0_i32_0 = arith.constant 0 : i32
    %c0_i32_1 = arith.constant 0 : i32
    return %c0_i32, %c0_i32_0 : i32, i32
  }
  func.func @transform_3(%arg0: i32, %arg1: i32) -> (i32, i32) {
    %c0_i32 = arith.constant 0 : i32
    %c0_i32_0 = arith.constant 0 : i32
    %c0_i32_1 = arith.constant 0 : i32
    return %c0_i32, %c0_i32_0 : i32, i32
  }
  func.func @transform_4(%arg0: i32, %arg1: i32) -> (i32, i32, i32, i32) {
    %c0_i32 = arith.constant 0 : i32
    %c0_i32_0 = arith.constant 0 : i32
    %c0_i32_1 = arith.constant 0 : i32
    return %arg0, %c0_i32, %arg1, %c0_i32_0 : i32, i32, i32, i32
  }
  func.func @transform_5(%arg0: i32, %arg1: i32) -> (i32, i32, i32, i32) {
    %c0_i32 = arith.constant 0 : i32
    %c0_i32_0 = arith.constant 0 : i32
    %c0_i32_1 = arith.constant 0 : i32
    return %arg0, %arg1, %c0_i32, %c0_i32_0 : i32, i32, i32, i32
  }
}

module attributes {stable_mosaic.version = 11 : i64} {
  func.func @_final_norm_act_kernel(%arg0: i32, %arg1: i32, %arg2: memref<1x3x16x16xbf16, #tpu.memory_space<vmem>>, %arg3: memref<1x16xf32, #tpu.memory_space<vmem>>, %arg4: memref<3x16x16xf32, #tpu.memory_space<vmem>>) attributes {dimension_semantics = [#tpu.dimension_semantics<parallel>, #tpu.dimension_semantics<parallel>], iteration_bounds = array<i64: 2, 1>, scalar_prefetch = 0 : i64, scratch_operands = 0 : i64, tpu.core_type = #tpu.core_type<tc>, window_params = [{transform_indices = @transform_0, window_bounds = array<i64: 1, 3, 16, 16>}, {pipeline_mode = #tpu.pipeline_mode<synchronous>, transform_indices = @transform_1, window_bounds = array<i64: 1, 16>}, {transform_indices = @transform_2, window_bounds = array<i64: 3, 16, 16>}]} {
    %c0 = arith.constant 0 : index
    %c0_0 = arith.constant 0 : index
    %c0_1 = arith.constant 0 : index
    %c0_2 = arith.constant 0 : index
    %0 = vector.load %arg2[%c0, %c0_0, %c0_1, %c0_2] : memref<1x3x16x16xbf16, #tpu.memory_space<vmem>>, vector<1x3x16x16xbf16>
    %1 = vector.shape_cast %0 : vector<1x3x16x16xbf16> to vector<3x16x16xbf16>
    %2 = arith.extf %1 : vector<3x16x16xbf16> to vector<3x16x16xf32>
    %c0_3 = arith.constant 0 : index
    %c0_4 = arith.constant 0 : index
    %3 = vector.load %arg3[%c0_3, %c0_4] : memref<1x16xf32, #tpu.memory_space<vmem>>, vector<1x16xf32>
    %4 = vector.shape_cast %3 : vector<1x16xf32> to vector<1x1x16xf32>
    %5 = vector.broadcast %4 : vector<1x1x16xf32> to vector<3x16x16xf32>
    %6 = arith.mulf %2, %5 : vector<3x16x16xf32>
    %7 = arith.mulf %6, %6 : vector<3x16x16xf32>
    %cst = arith.constant dense<0.000000e+00> : vector<16x16xf32>
    %8 = vector.multi_reduction <add>, %7, %cst [0] : vector<3x16x16xf32> to vector<16x16xf32>
    %9 = vector.shape_cast %8 : vector<16x16xf32> to vector<1x16x16xf32>
    %10 = math.sqrt %9 : vector<1x16x16xf32>
    %cst_5 = arith.constant 1.000000e+00 : f32
    %11 = vector.broadcast %cst_5 : f32 to vector<1x16x16xf32>
    %12 = arith.minimumf %10, %11 : vector<1x16x16xf32>
    %13 = vector.broadcast %12 : vector<1x16x16xf32> to vector<3x16x16xf32>
    %14 = arith.mulf %6, %13 : vector<3x16x16xf32>
    %15 = vector.extract_strided_slice %14 {offsets = [0, 0, 0], sizes = [1, 16, 16], strides = [1, 1, 1]} : vector<3x16x16xf32> to vector<1x16x16xf32>
    %16 = vector.shape_cast %15 : vector<1x16x16xf32> to vector<16x16xf32>
    %17 = tpu.transpose %16, [1, 0] : vector<16x16xf32> -> vector<16x16xf32>
    %c0_6 = arith.constant 0 : index
    %c0_7 = arith.constant 0 : index
    %c0_8 = arith.constant 0 : index
    %18 = vector.load %arg4[%c0_6, %c0_7, %c0_8] : memref<3x16x16xf32, #tpu.memory_space<vmem>>, vector<1x16x16xf32>
    %19 = vector.shape_cast %18 : vector<1x16x16xf32> to vector<16x16xf32>
    %20 = vector.shape_cast %17 : vector<16x16xf32> to vector<1x16x16xf32>
    tpu.vector_store %arg4[%c0_6, %c0_7, %c0_8], %20 {strides = array<i32>} : memref<3x16x16xf32, #tpu.memory_space<vmem>>, vector<1x16x16xf32>,
    %21 = vector.extract_strided_slice %14 {offsets = [1, 0, 0], sizes = [1, 16, 16], strides = [1, 1, 1]} : vector<3x16x16xf32> to vector<1x16x16xf32>
    %22 = vector.shape_cast %21 : vector<1x16x16xf32> to vector<16x16xf32>
    %23 = tpu.transpose %22, [1, 0] : vector<16x16xf32> -> vector<16x16xf32>
    %c1 = arith.constant 1 : index
    %c0_9 = arith.constant 0 : index
    %c0_10 = arith.constant 0 : index
    %24 = vector.load %arg4[%c1, %c0_9, %c0_10] : memref<3x16x16xf32, #tpu.memory_space<vmem>>, vector<1x16x16xf32>
    %25 = vector.shape_cast %24 : vector<1x16x16xf32> to vector<16x16xf32>
    %26 = vector.shape_cast %23 : vector<16x16xf32> to vector<1x16x16xf32>
    tpu.vector_store %arg4[%c1, %c0_9, %c0_10], %26 {strides = array<i32>} : memref<3x16x16xf32, #tpu.memory_space<vmem>>, vector<1x16x16xf32>,
    %27 = vector.extract_strided_slice %14 {offsets = [2, 0, 0], sizes = [1, 16, 16], strides = [1, 1, 1]} : vector<3x16x16xf32> to vector<1x16x16xf32>
    %28 = vector.shape_cast %27 : vector<1x16x16xf32> to vector<16x16xf32>
    %29 = tpu.transpose %28, [1, 0] : vector<16x16xf32> -> vector<16x16xf32>
    %c2 = arith.constant 2 : index
    %c0_11 = arith.constant 0 : index
    %c0_12 = arith.constant 0 : index
    %30 = vector.load %arg4[%c2, %c0_11, %c0_12] : memref<3x16x16xf32, #tpu.memory_space<vmem>>, vector<1x16x16xf32>
    %31 = vector.shape_cast %30 : vector<1x16x16xf32> to vector<16x16xf32>
    %32 = vector.shape_cast %29 : vector<16x16xf32> to vector<1x16x16xf32>
    tpu.vector_store %arg4[%c2, %c0_11, %c0_12], %32 {strides = array<i32>} : memref<3x16x16xf32, #tpu.memory_space<vmem>>, vector<1x16x16xf32>,
    return
  }
  func.func @transform_0(%arg0: i32, %arg1: i32) -> (i32, i32, i32, i32) {
    %c0_i32 = arith.constant 0 : i32
    %c0_i32_0 = arith.constant 0 : i32
    %c0_i32_1 = arith.constant 0 : i32
    return %arg0, %c0_i32, %arg1, %c0_i32_0 : i32, i32, i32, i32
  }
  func.func @transform_1(%arg0: i32, %arg1: i32) -> (i32, i32) {
    %c0_i32 = arith.constant 0 : i32
    %c0_i32_0 = arith.constant 0 : i32
    %c0_i32_1 = arith.constant 0 : i32
    return %c0_i32, %c0_i32_0 : i32, i32
  }
  func.func @transform_2(%arg0: i32, %arg1: i32) -> (i32, i32, i32) {
    %c0_i32 = arith.constant 0 : i32
    %c0_i32_0 = arith.constant 0 : i32
    return %arg0, %c0_i32, %arg1 : i32, i32, i32
  }
}

</mosaic_0001>

<llo_original>
// kernel: pointnet_fp_q_forward.6
$region0: #{pointnet_fp_q_forward.6}
  #allocation0 [shape = 'u32[]', space=smem, size = 0x4, offset = 0x4, fixed_abs, tag = 'smem constant byte address 0x4 - core index']
  #allocation1 [shape = 'u32[144,128]{1,0:T(1,128)}', space=vmem, size = 0x12000, scoped, tag = 'internal scratch']
  %s0 = inlined_call_operand.vmem [shape: bf16[2,3,16,32], index: 0, kind: input, shape index: {}]
  %s1 = inlined_call_operand.vmem [shape: f32[1,32], index: 1, kind: input, shape index: {}]
  %s2 = inlined_call_operand.vmem [shape: bf16[32,16], index: 2, kind: input, shape index: {}]
  %s3 = inlined_call_operand.vmem [shape: bf16[2,3,16,16], index: 3, kind: output, shape index: {0}]
  %s4 = inlined_call_operand.vmem [shape: f32[2,1,1,16], index: 4, kind: output, shape index: {1}]
  %5 = xla_tuple %s3, %s4
  %s6 = sld [smem:[#allocation0]]
  $region53: #{pointnet_fp_q_forward.6} parent=0
    _
  %s8 = ssub.s32 1, %s6
  %s9 = scalar_select 0, %s8, %s6
  loop: start=0, step=1, limit=4
  $region2: #{pointnet_fp_q_forward.6} parent=0 // loop_pre_header
    _
  $region3: #{pointnet_fp_q_forward.6} parent=0 // loop_header
    %s11 = sphi 0, %s15
    %p12 = scmp.ge.s32.totalorder %s11, 4
    %s18 = sphi 0, %s30
    %s19 = sphi 0, %s26
    %s20 = sphi 0, %s18
    %s21 = sphi 0, %s19
    %s22 = sphi 0, %s20
    %s23 = sphi 0, %s21
    %s35 = sphi 0, %s37
    %s38 = sphi 0, %s35
    %s39 = sphi 0, %s38
    %s55 = sphi 0, %s39
    %s59 = sphi 0, %s59
    %s61 = sphi 0, %s59
    %s62 = sphi 0, %s61
    %s76 = sphi 0, %s62
    %s80 = sphi 0, %s80
    %s82 = sphi 0, %s80
    %s83 = sphi 0, %s82
    %s97 = sphi 0, %s83
    %s105 = sphi 0, %s107
    %s108 = sphi 0, %s105
    %s109 = sphi 0, %s108
    %s125 = sphi 0, %s109
    %s133 = sphi 0, %s135
    %s136 = sphi 0, %s133
    %s137 = sphi 0, %s136
    %s153 = sphi 0, %s137
  $region4: #{pointnet_fp_q_forward.6} parent=0 // loop_header_branch
    %14 = sbr.rel (%p12) target = $region8
  $region5: #{pointnet_fp_q_forward.6} parent=0 // loop_body
    %s16 = ssub.s32 %s11, 1
    %s17 = ssub.s32 %s11, 2
    %s24 = sadd.s32 1, %s19
    %p25 = scmp.ge.s32.totalorder %s24, 1
    %s26 = scalar_select %p25, 0, %s24
    %s27 = sadd.s32 1, %s18
    %s28 = scalar_select %p25, %s27, %s18
    %p29 = scmp.ge.s32.totalorder %s28, 2
    %s30 = scalar_select %p29, 0, %s28
    %s31 = ssub.s32 %s18, %s30
    %s32 = ssub.s32 %s19, %s26
    %s33 = sor.u32 %s31, %s32
    %p34 = scmp.eq.s32.totalorder %s33, 0
    %s36 = sadd.s32 %s35, 1
    %s37 = scalar_select %p34, %s35, %s36
    %p40 = pneg %p34
    %p41 = scmp.eq.s32.totalorder %s11, 1
    %p42 = por %p40, %p41
    %p43 = scmp.ne.s32.totalorder %s35, %s38
    %p44 = scmp.eq.s32.totalorder %s11, 0
    %p45 = por %p43, %p44
    %p46 = scmp.ne.s32.totalorder %s35, %s38
    %p47 = scmp.eq.s32.totalorder %s16, 1
    %p48 = por %p46, %p47
    %p49 = scmp.ne.s32.totalorder %s38, %s39
    %p50 = scmp.eq.s32.totalorder %s16, 0
    %p51 = por %p49, %p50
    %p52 = scmp.ne.s32.totalorder %s38, %s39
    %p53 = scmp.eq.s32.totalorder %s17, 1
    %p54 = por %p52, %p53
    %p56 = scmp.ne.s32.totalorder %s39, %s55
    %p57 = scmp.eq.s32.totalorder %s17, 0
    %p58 = por %p56, %p57
    %s60 = sadd.s32 %s59, 1
    %p63 = scmp.eq.s32.totalorder %s11, 1
    %p64 = scmp.ne.s32.totalorder %s59, %s61
    %p65 = scmp.eq.s32.totalorder %s11, 0
    %p66 = por %p64, %p65
    %p67 = scmp.ne.s32.totalorder %s59, %s61
    %p68 = scmp.eq.s32.totalorder %s16, 1
    %p69 = por %p67, %p68
    %p70 = scmp.ne.s32.totalorder %s61, %s62
    %p71 = scmp.eq.s32.totalorder %s16, 0
    %p72 = por %p70, %p71
    %p73 = scmp.ne.s32.totalorder %s61, %s62
    %p74 = scmp.eq.s32.totalorder %s17, 1
    %p75 = por %p73, %p74
    %p77 = scmp.ne.s32.totalorder %s62, %s76
    %p78 = scmp.eq.s32.totalorder %s17, 0
    %p79 = por %p77, %p78
    %s81 = sadd.s32 %s80, 1
    %p84 = scmp.eq.s32.totalorder %s11, 1
    %p85 = scmp.ne.s32.totalorder %s80, %s82
    %p86 = scmp.eq.s32.totalorder %s11, 0
    %p87 = por %p85, %p86
    %p88 = scmp.ne.s32.totalorder %s80, %s82
    %p89 = scmp.eq.s32.totalorder %s16, 1
    %p90 = por %p88, %p89
    %p91 = scmp.ne.s32.totalorder %s82, %s83
    %p92 = scmp.eq.s32.totalorder %s16, 0
    %p93 = por %p91, %p92
    %p94 = scmp.ne.s32.totalorder %s82, %s83
    %p95 = scmp.eq.s32.totalorder %s17, 1
    %p96 = por %p94, %p95
    %p98 = scmp.ne.s32.totalorder %s83, %s97
    %p99 = scmp.eq.s32.totalorder %s17, 0
    %p100 = por %p98, %p99
    %s101 = ssub.s32 %s18, %s30
    %s102 = ssub.s32 %s19, %s26
    %s103 = sor.u32 %s101, %s102
    %p104 = scmp.eq.s32.totalorder %s103, 0
    %s106 = sadd.s32 %s105, 1
    %s107 = scalar_select %p104, %s105, %s106
    %p110 = pneg %p104
    %p111 = scmp.eq.s32.totalorder %s11, 1
    %p112 = por %p110, %p111
    %p113 = scmp.ne.s32.totalorder %s105, %s108
    %p114 = scmp.eq.s32.totalorder %s11, 0
    %p115 = por %p113, %p114
    %p116 = scmp.ne.s32.totalorder %s105, %s108
    %p117 = scmp.eq.s32.totalorder %s16, 1
    %p118 = por %p116, %p117
    %p119 = scmp.ne.s32.totalorder %s108, %s109
    %p120 = scmp.eq.s32.totalorder %s16, 0
    %p121 = por %p119, %p120
    %p122 = scmp.ne.s32.totalorder %s108, %s109
    %p123 = scmp.eq.s32.totalorder %s17, 1
    %p124 = por %p122, %p123
    %p126 = scmp.ne.s32.totalorder %s109, %s125
    %p127 = scmp.eq.s32.totalorder %s17, 0
    %p128 = por %p126, %p127
    %s129 = ssub.s32 %s18, %s30
    %s130 = ssub.s32 %s19, %s26
    %s131 = sor.u32 %s129, %s130
    %p132 = scmp.eq.s32.totalorder %s131, 0
    %s134 = sadd.s32 %s133, 1
    %s135 = scalar_select %p132, %s133, %s134
    %p138 = pneg %p132
    %p139 = scmp.eq.s32.totalorder %s11, 1
    %p140 = por %p138, %p139
    %p141 = scmp.ne.s32.totalorder %s133, %s136
    %p142 = scmp.eq.s32.totalorder %s11, 0
    %p143 = por %p141, %p142
    %p144 = scmp.ne.s32.totalorder %s133, %s136
    %p145 = scmp.eq.s32.totalorder %s16, 1
    %p146 = por %p144, %p145
    %p147 = scmp.ne.s32.totalorder %s136, %s137
    %p148 = scmp.eq.s32.totalorder %s16, 0
    %p149 = por %p147, %p148
    %p150 = scmp.ne.s32.totalorder %s136, %s137
    %p151 = scmp.eq.s32.totalorder %s17, 1
    %p152 = por %p150, %p151
    %p154 = scmp.ne.s32.totalorder %s137, %s153
    %p155 = scmp.eq.s32.totalorder %s17, 0
    %p156 = por %p154, %p155
    %p157 = scmp.le.s32.totalorder 1, %s11
    %p158 = scmp.lt.s32.totalorder %s11, 3
    %p159 = pnand %p157, %p158
    %p160 = pneg %p159
    // Predicated region
    $region9: #{pointnet_fp_q_forward.6} parent=5 // pred_check
      _
    $region10: #{pointnet_fp_q_forward.6} parent=5 // pred_check_branch
      %162 = sbr.rel (%p159) target = $region12
    $region11: #{pointnet_fp_q_forward.6} parent=5 // pred_region
      %s163 = ssub.s32 %s11, 1
      // Predicated region
      $region13: #{pointnet_fp_q_forward.6} parent=11 // pred_check
        %p164 = pneg %p72
      $region14: #{pointnet_fp_q_forward.6} parent=11 // pred_check_branch
        %166 = sbr.rel (%p164) target = $region16
      $region15: #{pointnet_fp_q_forward.6} parent=11 // pred_region
        _
      $region16: #{pointnet_fp_q_forward.6} parent=11 // pred_fallthru
        _
      // Predicated region
      $region17: #{pointnet_fp_q_forward.6} parent=11 // pred_check
        %p167 = pneg %p93
      $region18: #{pointnet_fp_q_forward.6} parent=11 // pred_check_branch
        %169 = sbr.rel (%p167) target = $region20
      $region19: #{pointnet_fp_q_forward.6} parent=11 // pred_region
        _
      $region20: #{pointnet_fp_q_forward.6} parent=11 // pred_fallthru
        _
    $region12: #{pointnet_fp_q_forward.6} parent=5 // pred_fallthru
      _
    %p170 = scmp.lt.s32.totalorder %s11, 2
    // Predicated region
    $region21: #{pointnet_fp_q_forward.6} parent=5 // pred_check
      %p171 = pneg %p170
    $region22: #{pointnet_fp_q_forward.6} parent=5 // pred_check_branch
      %173 = sbr.rel (%p171) target = $region24
    $region23: #{pointnet_fp_q_forward.6} parent=5 // pred_region
      // Predicated region
      $region25: #{pointnet_fp_q_forward.6} parent=23 // pred_check
        %p174 = pneg %p45
      $region26: #{pointnet_fp_q_forward.6} parent=23 // pred_check_branch
        %176 = sbr.rel (%p174) target = $region28
      $region27: #{pointnet_fp_q_forward.6} parent=23 // pred_region
        %s177 = smul.u32 2, %s19
        %p178 = scmp.lt.s32.totalorder %s18, 1
        %s179 = scalar_select %p178, %s18, 1
        %p180 = scmp.lt.s32.totalorder %s177, 1
        %s181 = scalar_select %p180, %s177, 1
        %s182 = smul.addr %s179, 6
        %s183 = sadd.s32 %s181, %s182
        %s184 = smul.addr %s183, 4
        %s185 = scalar_lea.vmem %s0, %s184
        %s186 = smul.u32 2, %s19
      $region28: #{pointnet_fp_q_forward.6} parent=23 // pred_fallthru
        _
    $region24: #{pointnet_fp_q_forward.6} parent=5 // pred_fallthru
      _
    %p187 = scmp.le.s32.totalorder 1, %s11
    %p188 = scmp.lt.s32.totalorder %s11, 3
    %p189 = pnand %p187, %p188
    %p190 = pneg %p189
    // Predicated region
    $region29: #{pointnet_fp_q_forward.6} parent=5 // pred_check
      _
    $region30: #{pointnet_fp_q_forward.6} parent=5 // pred_check_branch
      %192 = sbr.rel (%p189) target = $region32
    $region31: #{pointnet_fp_q_forward.6} parent=5 // pred_region
      %s193 = ssub.s32 %s11, 1
      %s194 = smul.u32 2, %s21
      %p195 = scmp.lt.s32.totalorder %s20, 1
      %s196 = scalar_select %p195, %s20, 1
      %p197 = scmp.lt.s32.totalorder %s194, 1
      %s198 = scalar_select %p197, %s194, 1
      %s199 = smul.addr %s196, 6
      %s200 = sadd.s32 %s198, %s199
      %s201 = smul.addr %s200, 4
      %s202 = scalar_lea.vmem %s0, %s201
      %p203 = pneg %p51
      %p204 = pneg %p48
      %p205 = pneg %p72
      %p206 = pneg %p69
      %p207 = pneg %p93
      %p208 = pneg %p90
      %p209 = pneg %p121
      %p210 = pneg %p118
      %s211 = smul.u32 2, %s21
      %p212 = scmp.lt.s32.totalorder %s20, 1
      %s213 = scalar_select %p212, %s20, 1
      %p214 = scmp.lt.s32.totalorder %s211, 1
      %s215 = scalar_select %p214, %s211, 1
      %s216 = smul.addr %s213, 6
      %s217 = sadd.s32 %s215, %s216
      %s218 = smul.addr %s217, 4
      %s219 = scalar_lea.vmem %s3, %s218
      %p220 = pneg %p149
      %p221 = pneg %p146
      %p222 = scmp.lt.s32.totalorder %s20, 1
      %s223 = scalar_select %p222, %s20, 1
      %p224 = scmp.lt.s32.totalorder %s21, 0
      %s225 = scalar_select %p224, %s21, 0
      %s226 = sadd.s32 %s225, %s223
      %s227 = scalar_lea.vmem %s4, %s226
      %s228 = smul.u32 2, %s21
      %p229 = scmp.lt.s32.totalorder %s20, 1
      %s230 = scalar_select %p229, %s20, 1
      %p231 = scmp.lt.s32.totalorder %s228, 1
      %s232 = scalar_select %p231, %s228, 1
      %s233 = smul.addr %s230, 6
      %s234 = sadd.s32 %s232, %s233
      %s235 = smul.addr %s234, 4
      %s236 = scalar_lea.vmem %s0, %s235
      %s237 = smul.u32 2, %s21
      %s238 = smul.u32 2, %s21
      %p239 = scmp.lt.s32.totalorder %s20, 1
      %s240 = scalar_select %p239, %s20, 1
      %p241 = scmp.lt.s32.totalorder %s238, 1
      %s242 = scalar_select %p241, %s238, 1
      %s243 = smul.addr %s240, 6
      %s244 = sadd.s32 %s242, %s243
      %s245 = smul.addr %s244, 4
      %s246 = scalar_lea.vmem %s3, %s245
      %s247 = smul.u32 2, %s21
      %p248 = scmp.lt.s32.totalorder %s20, 1
      %s249 = scalar_select %p248, %s20, 1
      %p250 = scmp.lt.s32.totalorder %s21, 0
      %s251 = scalar_select %p250, %s21, 0
      %s252 = sadd.s32 %s251, %s249
      %s253 = scalar_lea.vmem %s4, %s252
      %v255 = vld [vmem:[%s236] sm:$0xf]
      %v256 = vld [vmem:[%s236 + $0x4] sm:$0xf]
      %v257 = vld [vmem:[%s236 + $0x8] sm:$0xf]
      %v258 = vld [vmem:[%s236 + $0xc] sm:$0xf]
      %v259 = vld [vmem:[%s236 + $0x10] sm:$0xf]
      %v260 = vld [vmem:[%s236 + $0x14] sm:$0xf]
      %v261 = vunpack.c.l.bf16 %v255
      %v262 = vunpack.c.l.bf16 %v256
      %v263 = vunpack.c.l.bf16 %v257
      %v264 = vunpack.c.l.bf16 %v258
      %v265 = vunpack.c.l.bf16 %v259
      %v266 = vunpack.c.l.bf16 %v260
      %v267 = vld [vmem:[%s1] sm:$0x1]
      %v269 = vlaneseq
      %v270 = vshrl.u32 %v269, 7
      %v271 = vsub.s32 0, %v270
      %v272 = vrot.slane %v267, %v271
      %v274 = vmul.f32 %v261, %v272
      %v275 = vmul.f32 %v262, %v272
      %v276 = vmul.f32 %v263, %v272
      %v277 = vmul.f32 %v264, %v272
      %v278 = vmul.f32 %v265, %v272
      %v279 = vmul.f32 %v266, %v272
      %v280 = vmul.f32 %v274, %v274
      %v281 = vmul.f32 %v275, %v275
      %v282 = vmul.f32 %v276, %v276
      %v283 = vmul.f32 %v277, %v277
      %v284 = vmul.f32 %v278, %v278
      %v285 = vmul.f32 %v279, %v279
      %vm286 = vcmask 261120
      %v287 = vsel %vm286, %v280, 0.0
      %v288 = vsel %vm286, %v282, 0.0
      %v289 = vadd.f32 %v287, %v288
      %v290 = vsel %vm286, %v284, 0.0
      %v291 = vadd.f32 %v289, %v290
      %v292 = vsel %vm286, %v281, 0.0
      %v293 = vsel %vm286, %v283, 0.0
      %v294 = vadd.f32 %v292, %v293
      %v295 = vsel %vm286, %v285, 0.0
      %v296 = vadd.f32 %v294, %v295
      %v297 = vrsqrt.pop %v291
      %v298 = vmul.f32 %v291, %v297
      %vm299 = vcmp.eq.f32.partialorder %v291, inf
      %v300 = vsel %vm299, %v291, %v298
      %vm301 = vcmp.eq.f32.partialorder %v291, 0.0
      %v302 = vand.u32 %v291, 2147483648
      %v303 = vsel %vm301, %v302, %v300
      %v304 = vrsqrt.pop %v296
      %v305 = vmul.f32 %v296, %v304
      %vm306 = vcmp.eq.f32.partialorder %v296, inf
      %v307 = vsel %vm306, %v296, %v305
      %vm308 = vcmp.eq.f32.partialorder %v296, 0.0
      %v309 = vand.u32 %v296, 2147483648
      %v310 = vsel %vm308, %v309, %v307
      %v311 = vmin.f32 %v303, 1.0
      %v312 = vmin.f32 %v310, 1.0
      %v313 = vmul.f32 %v274, %v311
      %v314 = vmul.f32 %v275, %v312
      %v315 = vmul.f32 %v276, %v311
      %v316 = vmul.f32 %v277, %v312
      %v317 = vmul.f32 %v278, %v311
      %v318 = vmul.f32 %v279, %v312
      %v319 = vpack.c.bf16 %v314, %v313
      %v320 = vpack.c.bf16 %v316, %v315
      %v321 = vpack.c.bf16 %v318, %v317
      %v322 = vld [vmem:[%s2] sm:$0xf]
      %v323 = vld [vmem:[%s2 + $0x4] sm:$0xf]
      %v324 = vld [vmem:[%s2 + $0x8] sm:$0xf]
      %v325 = vld [vmem:[%s2 + $0xc] sm:$0xf]
      %v330 = vunpack.c.l.b16 %v322
      %v331 = vunpack.c.l.b16 %v323
      %v332 = vunpack.c.l.b16 %v324
      %v333 = vunpack.c.l.b16 %v325
      %v334 = vpack.c.b16 %v331, %v330
      %v335 = vpack.c.b16 %v333, %v332
      %v339 = vsel %vm286, %v319, 0
      %341 = vmatprep.subr.bf16.mxu0 0
      %342 = vmatpush1.bf16.msra.mxu0 0
      %343 = vmatprep.subr.bf16.mxu0 0
      %344 = vmatpush1.bf16.msra.mxu0 0
      %345 = vmatprep.subr.bf16.mxu0 0
      %346 = vmatpush1.bf16.msra.mxu0 0
      %347 = vmatprep.subr.bf16.mxu0 0
      %348 = vmatpush1.bf16.msra.mxu0 0
      %349 = vmatprep.subr.bf16.mxu0 0
      %350 = vmatpush1.bf16.msra.mxu0 0
      %351 = vmatprep.subr.bf16.mxu0 0
      %352 = vmatpush1.bf16.msra.mxu0 0
      %353 = vmatprep.subr.bf16.mxu0 0
      %354 = vmatpush1.bf16.msra.mxu0 %v335
      %355 = vmatprep.subr.bf16.mxu0 0
      %356 = vmatpush1.bf16.msra.mxu0 %v334
      %357 = vmatprep.subr.bf16.mxu0 0
      %358 = vmatpush2.bf16.msra.mxu0 0
      %359 = vmatprep.subr.bf16.mxu0 0
      %360 = vmatpush2.bf16.msra.mxu0 0
      %361 = vmatprep.subr.bf16.mxu0 0
      %362 = vmatpush2.bf16.msra.mxu0 0
      %363 = vmatprep.subr.bf16.mxu0 0
      %364 = vmatpush2.bf16.msra.mxu0 0
      %365 = vmatprep.subr.bf16.mxu0 0
      %366 = vmatpush2.bf16.msra.mxu0 0
      %367 = vmatprep.subr.bf16.mxu0 0
      %368 = vmatpush2.bf16.msra.mxu0 0
      %369 = vmatprep.subr.bf16.mxu0 0
      %370 = vmatpush2.bf16.msra.mxu0 0
      %371 = vmatprep.subr.bf16.mxu0 0
      %372 = vmatpush2.bf16.msra.mxu0 0
      %373 = vmatprep.mubr.bf16.mxu0 0
      %374 = vmatmul.mubr.bf16.gmra.mxu0 %v339
      %v375 = vpop.f32.mrf.mxu0
      %v376 = vadd.f32 0.0, %v375
      %v377 = vpop.f32.mrf.mxu0
      %v378 = vpop.f32.mrf.mxu0
      %v379 = vadd.f32 0.0, %v378
      %v380 = vpop.f32.mrf.mxu0
      %381 = vdwg.mxu0
      %v382 = vpack.c.bf16 %v379, %v376
      %v384 = vunpack.c.l.b16 %v382
      %v385 = vunpack.c.h.b16 %v382
      %v386 = vpack.c.b16 %v384, %v384
      %v387 = vpack.c.b16 %v385, %v385
      %vm390 = vcmask 125952
      %391 = vst.msk [vmem:[%s246] sm:$0xf] %vm390, %v386
      %392 = vst.msk [vmem:[%s246 + $0x4] sm:$0xf] %vm390, %v387
      %v393 = vmul.f32 %v376, %v376
      %v394 = vmul.f32 %v379, %v379
      %vm395 = vcmask 130048
      %v396 = vsel %vm395, %v393, 0.0
      %v397 = vsel %vm395, %v394, 0.0
      %v398 = vadd.f32 %v396, %v397
      %v399 = vrot.slane %v398, 4
      %v400 = vadd.f32 %v398, %v399
      %v401 = vrot.slane %v400, 2
      %v402 = vadd.f32 %v400, %v401
      %v403 = vrot.slane %v402, 1
      %v404 = vadd.f32 %v402, %v403
      %v405 = vadd.f32 %v404, 0.0
      %v406 = vld [vmem:[%s2] sm:$0xf]
      %v407 = vld [vmem:[%s2 + $0x4] sm:$0xf]
      %v408 = vld [vmem:[%s2 + $0x8] sm:$0xf]
      %v409 = vld [vmem:[%s2 + $0xc] sm:$0xf]
      %v414 = vunpack.c.l.b16 %v406
      %v415 = vunpack.c.l.b16 %v407
      %v416 = vunpack.c.l.b16 %v408
      %v417 = vunpack.c.l.b16 %v409
      %v418 = vpack.c.b16 %v415, %v414
      %v419 = vpack.c.b16 %v417, %v416
      %v423 = vsel %vm286, %v320, 0
      %425 = vmatprep.subr.bf16.mxu0 0
      %426 = vmatpush1.bf16.msra.mxu0 0
      %427 = vmatprep.subr.bf16.mxu0 0
      %428 = vmatpush1.bf16.msra.mxu0 0
      %429 = vmatprep.subr.bf16.mxu0 0
      %430 = vmatpush1.bf16.msra.mxu0 0
      %431 = vmatprep.subr.bf16.mxu0 0
      %432 = vmatpush1.bf16.msra.mxu0 0
      %433 = vmatprep.subr.bf16.mxu0 0
      %434 = vmatpush1.bf16.msra.mxu0 0
      %435 = vmatprep.subr.bf16.mxu0 0
      %436 = vmatpush1.bf16.msra.mxu0 0
      %437 = vmatprep.subr.bf16.mxu0 0
      %438 = vmatpush1.bf16.msra.mxu0 %v419
      %439 = vmatprep.subr.bf16.mxu0 0
      %440 = vmatpush1.bf16.msra.mxu0 %v418
      %441 = vmatprep.subr.bf16.mxu0 0
      %442 = vmatpush2.bf16.msra.mxu0 0
      %443 = vmatprep.subr.bf16.mxu0 0
      %444 = vmatpush2.bf16.msra.mxu0 0
      %445 = vmatprep.subr.bf16.mxu0 0
      %446 = vmatpush2.bf16.msra.mxu0 0
      %447 = vmatprep.subr.bf16.mxu0 0
      %448 = vmatpush2.bf16.msra.mxu0 0
      %449 = vmatprep.subr.bf16.mxu0 0
      %450 = vmatpush2.bf16.msra.mxu0 0
      %451 = vmatprep.subr.bf16.mxu0 0
      %452 = vmatpush2.bf16.msra.mxu0 0
      %453 = vmatprep.subr.bf16.mxu0 0
      %454 = vmatpush2.bf16.msra.mxu0 0
      %455 = vmatprep.subr.bf16.mxu0 0
      %456 = vmatpush2.bf16.msra.mxu0 0
      %457 = vmatprep.mubr.bf16.mxu0 0
      %458 = vmatmul.mubr.bf16.gmra.mxu0 %v423
      %v459 = vpop.f32.mrf.mxu0
      %v460 = vadd.f32 0.0, %v459
      %v461 = vpop.f32.mrf.mxu0
      %v462 = vpop.f32.mrf.mxu0
      %v463 = vadd.f32 0.0, %v462
      %v464 = vpop.f32.mrf.mxu0
      %465 = vdwg.mxu0
      %v466 = vpack.c.bf16 %v463, %v460
      %v468 = vunpack.c.l.b16 %v466
      %v469 = vunpack.c.h.b16 %v466
      %v470 = vpack.c.b16 %v468, %v468
      %v471 = vpack.c.b16 %v469, %v469
      %s474 = scalar_lea.vmem %s246, 8
      %475 = vst.msk [vmem:[%s474] sm:$0xf] %vm390, %v470
      %476 = vst.msk [vmem:[%s474 + $0x4] sm:$0xf] %vm390, %v471
      %v477 = vmul.f32 %v460, %v460
      %v478 = vmul.f32 %v463, %v463
      %v479 = vsel %vm395, %v477, 0.0
      %v480 = vsel %vm395, %v478, 0.0
      %v481 = vadd.f32 %v479, %v480
      %v482 = vrot.slane %v481, 4
      %v483 = vadd.f32 %v481, %v482
      %v484 = vrot.slane %v483, 2
      %v485 = vadd.f32 %v483, %v484
      %v486 = vrot.slane %v485, 1
      %v487 = vadd.f32 %v485, %v486
      %v488 = vadd.f32 %v405, %v487
      %v489 = vld [vmem:[%s2] sm:$0xf]
      %v490 = vld [vmem:[%s2 + $0x4] sm:$0xf]
      %v491 = vld [vmem:[%s2 + $0x8] sm:$0xf]
      %v492 = vld [vmem:[%s2 + $0xc] sm:$0xf]
      %v497 = vunpack.c.l.b16 %v489
      %v498 = vunpack.c.l.b16 %v490
      %v499 = vunpack.c.l.b16 %v491
      %v500 = vunpack.c.l.b16 %v492
      %v501 = vpack.c.b16 %v498, %v497
      %v502 = vpack.c.b16 %v500, %v499
      %v506 = vsel %vm286, %v321, 0
      %508 = vmatprep.subr.bf16.mxu0 0
      %509 = vmatpush1.bf16.msra.mxu0 0
      %510 = vmatprep.subr.bf16.mxu0 0
      %511 = vmatpush1.bf16.msra.mxu0 0
      %512 = vmatprep.subr.bf16.mxu0 0
      %513 = vmatpush1.bf16.msra.mxu0 0
      %514 = vmatprep.subr.bf16.mxu0 0
      %515 = vmatpush1.bf16.msra.mxu0 0
      %516 = vmatprep.subr.bf16.mxu0 0
      %517 = vmatpush1.bf16.msra.mxu0 0
      %518 = vmatprep.subr.bf16.mxu0 0
      %519 = vmatpush1.bf16.msra.mxu0 0
      %520 = vmatprep.subr.bf16.mxu0 0
      %521 = vmatpush1.bf16.msra.mxu0 %v502
      %522 = vmatprep.subr.bf16.mxu0 0
      %523 = vmatpush1.bf16.msra.mxu0 %v501
      %524 = vmatprep.subr.bf16.mxu0 0
      %525 = vmatpush2.bf16.msra.mxu0 0
      %526 = vmatprep.subr.bf16.mxu0 0
      %527 = vmatpush2.bf16.msra.mxu0 0
      %528 = vmatprep.subr.bf16.mxu0 0
      %529 = vmatpush2.bf16.msra.mxu0 0
      %530 = vmatprep.subr.bf16.mxu0 0
      %531 = vmatpush2.bf16.msra.mxu0 0
      %532 = vmatprep.subr.bf16.mxu0 0
      %533 = vmatpush2.bf16.msra.mxu0 0
      %534 = vmatprep.subr.bf16.mxu0 0
      %535 = vmatpush2.bf16.msra.mxu0 0
      %536 = vmatprep.subr.bf16.mxu0 0
      %537 = vmatpush2.bf16.msra.mxu0 0
      %538 = vmatprep.subr.bf16.mxu0 0
      %539 = vmatpush2.bf16.msra.mxu0 0
      %540 = vmatprep.mubr.bf16.mxu0 0
      %541 = vmatmul.mubr.bf16.gmra.mxu0 %v506
      %v542 = vpop.f32.mrf.mxu0
      %v543 = vadd.f32 0.0, %v542
      %v544 = vpop.f32.mrf.mxu0
      %v545 = vpop.f32.mrf.mxu0
      %v546 = vadd.f32 0.0, %v545
      %v547 = vpop.f32.mrf.mxu0
      %548 = vdwg.mxu0
      %v549 = vpack.c.bf16 %v546, %v543
      %v551 = vunpack.c.l.b16 %v549
      %v552 = vunpack.c.h.b16 %v549
      %v553 = vpack.c.b16 %v551, %v551
      %v554 = vpack.c.b16 %v552, %v552
      %s557 = scalar_lea.vmem %s246, 16
      %558 = vst.msk [vmem:[%s557] sm:$0xf] %vm390, %v553
      %559 = vst.msk [vmem:[%s557 + $0x4] sm:$0xf] %vm390, %v554
      %v560 = vmul.f32 %v543, %v543
      %v561 = vmul.f32 %v546, %v546
      %v562 = vsel %vm395, %v560, 0.0
      %v563 = vsel %vm395, %v561, 0.0
      %v564 = vadd.f32 %v562, %v563
      %v565 = vrot.slane %v564, 4
      %v566 = vadd.f32 %v564, %v565
      %v567 = vrot.slane %v566, 2
      %v568 = vadd.f32 %v566, %v567
      %v569 = vrot.slane %v568, 1
      %v570 = vadd.f32 %v568, %v569
      %v571 = vadd.f32 %v488, %v570
      %vm572 = vcmask 122880
      %573 = vst.msk [vmem:[%s253] sm:$0x1] %vm572, %v571
      %s574 = smul.u32 2, %s21
      %p575 = scmp.lt.s32.totalorder %s20, 1
      %s576 = scalar_select %p575, %s20, 1
      %p577 = scmp.lt.s32.totalorder %s574, 1
      %s578 = scalar_select %p577, %s574, 1
      %s579 = smul.addr %s576, 6
      %s580 = sadd.s32 %s578, %s579
      %s581 = smul.addr %s580, 4
      %s582 = scalar_lea.vmem %s3, %s581
      %p583 = scmp.lt.s32.totalorder %s20, 1
      %s584 = scalar_select %p583, %s20, 1
      %p585 = scmp.lt.s32.totalorder %s21, 0
      %s586 = scalar_select %p585, %s21, 0
      %s587 = sadd.s32 %s586, %s584
      %s588 = scalar_lea.vmem %s4, %s587
      // Predicated region
      $region33: #{pointnet_fp_q_forward.6} parent=31 // pred_check
        %p589 = pneg %p118
      $region34: #{pointnet_fp_q_forward.6} parent=31 // pred_check_branch
        %591 = sbr.rel (%p589) target = $region36
      $region35: #{pointnet_fp_q_forward.6} parent=31 // pred_region
        %s592 = smul.u32 2, %s21
      $region36: #{pointnet_fp_q_forward.6} parent=31 // pred_fallthru
        _
      // Predicated region
      $region37: #{pointnet_fp_q_forward.6} parent=31 // pred_check
        %p593 = pneg %p146
      $region38: #{pointnet_fp_q_forward.6} parent=31 // pred_check_branch
        %595 = sbr.rel (%p593) target = $region40
      $region39: #{pointnet_fp_q_forward.6} parent=31 // pred_region
        _
      $region40: #{pointnet_fp_q_forward.6} parent=31 // pred_fallthru
        _
    $region32: #{pointnet_fp_q_forward.6} parent=5 // pred_fallthru
      _
    %p596 = scmp.le.s32.totalorder 2, %s11
    // Predicated region
    $region41: #{pointnet_fp_q_forward.6} parent=5 // pred_check
      %p597 = pneg %p596
    $region42: #{pointnet_fp_q_forward.6} parent=5 // pred_check_branch
      %599 = sbr.rel (%p597) target = $region44
    $region43: #{pointnet_fp_q_forward.6} parent=5 // pred_region
      %s600 = ssub.s32 %s11, 2
      // Predicated region
      $region45: #{pointnet_fp_q_forward.6} parent=43 // pred_check
        %p601 = pneg %p124
      $region46: #{pointnet_fp_q_forward.6} parent=43 // pred_check_branch
        %603 = sbr.rel (%p601) target = $region48
      $region47: #{pointnet_fp_q_forward.6} parent=43 // pred_region
        %s604 = smul.u32 2, %s23
        %p605 = scmp.lt.s32.totalorder %s22, 1
        %s606 = scalar_select %p605, %s22, 1
        %p607 = scmp.lt.s32.totalorder %s604, 1
        %s608 = scalar_select %p607, %s604, 1
        %s609 = smul.addr %s606, 6
        %s610 = sadd.s32 %s608, %s609
        %s611 = smul.addr %s610, 4
        %s612 = scalar_lea.vmem %s3, %s611
      $region48: #{pointnet_fp_q_forward.6} parent=43 // pred_fallthru
        _
      // Predicated region
      $region49: #{pointnet_fp_q_forward.6} parent=43 // pred_check
        %p613 = pneg %p152
      $region50: #{pointnet_fp_q_forward.6} parent=43 // pred_check_branch
        %615 = sbr.rel (%p613) target = $region52
      $region51: #{pointnet_fp_q_forward.6} parent=43 // pred_region
        %p616 = scmp.lt.s32.totalorder %s22, 1
        %s617 = scalar_select %p616, %s22, 1
        %p618 = scmp.lt.s32.totalorder %s23, 0
        %s619 = scalar_select %p618, %s23, 0
        %s620 = sadd.s32 %s619, %s617
        %s621 = scalar_lea.vmem %s4, %s620
      $region52: #{pointnet_fp_q_forward.6} parent=43 // pred_fallthru
        _
    $region44: #{pointnet_fp_q_forward.6} parent=5 // pred_fallthru
      _
  $region6: #{pointnet_fp_q_forward.6} parent=0 // loop_footer
    %s15 = sadd.s32 1, %s11
  $region7: #{pointnet_fp_q_forward.6} parent=0 // loop_footer_branch
    %10 = sbr.rel target = $region3
  $region8: #{pointnet_fp_q_forward.6} parent=0 // loop_exit
    _

// kernel: pointnet_fp_q_forward.5
$region0: #{pointnet_fp_q_forward.5}
  #allocation0 [shape = 'u32[]', space=smem, size = 0x4, offset = 0x4, fixed_abs, tag = 'smem constant byte address 0x4 - core index']
  #allocation1 [shape = 'u32[144,128]{1,0:T(1,128)}', space=vmem, size = 0x12000, scoped, tag = 'internal scratch']
  %s0 = inlined_call_operand.vmem [shape: bf16[2,3,16,4], index: 0, kind: input, shape index: {}]
  %s1 = inlined_call_operand.vmem [shape: bf16[2,3,16,8], index: 1, kind: input, shape index: {}]
  %s2 = inlined_call_operand.vmem [shape: bf16[4,32], index: 2, kind: input, shape index: {}]
  %s3 = inlined_call_operand.vmem [shape: bf16[8,32], index: 3, kind: input, shape index: {}]
  %s4 = inlined_call_operand.vmem [shape: bf16[2,3,16,32], index: 4, kind: output, shape index: {0}]
  %s5 = inlined_call_operand.vmem [shape: f32[2,1,1,32], index: 5, kind: output, shape index: {1}]
  %6 = xla_tuple %s4, %s5
  %s7 = sld [smem:[#allocation0]]
  $region57: #{pointnet_fp_q_forward.5} parent=0
    _
  %s9 = ssub.s32 1, %s7
  %s10 = scalar_select 0, %s9, %s7
  loop: start=0, step=1, limit=4
  $region2: #{pointnet_fp_q_forward.5} parent=0 // loop_pre_header
    _
  $region3: #{pointnet_fp_q_forward.5} parent=0 // loop_header
    %s12 = sphi 0, %s16
    %p13 = scmp.ge.s32.totalorder %s12, 4
    %s19 = sphi 0, %s31
    %s20 = sphi 0, %s27
    %s21 = sphi 0, %s19
    %s22 = sphi 0, %s20
    %s23 = sphi 0, %s21
    %s24 = sphi 0, %s22
    %s36 = sphi 0, %s38
    %s39 = sphi 0, %s36
    %s40 = sphi 0, %s39
    %s56 = sphi 0, %s40
    %s64 = sphi 0, %s66
    %s67 = sphi 0, %s64
    %s68 = sphi 0, %s67
    %s84 = sphi 0, %s68
    %s88 = sphi 0, %s88
    %s90 = sphi 0, %s88
    %s91 = sphi 0, %s90
    %s105 = sphi 0, %s91
    %s109 = sphi 0, %s109
    %s111 = sphi 0, %s109
    %s112 = sphi 0, %s111
    %s126 = sphi 0, %s112
    %s134 = sphi 0, %s136
    %s137 = sphi 0, %s134
    %s138 = sphi 0, %s137
    %s154 = sphi 0, %s138
    %s162 = sphi 0, %s164
    %s165 = sphi 0, %s162
    %s166 = sphi 0, %s165
    %s182 = sphi 0, %s166
  $region4: #{pointnet_fp_q_forward.5} parent=0 // loop_header_branch
    %15 = sbr.rel (%p13) target = $region8
  $region5: #{pointnet_fp_q_forward.5} parent=0 // loop_body
    %s17 = ssub.s32 %s12, 1
    %s18 = ssub.s32 %s12, 2
    %s25 = sadd.s32 1, %s20
    %p26 = scmp.ge.s32.totalorder %s25, 1
    %s27 = scalar_select %p26, 0, %s25
    %s28 = sadd.s32 1, %s19
    %s29 = scalar_select %p26, %s28, %s19
    %p30 = scmp.ge.s32.totalorder %s29, 2
    %s31 = scalar_select %p30, 0, %s29
    %s32 = ssub.s32 %s19, %s31
    %s33 = ssub.s32 %s20, %s27
    %s34 = sor.u32 %s32, %s33
    %p35 = scmp.eq.s32.totalorder %s34, 0
    %s37 = sadd.s32 %s36, 1
    %s38 = scalar_select %p35, %s36, %s37
    %p41 = pneg %p35
    %p42 = scmp.eq.s32.totalorder %s12, 1
    %p43 = por %p41, %p42
    %p44 = scmp.ne.s32.totalorder %s36, %s39
    %p45 = scmp.eq.s32.totalorder %s12, 0
    %p46 = por %p44, %p45
    %p47 = scmp.ne.s32.totalorder %s36, %s39
    %p48 = scmp.eq.s32.totalorder %s17, 1
    %p49 = por %p47, %p48
    %p50 = scmp.ne.s32.totalorder %s39, %s40
    %p51 = scmp.eq.s32.totalorder %s17, 0
    %p52 = por %p50, %p51
    %p53 = scmp.ne.s32.totalorder %s39, %s40
    %p54 = scmp.eq.s32.totalorder %s18, 1
    %p55 = por %p53, %p54
    %p57 = scmp.ne.s32.totalorder %s40, %s56
    %p58 = scmp.eq.s32.totalorder %s18, 0
    %p59 = por %p57, %p58
    %s60 = ssub.s32 %s19, %s31
    %s61 = ssub.s32 %s20, %s27
    %s62 = sor.u32 %s60, %s61
    %p63 = scmp.eq.s32.totalorder %s62, 0
    %s65 = sadd.s32 %s64, 1
    %s66 = scalar_select %p63, %s64, %s65
    %p69 = pneg %p63
    %p70 = scmp.eq.s32.totalorder %s12, 1
    %p71 = por %p69, %p70
    %p72 = scmp.ne.s32.totalorder %s64, %s67
    %p73 = scmp.eq.s32.totalorder %s12, 0
    %p74 = por %p72, %p73
    %p75 = scmp.ne.s32.totalorder %s64, %s67
    %p76 = scmp.eq.s32.totalorder %s17, 1
    %p77 = por %p75, %p76
    %p78 = scmp.ne.s32.totalorder %s67, %s68
    %p79 = scmp.eq.s32.totalorder %s17, 0
    %p80 = por %p78, %p79
    %p81 = scmp.ne.s32.totalorder %s67, %s68
    %p82 = scmp.eq.s32.totalorder %s18, 1
    %p83 = por %p81, %p82
    %p85 = scmp.ne.s32.totalorder %s68, %s84
    %p86 = scmp.eq.s32.totalorder %s18, 0
    %p87 = por %p85, %p86
    %s89 = sadd.s32 %s88, 1
    %p92 = scmp.eq.s32.totalorder %s12, 1
    %p93 = scmp.ne.s32.totalorder %s88, %s90
    %p94 = scmp.eq.s32.totalorder %s12, 0
    %p95 = por %p93, %p94
    %p96 = scmp.ne.s32.totalorder %s88, %s90
    %p97 = scmp.eq.s32.totalorder %s17, 1
    %p98 = por %p96, %p97
    %p99 = scmp.ne.s32.totalorder %s90, %s91
    %p100 = scmp.eq.s32.totalorder %s17, 0
    %p101 = por %p99, %p100
    %p102 = scmp.ne.s32.totalorder %s90, %s91
    %p103 = scmp.eq.s32.totalorder %s18, 1
    %p104 = por %p102, %p103
    %p106 = scmp.ne.s32.totalorder %s91, %s105
    %p107 = scmp.eq.s32.totalorder %s18, 0
    %p108 = por %p106, %p107
    %s110 = sadd.s32 %s109, 1
    %p113 = scmp.eq.s32.totalorder %s12, 1
    %p114 = scmp.ne.s32.totalorder %s109, %s111
    %p115 = scmp.eq.s32.totalorder %s12, 0
    %p116 = por %p114, %p115
    %p117 = scmp.ne.s32.totalorder %s109, %s111
    %p118 = scmp.eq.s32.totalorder %s17, 1
    %p119 = por %p117, %p118
    %p120 = scmp.ne.s32.totalorder %s111, %s112
    %p121 = scmp.eq.s32.totalorder %s17, 0
    %p122 = por %p120, %p121
    %p123 = scmp.ne.s32.totalorder %s111, %s112
    %p124 = scmp.eq.s32.totalorder %s18, 1
    %p125 = por %p123, %p124
    %p127 = scmp.ne.s32.totalorder %s112, %s126
    %p128 = scmp.eq.s32.totalorder %s18, 0
    %p129 = por %p127, %p128
    %s130 = ssub.s32 %s19, %s31
    %s131 = ssub.s32 %s20, %s27
    %s132 = sor.u32 %s130, %s131
    %p133 = scmp.eq.s32.totalorder %s132, 0
    %s135 = sadd.s32 %s134, 1
    %s136 = scalar_select %p133, %s134, %s135
    %p139 = pneg %p133
    %p140 = scmp.eq.s32.totalorder %s12, 1
    %p141 = por %p139, %p140
    %p142 = scmp.ne.s32.totalorder %s134, %s137
    %p143 = scmp.eq.s32.totalorder %s12, 0
    %p144 = por %p142, %p143
    %p145 = scmp.ne.s32.totalorder %s134, %s137
    %p146 = scmp.eq.s32.totalorder %s17, 1
    %p147 = por %p145, %p146
    %p148 = scmp.ne.s32.totalorder %s137, %s138
    %p149 = scmp.eq.s32.totalorder %s17, 0
    %p150 = por %p148, %p149
    %p151 = scmp.ne.s32.totalorder %s137, %s138
    %p152 = scmp.eq.s32.totalorder %s18, 1
    %p153 = por %p151, %p152
    %p155 = scmp.ne.s32.totalorder %s138, %s154
    %p156 = scmp.eq.s32.totalorder %s18, 0
    %p157 = por %p155, %p156
    %s158 = ssub.s32 %s19, %s31
    %s159 = ssub.s32 %s20, %s27
    %s160 = sor.u32 %s158, %s159
    %p161 = scmp.eq.s32.totalorder %s160, 0
    %s163 = sadd.s32 %s162, 1
    %s164 = scalar_select %p161, %s162, %s163
    %p167 = pneg %p161
    %p168 = scmp.eq.s32.totalorder %s12, 1
    %p169 = por %p167, %p168
    %p170 = scmp.ne.s32.totalorder %s162, %s165
    %p171 = scmp.eq.s32.totalorder %s12, 0
    %p172 = por %p170, %p171
    %p173 = scmp.ne.s32.totalorder %s162, %s165
    %p174 = scmp.eq.s32.totalorder %s17, 1
    %p175 = por %p173, %p174
    %p176 = scmp.ne.s32.totalorder %s165, %s166
    %p177 = scmp.eq.s32.totalorder %s17, 0
    %p178 = por %p176, %p177
    %p179 = scmp.ne.s32.totalorder %s165, %s166
    %p180 = scmp.eq.s32.totalorder %s18, 1
    %p181 = por %p179, %p180
    %p183 = scmp.ne.s32.totalorder %s166, %s182
    %p184 = scmp.eq.s32.totalorder %s18, 0
    %p185 = por %p183, %p184
    %p186 = scmp.le.s32.totalorder 1, %s12
    %p187 = scmp.lt.s32.totalorder %s12, 3
    %p188 = pnand %p186, %p187
    %p189 = pneg %p188
    // Predicated region
    $region9: #{pointnet_fp_q_forward.5} parent=5 // pred_check
      _
    $region10: #{pointnet_fp_q_forward.5} parent=5 // pred_check_branch
      %191 = sbr.rel (%p188) target = $region12
    $region11: #{pointnet_fp_q_forward.5} parent=5 // pred_region
      %s192 = ssub.s32 %s12, 1
      // Predicated region
      $region13: #{pointnet_fp_q_forward.5} parent=11 // pred_check
        %p193 = pneg %p101
      $region14: #{pointnet_fp_q_forward.5} parent=11 // pred_check_branch
        %195 = sbr.rel (%p193) target = $region16
      $region15: #{pointnet_fp_q_forward.5} parent=11 // pred_region
        _
      $region16: #{pointnet_fp_q_forward.5} parent=11 // pred_fallthru
        _
      // Predicated region
      $region17: #{pointnet_fp_q_forward.5} parent=11 // pred_check
        %p196 = pneg %p122
      $region18: #{pointnet_fp_q_forward.5} parent=11 // pred_check_branch
        %198 = sbr.rel (%p196) target = $region20
      $region19: #{pointnet_fp_q_forward.5} parent=11 // pred_region
        _
      $region20: #{pointnet_fp_q_forward.5} parent=11 // pred_fallthru
        _
    $region12: #{pointnet_fp_q_forward.5} parent=5 // pred_fallthru
      _
    %p199 = scmp.lt.s32.totalorder %s12, 2
    // Predicated region
    $region21: #{pointnet_fp_q_forward.5} parent=5 // pred_check
      %p200 = pneg %p199
    $region22: #{pointnet_fp_q_forward.5} parent=5 // pred_check_branch
      %202 = sbr.rel (%p200) target = $region24
    $region23: #{pointnet_fp_q_forward.5} parent=5 // pred_region
      // Predicated region
      $region25: #{pointnet_fp_q_forward.5} parent=23 // pred_check
        %p203 = pneg %p46
      $region26: #{pointnet_fp_q_forward.5} parent=23 // pred_check_branch
        %205 = sbr.rel (%p203) target = $region28
      $region27: #{pointnet_fp_q_forward.5} parent=23 // pred_region
        %s206 = smul.u32 2, %s20
        %p207 = scmp.lt.s32.totalorder %s19, 1
        %s208 = scalar_select %p207, %s19, 1
        %p209 = scmp.lt.s32.totalorder %s206, 1
        %s210 = scalar_select %p209, %s206, 1
        %s211 = smul.addr %s208, 6
        %s212 = sadd.s32 %s210, %s211
        %s213 = smul.addr %s212, 4
        %s214 = scalar_lea.vmem %s0, %s213
        %s215 = smul.u32 2, %s20
      $region28: #{pointnet_fp_q_forward.5} parent=23 // pred_fallthru
        _
      // Predicated region
      $region29: #{pointnet_fp_q_forward.5} parent=23 // pred_check
        %p216 = pneg %p74
      $region30: #{pointnet_fp_q_forward.5} parent=23 // pred_check_branch
        %218 = sbr.rel (%p216) target = $region32
      $region31: #{pointnet_fp_q_forward.5} parent=23 // pred_region
        %s219 = smul.u32 2, %s20
        %p220 = scmp.lt.s32.totalorder %s19, 1
        %s221 = scalar_select %p220, %s19, 1
        %p222 = scmp.lt.s32.totalorder %s219, 1
        %s223 = scalar_select %p222, %s219, 1
        %s224 = smul.addr %s221, 6
        %s225 = sadd.s32 %s223, %s224
        %s226 = smul.addr %s225, 4
        %s227 = scalar_lea.vmem %s1, %s226
        %s228 = smul.u32 2, %s20
      $region32: #{pointnet_fp_q_forward.5} parent=23 // pred_fallthru
        _
    $region24: #{pointnet_fp_q_forward.5} parent=5 // pred_fallthru
      _
    %p229 = scmp.le.s32.totalorder 1, %s12
    %p230 = scmp.lt.s32.totalorder %s12, 3
    %p231 = pnand %p229, %p230
    %p232 = pneg %p231
    // Predicated region
    $region33: #{pointnet_fp_q_forward.5} parent=5 // pred_check
      _
    $region34: #{pointnet_fp_q_forward.5} parent=5 // pred_check_branch
      %234 = sbr.rel (%p231) target = $region36
    $region35: #{pointnet_fp_q_forward.5} parent=5 // pred_region
      %s235 = ssub.s32 %s12, 1
      %s236 = smul.u32 2, %s22
      %p237 = scmp.lt.s32.totalorder %s21, 1
      %s238 = scalar_select %p237, %s21, 1
      %p239 = scmp.lt.s32.totalorder %s236, 1
      %s240 = scalar_select %p239, %s236, 1
      %s241 = smul.addr %s238, 6
      %s242 = sadd.s32 %s240, %s241
      %s243 = smul.addr %s242, 4
      %s244 = scalar_lea.vmem %s0, %s243
      %p245 = pneg %p52
      %p246 = pneg %p49
      %s247 = smul.u32 2, %s22
      %p248 = scmp.lt.s32.totalorder %s21, 1
      %s249 = scalar_select %p248, %s21, 1
      %p250 = scmp.lt.s32.totalorder %s247, 1
      %s251 = scalar_select %p250, %s247, 1
      %s252 = smul.addr %s249, 6
      %s253 = sadd.s32 %s251, %s252
      %s254 = smul.addr %s253, 4
      %s255 = scalar_lea.vmem %s1, %s254
      %p256 = pneg %p80
      %p257 = pneg %p77
      %p258 = pneg %p101
      %p259 = pneg %p98
      %p260 = pneg %p122
      %p261 = pneg %p119
      %p262 = pneg %p150
      %p263 = pneg %p147
      %s264 = smul.u32 2, %s22
      %p265 = scmp.lt.s32.totalorder %s21, 1
      %s266 = scalar_select %p265, %s21, 1
      %p267 = scmp.lt.s32.totalorder %s264, 1
      %s268 = scalar_select %p267, %s264, 1
      %s269 = smul.addr %s266, 6
      %s270 = sadd.s32 %s268, %s269
      %s271 = smul.addr %s270, 4
      %s272 = scalar_lea.vmem %s4, %s271
      %p273 = pneg %p178
      %p274 = pneg %p175
      %p275 = scmp.lt.s32.totalorder %s21, 1
      %s276 = scalar_select %p275, %s21, 1
      %p277 = scmp.lt.s32.totalorder %s22, 0
      %s278 = scalar_select %p277, %s22, 0
      %s279 = sadd.s32 %s278, %s276
      %s280 = scalar_lea.vmem %s5, %s279
      %s281 = smul.u32 2, %s22
      %p282 = scmp.lt.s32.totalorder %s21, 1
      %s283 = scalar_select %p282, %s21, 1
      %p284 = scmp.lt.s32.totalorder %s281, 1
      %s285 = scalar_select %p284, %s281, 1
      %s286 = smul.addr %s283, 6
      %s287 = sadd.s32 %s285, %s286
      %s288 = smul.addr %s287, 4
      %s289 = scalar_lea.vmem %s0, %s288
      %s290 = smul.u32 2, %s22
      %s291 = smul.u32 2, %s22
      %p292 = scmp.lt.s32.totalorder %s21, 1
      %s293 = scalar_select %p292, %s21, 1
      %p294 = scmp.lt.s32.totalorder %s291, 1
      %s295 = scalar_select %p294, %s291, 1
      %s296 = smul.addr %s293, 6
      %s297 = sadd.s32 %s295, %s296
      %s298 = smul.addr %s297, 4
      %s299 = scalar_lea.vmem %s1, %s298
      %s300 = smul.u32 2, %s22
      %s301 = smul.u32 2, %s22
      %p302 = scmp.lt.s32.totalorder %s21, 1
      %s303 = scalar_select %p302, %s21, 1
      %p304 = scmp.lt.s32.totalorder %s301, 1
      %s305 = scalar_select %p304, %s301, 1
      %s306 = smul.addr %s303, 6
      %s307 = sadd.s32 %s305, %s306
      %s308 = smul.addr %s307, 4
      %s309 = scalar_lea.vmem %s4, %s308
      %s310 = smul.u32 2, %s22
      %p311 = scmp.lt.s32.totalorder %s21, 1
      %s312 = scalar_select %p311, %s21, 1
      %p313 = scmp.lt.s32.totalorder %s22, 0
      %s314 = scalar_select %p313, %s22, 0
      %s315 = sadd.s32 %s314, %s312
      %s316 = scalar_lea.vmem %s5, %s315
      %v318 = vld [vmem:[%s289] sm:$0xf]
      %v319 = vld [vmem:[%s289 + $0x4] sm:$0xf]
      %v320 = vld [vmem:[%s2] sm:$0x3]
      %v321 = vld [vmem:[%s299] sm:$0xf]
      %v322 = vld [vmem:[%s299 + $0x4] sm:$0xf]
      %v323 = vld [vmem:[%s3] sm:$0xf]
      %v326 = vunpack.c.l.b16 %v321
      %v327 = vunpack.c.l.b16 %v322
      %v328 = vpack.c.b16 %v327, %v326
      %vm329 = vcmask 64512
      %v331 = vsel %vm329, %v328, 0
      %vm333 = vcmask 1043456
      %v335 = vsel %vm333, %v323, 0
      %337 = vmatprep.subr.bf16.mxu0 0
      %338 = vmatpush1.bf16.msra.mxu0 0
      %339 = vmatprep.subr.bf16.mxu0 0
      %340 = vmatpush1.bf16.msra.mxu0 0
      %341 = vmatprep.subr.bf16.mxu0 0
      %342 = vmatpush1.bf16.msra.mxu0 0
      %343 = vmatprep.subr.bf16.mxu0 0
      %344 = vmatpush1.bf16.msra.mxu0 0
      %345 = vmatprep.subr.bf16.mxu0 0
      %346 = vmatpush1.bf16.msra.mxu0 0
      %347 = vmatprep.subr.bf16.mxu0 0
      %348 = vmatpush1.bf16.msra.mxu0 0
      %349 = vmatprep.subr.bf16.mxu0 0
      %350 = vmatpush1.bf16.msra.mxu0 0
      %351 = vmatprep.subr.bf16.mxu0 0
      %352 = vmatpush1.bf16.msra.mxu0 %v335
      %353 = vmatprep.subr.bf16.mxu0 0
      %354 = vmatpush2.bf16.msra.mxu0 0
      %355 = vmatprep.subr.bf16.mxu0 0
      %356 = vmatpush2.bf16.msra.mxu0 0
      %357 = vmatprep.subr.bf16.mxu0 0
      %358 = vmatpush2.bf16.msra.mxu0 0
      %359 = vmatprep.subr.bf16.mxu0 0
      %360 = vmatpush2.bf16.msra.mxu0 0
      %361 = vmatprep.subr.bf16.mxu0 0
      %362 = vmatpush2.bf16.msra.mxu0 0
      %363 = vmatprep.subr.bf16.mxu0 0
      %364 = vmatpush2.bf16.msra.mxu0 0
      %365 = vmatprep.subr.bf16.mxu0 0
      %366 = vmatpush2.bf16.msra.mxu0 0
      %367 = vmatprep.subr.bf16.mxu0 0
      %368 = vmatpush2.bf16.msra.mxu0 0
      %369 = vmatprep.mubr.bf16.mxu0 0
      %370 = vmatmul.mubr.bf16.gmra.mxu0 %v331
      %v371 = vpop.f32.mrf.mxu0
      %v372 = vadd.f32 0.0, %v371
      %v373 = vpop.f32.mrf.mxu0
      %v374 = vpop.f32.mrf.mxu0
      %v375 = vadd.f32 0.0, %v374
      %v376 = vpop.f32.mrf.mxu0
      %377 = vdwg.mxu0
      %v380 = vunpack.c.l.b16 %v318
      %v381 = vunpack.c.l.b16 %v319
      %v382 = vpack.c.b16 %v381, %v380
      %vm383 = vcmask 31744
      %v385 = vsel %vm383, %v382, 0
      %vm387 = vcmask 1041408
      %v389 = vsel %vm387, %v320, 0
      %391 = vmatprep.subr.bf16.mxu0 0
      %392 = vmatpush1.bf16.msra.mxu0 0
      %393 = vmatprep.subr.bf16.mxu0 0
      %394 = vmatpush1.bf16.msra.mxu0 0
      %395 = vmatprep.subr.bf16.mxu0 0
      %396 = vmatpush1.bf16.msra.mxu0 0
      %397 = vmatprep.subr.bf16.mxu0 0
      %398 = vmatpush1.bf16.msra.mxu0 0
      %399 = vmatprep.subr.bf16.mxu0 0
      %400 = vmatpush1.bf16.msra.mxu0 0
      %401 = vmatprep.subr.bf16.mxu0 0
      %402 = vmatpush1.bf16.msra.mxu0 0
      %403 = vmatprep.subr.bf16.mxu0 0
      %404 = vmatpush1.bf16.msra.mxu0 0
      %405 = vmatprep.subr.bf16.mxu0 0
      %406 = vmatpush1.bf16.msra.mxu0 %v389
      %407 = vmatprep.subr.bf16.mxu0 0
      %408 = vmatpush2.bf16.msra.mxu0 0
      %409 = vmatprep.subr.bf16.mxu0 0
      %410 = vmatpush2.bf16.msra.mxu0 0
      %411 = vmatprep.subr.bf16.mxu0 0
      %412 = vmatpush2.bf16.msra.mxu0 0
      %413 = vmatprep.subr.bf16.mxu0 0
      %414 = vmatpush2.bf16.msra.mxu0 0
      %415 = vmatprep.subr.bf16.mxu0 0
      %416 = vmatpush2.bf16.msra.mxu0 0
      %417 = vmatprep.subr.bf16.mxu0 0
      %418 = vmatpush2.bf16.msra.mxu0 0
      %419 = vmatprep.subr.bf16.mxu0 0
      %420 = vmatpush2.bf16.msra.mxu0 0
      %421 = vmatprep.subr.bf16.mxu0 0
      %422 = vmatpush2.bf16.msra.mxu0 0
      %423 = vmatprep.mubr.bf16.mxu0 0
      %424 = vmatmul.mubr.bf16.gmra.mxu0 %v385
      %v425 = vpop.f32.mrf.mxu0
      %v426 = vadd.f32 %v372, %v425
      %v427 = vpop.f32.mrf.mxu0
      %v428 = vpop.f32.mrf.mxu0
      %v429 = vadd.f32 %v375, %v428
      %v430 = vpop.f32.mrf.mxu0
      %431 = vdwg.mxu0
      %v432 = vpack.c.bf16 %v429, %v426
      %v434 = vunpack.c.l.b16 %v432
      %v435 = vunpack.c.h.b16 %v432
      %v436 = vpack.c.b16 %v434, %v434
      %v437 = vpack.c.b16 %v435, %v435
      %vm440 = vcmask 257024
      %441 = vst.msk [vmem:[%s309] sm:$0xf] %vm440, %v436
      %442 = vst.msk [vmem:[%s309 + $0x4] sm:$0xf] %vm440, %v437
      %v443 = vmul.f32 %v426, %v426
      %v444 = vmul.f32 %v429, %v429
      %vm445 = vcmask 261120
      %v446 = vsel %vm445, %v443, 0.0
      %v447 = vsel %vm445, %v444, 0.0
      %v448 = vadd.f32 %v446, %v447
      %v449 = vrot.slane %v448, 4
      %v450 = vadd.f32 %v448, %v449
      %v451 = vrot.slane %v450, 2
      %v452 = vadd.f32 %v450, %v451
      %v453 = vrot.slane %v452, 1
      %v454 = vadd.f32 %v452, %v453
      %v455 = vadd.f32 %v454, 0.0
      %s456 = scalar_lea.vmem %s289, 8
      %v457 = vld [vmem:[%s456] sm:$0xf]
      %v458 = vld [vmem:[%s456 + $0x4] sm:$0xf]
      %v459 = vld [vmem:[%s2] sm:$0x3]
      %s460 = scalar_lea.vmem %s299, 8
      %v461 = vld [vmem:[%s460] sm:$0xf]
      %v462 = vld [vmem:[%s460 + $0x4] sm:$0xf]
      %v463 = vld [vmem:[%s3] sm:$0xf]
      %v466 = vunpack.c.l.b16 %v461
      %v467 = vunpack.c.l.b16 %v462
      %v468 = vpack.c.b16 %v467, %v466
      %v470 = vsel %vm329, %v468, 0
      %v473 = vsel %vm333, %v463, 0
      %475 = vmatprep.subr.bf16.mxu0 0
      %476 = vmatpush1.bf16.msra.mxu0 0
      %477 = vmatprep.subr.bf16.mxu0 0
      %478 = vmatpush1.bf16.msra.mxu0 0
      %479 = vmatprep.subr.bf16.mxu0 0
      %480 = vmatpush1.bf16.msra.mxu0 0
      %481 = vmatprep.subr.bf16.mxu0 0
      %482 = vmatpush1.bf16.msra.mxu0 0
      %483 = vmatprep.subr.bf16.mxu0 0
      %484 = vmatpush1.bf16.msra.mxu0 0
      %485 = vmatprep.subr.bf16.mxu0 0
      %486 = vmatpush1.bf16.msra.mxu0 0
      %487 = vmatprep.subr.bf16.mxu0 0
      %488 = vmatpush1.bf16.msra.mxu0 0
      %489 = vmatprep.subr.bf16.mxu0 0
      %490 = vmatpush1.bf16.msra.mxu0 %v473
      %491 = vmatprep.subr.bf16.mxu0 0
      %492 = vmatpush2.bf16.msra.mxu0 0
      %493 = vmatprep.subr.bf16.mxu0 0
      %494 = vmatpush2.bf16.msra.mxu0 0
      %495 = vmatprep.subr.bf16.mxu0 0
      %496 = vmatpush2.bf16.msra.mxu0 0
      %497 = vmatprep.subr.bf16.mxu0 0
      %498 = vmatpush2.bf16.msra.mxu0 0
      %499 = vmatprep.subr.bf16.mxu0 0
      %500 = vmatpush2.bf16.msra.mxu0 0
      %501 = vmatprep.subr.bf16.mxu0 0
      %502 = vmatpush2.bf16.msra.mxu0 0
      %503 = vmatprep.subr.bf16.mxu0 0
      %504 = vmatpush2.bf16.msra.mxu0 0
      %505 = vmatprep.subr.bf16.mxu0 0
      %506 = vmatpush2.bf16.msra.mxu0 0
      %507 = vmatprep.mubr.bf16.mxu0 0
      %508 = vmatmul.mubr.bf16.gmra.mxu0 %v470
      %v509 = vpop.f32.mrf.mxu0
      %v510 = vadd.f32 0.0, %v509
      %v511 = vpop.f32.mrf.mxu0
      %v512 = vpop.f32.mrf.mxu0
      %v513 = vadd.f32 0.0, %v512
      %v514 = vpop.f32.mrf.mxu0
      %515 = vdwg.mxu0
      %v518 = vunpack.c.l.b16 %v457
      %v519 = vunpack.c.l.b16 %v458
      %v520 = vpack.c.b16 %v519, %v518
      %v522 = vsel %vm383, %v520, 0
      %v525 = vsel %vm387, %v459, 0
      %527 = vmatprep.subr.bf16.mxu0 0
      %528 = vmatpush1.bf16.msra.mxu0 0
      %529 = vmatprep.subr.bf16.mxu0 0
      %530 = vmatpush1.bf16.msra.mxu0 0
      %531 = vmatprep.subr.bf16.mxu0 0
      %532 = vmatpush1.bf16.msra.mxu0 0
      %533 = vmatprep.subr.bf16.mxu0 0
      %534 = vmatpush1.bf16.msra.mxu0 0
      %535 = vmatprep.subr.bf16.mxu0 0
      %536 = vmatpush1.bf16.msra.mxu0 0
      %537 = vmatprep.subr.bf16.mxu0 0
      %538 = vmatpush1.bf16.msra.mxu0 0
      %539 = vmatprep.subr.bf16.mxu0 0
      %540 = vmatpush1.bf16.msra.mxu0 0
      %541 = vmatprep.subr.bf16.mxu0 0
      %542 = vmatpush1.bf16.msra.mxu0 %v525
      %543 = vmatprep.subr.bf16.mxu0 0
      %544 = vmatpush2.bf16.msra.mxu0 0
      %545 = vmatprep.subr.bf16.mxu0 0
      %546 = vmatpush2.bf16.msra.mxu0 0
      %547 = vmatprep.subr.bf16.mxu0 0
      %548 = vmatpush2.bf16.msra.mxu0 0
      %549 = vmatprep.subr.bf16.mxu0 0
      %550 = vmatpush2.bf16.msra.mxu0 0
      %551 = vmatprep.subr.bf16.mxu0 0
      %552 = vmatpush2.bf16.msra.mxu0 0
      %553 = vmatprep.subr.bf16.mxu0 0
      %554 = vmatpush2.bf16.msra.mxu0 0
      %555 = vmatprep.subr.bf16.mxu0 0
      %556 = vmatpush2.bf16.msra.mxu0 0
      %557 = vmatprep.subr.bf16.mxu0 0
      %558 = vmatpush2.bf16.msra.mxu0 0
      %559 = vmatprep.mubr.bf16.mxu0 0
      %560 = vmatmul.mubr.bf16.gmra.mxu0 %v522
      %v561 = vpop.f32.mrf.mxu0
      %v562 = vadd.f32 %v510, %v561
      %v563 = vpop.f32.mrf.mxu0
      %v564 = vpop.f32.mrf.mxu0
      %v565 = vadd.f32 %v513, %v564
      %v566 = vpop.f32.mrf.mxu0
      %567 = vdwg.mxu0
      %v568 = vpack.c.bf16 %v565, %v562
      %v570 = vunpack.c.l.b16 %v568
      %v571 = vunpack.c.h.b16 %v568
      %v572 = vpack.c.b16 %v570, %v570
      %v573 = vpack.c.b16 %v571, %v571
      %s576 = scalar_lea.vmem %s309, 8
      %577 = vst.msk [vmem:[%s576] sm:$0xf] %vm440, %v572
      %578 = vst.msk [vmem:[%s576 + $0x4] sm:$0xf] %vm440, %v573
      %v579 = vmul.f32 %v562, %v562
      %v580 = vmul.f32 %v565, %v565
      %v581 = vsel %vm445, %v579, 0.0
      %v582 = vsel %vm445, %v580, 0.0
      %v583 = vadd.f32 %v581, %v582
      %v584 = vrot.slane %v583, 4
      %v585 = vadd.f32 %v583, %v584
      %v586 = vrot.slane %v585, 2
      %v587 = vadd.f32 %v585, %v586
      %v588 = vrot.slane %v587, 1
      %v589 = vadd.f32 %v587, %v588
      %v590 = vadd.f32 %v455, %v589
      %s591 = scalar_lea.vmem %s289, 16
      %v592 = vld [vmem:[%s591] sm:$0xf]
      %v593 = vld [vmem:[%s591 + $0x4] sm:$0xf]
      %v594 = vld [vmem:[%s2] sm:$0x3]
      %s595 = scalar_lea.vmem %s299, 16
      %v596 = vld [vmem:[%s595] sm:$0xf]
      %v597 = vld [vmem:[%s595 + $0x4] sm:$0xf]
      %v598 = vld [vmem:[%s3] sm:$0xf]
      %v601 = vunpack.c.l.b16 %v596
      %v602 = vunpack.c.l.b16 %v597
      %v603 = vpack.c.b16 %v602, %v601
      %v605 = vsel %vm329, %v603, 0
      %v608 = vsel %vm333, %v598, 0
      %610 = vmatprep.subr.bf16.mxu0 0
      %611 = vmatpush1.bf16.msra.mxu0 0
      %612 = vmatprep.subr.bf16.mxu0 0
      %613 = vmatpush1.bf16.msra.mxu0 0
      %614 = vmatprep.subr.bf16.mxu0 0
      %615 = vmatpush1.bf16.msra.mxu0 0
      %616 = vmatprep.subr.bf16.mxu0 0
      %617 = vmatpush1.bf16.msra.mxu0 0
      %618 = vmatprep.subr.bf16.mxu0 0
      %619 = vmatpush1.bf16.msra.mxu0 0
      %620 = vmatprep.subr.bf16.mxu0 0
      %621 = vmatpush1.bf16.msra.mxu0 0
      %622 = vmatprep.subr.bf16.mxu0 0
      %623 = vmatpush1.bf16.msra.mxu0 0
      %624 = vmatprep.subr.bf16.mxu0 0
      %625 = vmatpush1.bf16.msra.mxu0 %v608
      %626 = vmatprep.subr.bf16.mxu0 0
      %627 = vmatpush2.bf16.msra.mxu0 0
      %628 = vmatprep.subr.bf16.mxu0 0
      %629 = vmatpush2.bf16.msra.mxu0 0
      %630 = vmatprep.subr.bf16.mxu0 0
      %631 = vmatpush2.bf16.msra.mxu0 0
      %632 = vmatprep.subr.bf16.mxu0 0
      %633 = vmatpush2.bf16.msra.mxu0 0
      %634 = vmatprep.subr.bf16.mxu0 0
      %635 = vmatpush2.bf16.msra.mxu0 0
      %636 = vmatprep.subr.bf16.mxu0 0
      %637 = vmatpush2.bf16.msra.mxu0 0
      %638 = vmatprep.subr.bf16.mxu0 0
      %639 = vmatpush2.bf16.msra.mxu0 0
      %640 = vmatprep.subr.bf16.mxu0 0
      %641 = vmatpush2.bf16.msra.mxu0 0
      %642 = vmatprep.mubr.bf16.mxu0 0
      %643 = vmatmul.mubr.bf16.gmra.mxu0 %v605
      %v644 = vpop.f32.mrf.mxu0
      %v645 = vadd.f32 0.0, %v644
      %v646 = vpop.f32.mrf.mxu0
      %v647 = vpop.f32.mrf.mxu0
      %v648 = vadd.f32 0.0, %v647
      %v649 = vpop.f32.mrf.mxu0
      %650 = vdwg.mxu0
      %v653 = vunpack.c.l.b16 %v592
      %v654 = vunpack.c.l.b16 %v593
      %v655 = vpack.c.b16 %v654, %v653
      %v657 = vsel %vm383, %v655, 0
      %v660 = vsel %vm387, %v594, 0
      %662 = vmatprep.subr.bf16.mxu0 0
      %663 = vmatpush1.bf16.msra.mxu0 0
      %664 = vmatprep.subr.bf16.mxu0 0
      %665 = vmatpush1.bf16.msra.mxu0 0
      %666 = vmatprep.subr.bf16.mxu0 0
      %667 = vmatpush1.bf16.msra.mxu0 0
      %668 = vmatprep.subr.bf16.mxu0 0
      %669 = vmatpush1.bf16.msra.mxu0 0
      %670 = vmatprep.subr.bf16.mxu0 0
      %671 = vmatpush1.bf16.msra.mxu0 0
      %672 = vmatprep.subr.bf16.mxu0 0
      %673 = vmatpush1.bf16.msra.mxu0 0
      %674 = vmatprep.subr.bf16.mxu0 0
      %675 = vmatpush1.bf16.msra.mxu0 0
      %676 = vmatprep.subr.bf16.mxu0 0
      %677 = vmatpush1.bf16.msra.mxu0 %v660
      %678 = vmatprep.subr.bf16.mxu0 0
      %679 = vmatpush2.bf16.msra.mxu0 0
      %680 = vmatprep.subr.bf16.mxu0 0
      %681 = vmatpush2.bf16.msra.mxu0 0
      %682 = vmatprep.subr.bf16.mxu0 0
      %683 = vmatpush2.bf16.msra.mxu0 0
      %684 = vmatprep.subr.bf16.mxu0 0
      %685 = vmatpush2.bf16.msra.mxu0 0
      %686 = vmatprep.subr.bf16.mxu0 0
      %687 = vmatpush2.bf16.msra.mxu0 0
      %688 = vmatprep.subr.bf16.mxu0 0
      %689 = vmatpush2.bf16.msra.mxu0 0
      %690 = vmatprep.subr.bf16.mxu0 0
      %691 = vmatpush2.bf16.msra.mxu0 0
      %692 = vmatprep.subr.bf16.mxu0 0
      %693 = vmatpush2.bf16.msra.mxu0 0
      %694 = vmatprep.mubr.bf16.mxu0 0
      %695 = vmatmul.mubr.bf16.gmra.mxu0 %v657
      %v696 = vpop.f32.mrf.mxu0
      %v697 = vadd.f32 %v645, %v696
      %v698 = vpop.f32.mrf.mxu0
      %v699 = vpop.f32.mrf.mxu0
      %v700 = vadd.f32 %v648, %v699
      %v701 = vpop.f32.mrf.mxu0
      %702 = vdwg.mxu0
      %v703 = vpack.c.bf16 %v700, %v697
      %v705 = vunpack.c.l.b16 %v703
      %v706 = vunpack.c.h.b16 %v703
      %v707 = vpack.c.b16 %v705, %v705
      %v708 = vpack.c.b16 %v706, %v706
      %s711 = scalar_lea.vmem %s309, 16
      %712 = vst.msk [vmem:[%s711] sm:$0xf] %vm440, %v707
      %713 = vst.msk [vmem:[%s711 + $0x4] sm:$0xf] %vm440, %v708
      %v714 = vmul.f32 %v697, %v697
      %v715 = vmul.f32 %v700, %v700
      %v716 = vsel %vm445, %v714, 0.0
      %v717 = vsel %vm445, %v715, 0.0
      %v718 = vadd.f32 %v716, %v717
      %v719 = vrot.slane %v718, 4
      %v720 = vadd.f32 %v718, %v719
      %v721 = vrot.slane %v720, 2
      %v722 = vadd.f32 %v720, %v721
      %v723 = vrot.slane %v722, 1
      %v724 = vadd.f32 %v722, %v723
      %v725 = vadd.f32 %v590, %v724
      %vm726 = vcmask 253952
      %727 = vst.msk [vmem:[%s316] sm:$0x1] %vm726, %v725
      %s728 = smul.u32 2, %s22
      %p729 = scmp.lt.s32.totalorder %s21, 1
      %s730 = scalar_select %p729, %s21, 1
      %p731 = scmp.lt.s32.totalorder %s728, 1
      %s732 = scalar_select %p731, %s728, 1
      %s733 = smul.addr %s730, 6
      %s734 = sadd.s32 %s732, %s733
      %s735 = smul.addr %s734, 4
      %s736 = scalar_lea.vmem %s4, %s735
      %p737 = scmp.lt.s32.totalorder %s21, 1
      %s738 = scalar_select %p737, %s21, 1
      %p739 = scmp.lt.s32.totalorder %s22, 0
      %s740 = scalar_select %p739, %s22, 0
      %s741 = sadd.s32 %s740, %s738
      %s742 = scalar_lea.vmem %s5, %s741
      // Predicated region
      $region37: #{pointnet_fp_q_forward.5} parent=35 // pred_check
        %p743 = pneg %p147
      $region38: #{pointnet_fp_q_forward.5} parent=35 // pred_check_branch
        %745 = sbr.rel (%p743) target = $region40
      $region39: #{pointnet_fp_q_forward.5} parent=35 // pred_region
        %s746 = smul.u32 2, %s22
      $region40: #{pointnet_fp_q_forward.5} parent=35 // pred_fallthru
        _
      // Predicated region
      $region41: #{pointnet_fp_q_forward.5} parent=35 // pred_check
        %p747 = pneg %p175
      $region42: #{pointnet_fp_q_forward.5} parent=35 // pred_check_branch
        %749 = sbr.rel (%p747) target = $region44
      $region43: #{pointnet_fp_q_forward.5} parent=35 // pred_region
        _
      $region44: #{pointnet_fp_q_forward.5} parent=35 // pred_fallthru
        _
    $region36: #{pointnet_fp_q_forward.5} parent=5 // pred_fallthru
      _
    %p750 = scmp.le.s32.totalorder 2, %s12
    // Predicated region
    $region45: #{pointnet_fp_q_forward.5} parent=5 // pred_check
      %p751 = pneg %p750
    $region46: #{pointnet_fp_q_forward.5} parent=5 // pred_check_branch
      %753 = sbr.rel (%p751) target = $region48
    $region47: #{pointnet_fp_q_forward.5} parent=5 // pred_region
      %s754 = ssub.s32 %s12, 2
      // Predicated region
      $region49: #{pointnet_fp_q_forward.5} parent=47 // pred_check
        %p755 = pneg %p153
      $region50: #{pointnet_fp_q_forward.5} parent=47 // pred_check_branch
        %757 = sbr.rel (%p755) target = $region52
      $region51: #{pointnet_fp_q_forward.5} parent=47 // pred_region
        %s758 = smul.u32 2, %s24
        %p759 = scmp.lt.s32.totalorder %s23, 1
        %s760 = scalar_select %p759, %s23, 1
        %p761 = scmp.lt.s32.totalorder %s758, 1
        %s762 = scalar_select %p761, %s758, 1
        %s763 = smul.addr %s760, 6
        %s764 = sadd.s32 %s762, %s763
        %s765 = smul.addr %s764, 4
        %s766 = scalar_lea.vmem %s4, %s765
      $region52: #{pointnet_fp_q_forward.5} parent=47 // pred_fallthru
        _
      // Predicated region
      $region53: #{pointnet_fp_q_forward.5} parent=47 // pred_check
        %p767 = pneg %p181
      $region54: #{pointnet_fp_q_forward.5} parent=47 // pred_check_branch
        %769 = sbr.rel (%p767) target = $region56
      $region55: #{pointnet_fp_q_forward.5} parent=47 // pred_region
        %p770 = scmp.lt.s32.totalorder %s23, 1
        %s771 = scalar_select %p770, %s23, 1
        %p772 = scmp.lt.s32.totalorder %s24, 0
        %s773 = scalar_select %p772, %s24, 0
        %s774 = sadd.s32 %s773, %s771
        %s775 = scalar_lea.vmem %s5, %s774
      $region56: #{pointnet_fp_q_forward.5} parent=47 // pred_fallthru
        _
    $region48: #{pointnet_fp_q_forward.5} parent=5 // pred_fallthru
      _
  $region6: #{pointnet_fp_q_forward.5} parent=0 // loop_footer
    %s16 = sadd.s32 1, %s12
  $region7: #{pointnet_fp_q_forward.5} parent=0 // loop_footer_branch
    %11 = sbr.rel target = $region3
  $region8: #{pointnet_fp_q_forward.5} parent=0 // loop_exit
    _

// kernel: pointnet_fp_q_forward.4
$region0: #{pointnet_fp_q_forward.4}
  #allocation0 [shape = 'u32[]', space=smem, size = 0x4, offset = 0x4, fixed_abs, tag = 'smem constant byte address 0x4 - core index']
  #allocation1 [shape = 'u32[144,128]{1,0:T(1,128)}', space=vmem, size = 0x12000, scoped, tag = 'internal scratch']
  %s0 = inlined_call_operand.vmem [shape: f32[2,16,3], index: 0, kind: input, shape index: {}]
  %s1 = inlined_call_operand.vmem [shape: f32[2,3,8], index: 1, kind: input, shape index: {}]
  %s2 = inlined_call_operand.vmem [shape: bf16[2,3,8,8], index: 2, kind: input, shape index: {}]
  %s3 = inlined_call_operand.vmem [shape: bf16[2,3,16,8], index: 3, kind: output, shape index: {}]
  %s4 = sld [smem:[#allocation0]]
  $region45: #{pointnet_fp_q_forward.4} parent=0
    _
  %s6 = ssub.s32 1, %s4
  %s7 = scalar_select 0, %s6, %s4
  loop: start=0, step=1, limit=4
  $region2: #{pointnet_fp_q_forward.4} parent=0 // loop_pre_header
    _
  $region3: #{pointnet_fp_q_forward.4} parent=0 // loop_header
    %s9 = sphi 0, %s13
    %p10 = scmp.ge.s32.totalorder %s9, 4
    %s16 = sphi 0, %s28
    %s17 = sphi 0, %s24
    %s18 = sphi 0, %s16
    %s19 = sphi 0, %s17
    %s20 = sphi 0, %s18
    %s21 = sphi 0, %s19
    %s33 = sphi 0, %s35
    %s36 = sphi 0, %s33
    %s37 = sphi 0, %s36
    %s53 = sphi 0, %s37
    %s59 = sphi 0, %s61
    %s62 = sphi 0, %s59
    %s63 = sphi 0, %s62
    %s79 = sphi 0, %s63
    %s85 = sphi 0, %s87
    %s88 = sphi 0, %s85
    %s89 = sphi 0, %s88
    %s105 = sphi 0, %s89
    %s113 = sphi 0, %s115
    %s116 = sphi 0, %s113
    %s117 = sphi 0, %s116
    %s133 = sphi 0, %s117
  $region4: #{pointnet_fp_q_forward.4} parent=0 // loop_header_branch
    %12 = sbr.rel (%p10) target = $region8
  $region5: #{pointnet_fp_q_forward.4} parent=0 // loop_body
    %s14 = ssub.s32 %s9, 1
    %s15 = ssub.s32 %s9, 2
    %s22 = sadd.s32 1, %s17
    %p23 = scmp.ge.s32.totalorder %s22, 1
    %s24 = scalar_select %p23, 0, %s22
    %s25 = sadd.s32 1, %s16
    %s26 = scalar_select %p23, %s25, %s16
    %p27 = scmp.ge.s32.totalorder %s26, 2
    %s28 = scalar_select %p27, 0, %s26
    %s29 = ssub.s32 %s16, %s28
    %s30 = ssub.s32 %s17, %s24
    %s31 = sor.u32 %s29, %s30
    %p32 = scmp.eq.s32.totalorder %s31, 0
    %s34 = sadd.s32 %s33, 1
    %s35 = scalar_select %p32, %s33, %s34
    %p38 = pneg %p32
    %p39 = scmp.eq.s32.totalorder %s9, 1
    %p40 = por %p38, %p39
    %p41 = scmp.ne.s32.totalorder %s33, %s36
    %p42 = scmp.eq.s32.totalorder %s9, 0
    %p43 = por %p41, %p42
    %p44 = scmp.ne.s32.totalorder %s33, %s36
    %p45 = scmp.eq.s32.totalorder %s14, 1
    %p46 = por %p44, %p45
    %p47 = scmp.ne.s32.totalorder %s36, %s37
    %p48 = scmp.eq.s32.totalorder %s14, 0
    %p49 = por %p47, %p48
    %p50 = scmp.ne.s32.totalorder %s36, %s37
    %p51 = scmp.eq.s32.totalorder %s15, 1
    %p52 = por %p50, %p51
    %p54 = scmp.ne.s32.totalorder %s37, %s53
    %p55 = scmp.eq.s32.totalorder %s15, 0
    %p56 = por %p54, %p55
    %s57 = ssub.s32 %s16, %s28
    %p58 = scmp.eq.s32.totalorder %s57, 0
    %s60 = sadd.s32 %s59, 1
    %s61 = scalar_select %p58, %s59, %s60
    %p64 = pneg %p58
    %p65 = scmp.eq.s32.totalorder %s9, 1
    %p66 = por %p64, %p65
    %p67 = scmp.ne.s32.totalorder %s59, %s62
    %p68 = scmp.eq.s32.totalorder %s9, 0
    %p69 = por %p67, %p68
    %p70 = scmp.ne.s32.totalorder %s59, %s62
    %p71 = scmp.eq.s32.totalorder %s14, 1
    %p72 = por %p70, %p71
    %p73 = scmp.ne.s32.totalorder %s62, %s63
    %p74 = scmp.eq.s32.totalorder %s14, 0
    %p75 = por %p73, %p74
    %p76 = scmp.ne.s32.totalorder %s62, %s63
    %p77 = scmp.eq.s32.totalorder %s15, 1
    %p78 = por %p76, %p77
    %p80 = scmp.ne.s32.totalorder %s63, %s79
    %p81 = scmp.eq.s32.totalorder %s15, 0
    %p82 = por %p80, %p81
    %s83 = ssub.s32 %s16, %s28
    %p84 = scmp.eq.s32.totalorder %s83, 0
    %s86 = sadd.s32 %s85, 1
    %s87 = scalar_select %p84, %s85, %s86
    %p90 = pneg %p84
    %p91 = scmp.eq.s32.totalorder %s9, 1
    %p92 = por %p90, %p91
    %p93 = scmp.ne.s32.totalorder %s85, %s88
    %p94 = scmp.eq.s32.totalorder %s9, 0
    %p95 = por %p93, %p94
    %p96 = scmp.ne.s32.totalorder %s85, %s88
    %p97 = scmp.eq.s32.totalorder %s14, 1
    %p98 = por %p96, %p97
    %p99 = scmp.ne.s32.totalorder %s88, %s89
    %p100 = scmp.eq.s32.totalorder %s14, 0
    %p101 = por %p99, %p100
    %p102 = scmp.ne.s32.totalorder %s88, %s89
    %p103 = scmp.eq.s32.totalorder %s15, 1
    %p104 = por %p102, %p103
    %p106 = scmp.ne.s32.totalorder %s89, %s105
    %p107 = scmp.eq.s32.totalorder %s15, 0
    %p108 = por %p106, %p107
    %s109 = ssub.s32 %s16, %s28
    %s110 = ssub.s32 %s17, %s24
    %s111 = sor.u32 %s109, %s110
    %p112 = scmp.eq.s32.totalorder %s111, 0
    %s114 = sadd.s32 %s113, 1
    %s115 = scalar_select %p112, %s113, %s114
    %p118 = pneg %p112
    %p119 = scmp.eq.s32.totalorder %s9, 1
    %p120 = por %p118, %p119
    %p121 = scmp.ne.s32.totalorder %s113, %s116
    %p122 = scmp.eq.s32.totalorder %s9, 0
    %p123 = por %p121, %p122
    %p124 = scmp.ne.s32.totalorder %s113, %s116
    %p125 = scmp.eq.s32.totalorder %s14, 1
    %p126 = por %p124, %p125
    %p127 = scmp.ne.s32.totalorder %s116, %s117
    %p128 = scmp.eq.s32.totalorder %s14, 0
    %p129 = por %p127, %p128
    %p130 = scmp.ne.s32.totalorder %s116, %s117
    %p131 = scmp.eq.s32.totalorder %s15, 1
    %p132 = por %p130, %p131
    %p134 = scmp.ne.s32.totalorder %s117, %s133
    %p135 = scmp.eq.s32.totalorder %s15, 0
    %p136 = por %p134, %p135
    %p137 = scmp.le.s32.totalorder 1, %s9
    %p138 = scmp.lt.s32.totalorder %s9, 3
    %p139 = pnand %p137, %p138
    %p140 = pneg %p139
    // Predicated region
    $region9: #{pointnet_fp_q_forward.4} parent=5 // pred_check
      _
    $region10: #{pointnet_fp_q_forward.4} parent=5 // pred_check_branch
      %142 = sbr.rel (%p139) target = $region12
    $region11: #{pointnet_fp_q_forward.4} parent=5 // pred_region
      %s143 = ssub.s32 %s9, 1
    $region12: #{pointnet_fp_q_forward.4} parent=5 // pred_fallthru
      _
    %p144 = scmp.lt.s32.totalorder %s9, 2
    // Predicated region
    $region13: #{pointnet_fp_q_forward.4} parent=5 // pred_check
      %p145 = pneg %p144
    $region14: #{pointnet_fp_q_forward.4} parent=5 // pred_check_branch
      %147 = sbr.rel (%p145) target = $region16
    $region15: #{pointnet_fp_q_forward.4} parent=5 // pred_region
      // Predicated region
      $region17: #{pointnet_fp_q_forward.4} parent=15 // pred_check
        %p148 = pneg %p43
      $region18: #{pointnet_fp_q_forward.4} parent=15 // pred_check_branch
        %150 = sbr.rel (%p148) target = $region20
      $region19: #{pointnet_fp_q_forward.4} parent=15 // pred_region
        %s151 = smul.u32 2, %s17
        %p152 = scmp.lt.s32.totalorder %s16, 1
        %s153 = scalar_select %p152, %s16, 1
        %p154 = scmp.lt.s32.totalorder %s151, 1
        %s155 = scalar_select %p154, %s151, 1
        %s156 = smul.addr %s153, 2
        %s157 = sadd.s32 %s155, %s156
        %s158 = smul.addr %s157, 8
        %s159 = scalar_lea.vmem %s0, %s158
        %s160 = smul.u32 2, %s17
      $region20: #{pointnet_fp_q_forward.4} parent=15 // pred_fallthru
        _
      // Predicated region
      $region21: #{pointnet_fp_q_forward.4} parent=15 // pred_check
        %p161 = pneg %p69
      $region22: #{pointnet_fp_q_forward.4} parent=15 // pred_check_branch
        %163 = sbr.rel (%p161) target = $region24
      $region23: #{pointnet_fp_q_forward.4} parent=15 // pred_region
        %p164 = scmp.lt.s32.totalorder %s16, 1
        %s165 = scalar_select %p164, %s16, 1
        %s166 = smul.addr %s165, 4
        %s167 = scalar_lea.vmem %s1, %s166
      $region24: #{pointnet_fp_q_forward.4} parent=15 // pred_fallthru
        _
      // Predicated region
      $region25: #{pointnet_fp_q_forward.4} parent=15 // pred_check
        %p168 = pneg %p95
      $region26: #{pointnet_fp_q_forward.4} parent=15 // pred_check_branch
        %170 = sbr.rel (%p168) target = $region28
      $region27: #{pointnet_fp_q_forward.4} parent=15 // pred_region
        %p171 = scmp.lt.s32.totalorder %s16, 1
        %s172 = scalar_select %p171, %s16, 1
        %s173 = smul.addr %s172, 3
        %s174 = smul.addr %s173, 4
        %s175 = scalar_lea.vmem %s2, %s174
      $region28: #{pointnet_fp_q_forward.4} parent=15 // pred_fallthru
        _
    $region16: #{pointnet_fp_q_forward.4} parent=5 // pred_fallthru
      _
    %p176 = scmp.le.s32.totalorder 1, %s9
    %p177 = scmp.lt.s32.totalorder %s9, 3
    %p178 = pnand %p176, %p177
    %p179 = pneg %p178
    // Predicated region
    $region29: #{pointnet_fp_q_forward.4} parent=5 // pred_check
      _
    $region30: #{pointnet_fp_q_forward.4} parent=5 // pred_check_branch
      %181 = sbr.rel (%p178) target = $region32
    $region31: #{pointnet_fp_q_forward.4} parent=5 // pred_region
      %s182 = ssub.s32 %s9, 1
      %s183 = smul.u32 2, %s19
      %p184 = scmp.lt.s32.totalorder %s18, 1
      %s185 = scalar_select %p184, %s18, 1
      %p186 = scmp.lt.s32.totalorder %s183, 1
      %s187 = scalar_select %p186, %s183, 1
      %s188 = smul.addr %s185, 2
      %s189 = sadd.s32 %s187, %s188
      %s190 = smul.addr %s189, 8
      %s191 = scalar_lea.vmem %s0, %s190
      %p192 = pneg %p49
      %p193 = pneg %p46
      %p194 = scmp.lt.s32.totalorder %s18, 1
      %s195 = scalar_select %p194, %s18, 1
      %s196 = smul.addr %s195, 4
      %s197 = scalar_lea.vmem %s1, %s196
      %p198 = pneg %p75
      %p199 = pneg %p72
      %p200 = scmp.lt.s32.totalorder %s18, 1
      %s201 = scalar_select %p200, %s18, 1
      %s202 = smul.addr %s201, 3
      %s203 = smul.addr %s202, 4
      %s204 = scalar_lea.vmem %s2, %s203
      %p205 = pneg %p101
      %p206 = pneg %p98
      %p207 = pneg %p129
      %p208 = pneg %p126
      %s209 = smul.u32 2, %s19
      %p210 = scmp.lt.s32.totalorder %s18, 1
      %s211 = scalar_select %p210, %s18, 1
      %p212 = scmp.lt.s32.totalorder %s209, 1
      %s213 = scalar_select %p212, %s209, 1
      %s214 = smul.addr %s211, 6
      %s215 = sadd.s32 %s213, %s214
      %s216 = smul.addr %s215, 4
      %s217 = scalar_lea.vmem %s3, %s216
      %s218 = smul.u32 2, %s19
      %p219 = scmp.lt.s32.totalorder %s18, 1
      %s220 = scalar_select %p219, %s18, 1
      %p221 = scmp.lt.s32.totalorder %s218, 1
      %s222 = scalar_select %p221, %s218, 1
      %s223 = smul.addr %s220, 2
      %s224 = sadd.s32 %s222, %s223
      %s225 = smul.addr %s224, 8
      %s226 = scalar_lea.vmem %s0, %s225
      %s227 = smul.u32 2, %s19
      %p228 = scmp.lt.s32.totalorder %s18, 1
      %s229 = scalar_select %p228, %s18, 1
      %s230 = smul.addr %s229, 4
      %s231 = scalar_lea.vmem %s1, %s230
      %p232 = scmp.lt.s32.totalorder %s18, 1
      %s233 = scalar_select %p232, %s18, 1
      %s234 = smul.addr %s233, 3
      %s235 = smul.addr %s234, 4
      %s236 = scalar_lea.vmem %s2, %s235
      %s237 = smul.u32 2, %s19
      %p238 = scmp.lt.s32.totalorder %s18, 1
      %s239 = scalar_select %p238, %s18, 1
      %p240 = scmp.lt.s32.totalorder %s237, 1
      %s241 = scalar_select %p240, %s237, 1
      %s242 = smul.addr %s239, 6
      %s243 = sadd.s32 %s241, %s242
      %s244 = smul.addr %s243, 4
      %s245 = scalar_lea.vmem %s3, %s244
      %s246 = smul.u32 2, %s19
      %v248 = vld [vmem:[%s226] sm:$0xff]
      %v249 = vld [vmem:[%s226 + $0x8] sm:$0xff]
      %v250 = vld [vmem:[%s231] sm:$0x7]
      %252 = vset.pattern.permute.xlu0 0
      %253 = vperm.xlu0 %252, %v248
      %v254 = vpop.permute.xlu0 %253
      %257 = vset.pattern.permute.xlu0 0
      %258 = vperm.xlu0 %257, %v249
      %v259 = vpop.permute.xlu0 %258
      %v261 = vlaneseq
      %v262 = vshrl.u32 %v261, 7
      %v263 = vsub.s32 0, %v262
      %v264 = vrot.slane %v250, %v263
      %v265 = vsub.f32 %v254, %v264
      %v266 = vsub.f32 %v259, %v264
      %v267 = vmul.f32 %v265, %v265
      %v268 = vmul.f32 %v266, %v266
      %v269 = vadd.f32 %v267, 0.0
      %v270 = vadd.f32 %v268, 0.0
      %271 = vset.pattern.permute.xlu0 1
      %272 = vperm.xlu0 %271, %v248
      %v273 = vpop.permute.xlu0 %272
      %275 = vset.pattern.permute.xlu0 1
      %276 = vperm.xlu0 %275, %v249
      %v277 = vpop.permute.xlu0 %276
      %v279 = vlaneseq
      %v280 = vshrl.u32 %v279, 7
      %v281 = vsub.s32 1, %v280
      %v282 = vrot.slane %v250, %v281
      %v283 = vsub.f32 %v273, %v282
      %v284 = vsub.f32 %v277, %v282
      %v285 = vmul.f32 %v283, %v283
      %v286 = vmul.f32 %v284, %v284
      %v287 = vadd.f32 %v269, %v285
      %v288 = vadd.f32 %v270, %v286
      %289 = vset.pattern.permute.xlu0 2
      %290 = vperm.xlu0 %289, %v248
      %v291 = vpop.permute.xlu0 %290
      %293 = vset.pattern.permute.xlu0 2
      %294 = vperm.xlu0 %293, %v249
      %v295 = vpop.permute.xlu0 %294
      %v297 = vlaneseq
      %v298 = vshrl.u32 %v297, 7
      %v299 = vsub.s32 2, %v298
      %v300 = vrot.slane %v250, %v299
      %v301 = vsub.f32 %v291, %v300
      %v302 = vsub.f32 %v295, %v300
      %v303 = vmul.f32 %v301, %v301
      %v304 = vmul.f32 %v302, %v302
      %v305 = vadd.f32 %v287, %v303
      %v306 = vadd.f32 %v288, %v304
      %v307 = vlaneseq
      %v308 = vand.u32 %v307, 127
      %v311 = vand.u32 %v305, 4294967288
      %v312 = vand.u32 %v306, 4294967288
      %v313 = vor.u32 %v311, %v308
      %v314 = vor.u32 %v312, %v308
      %vm315 = vcmask 64512
      %v316 = vsel %vm315, %v313, 2147483647
      %v317 = vand.u32 %v316, 65535
      %v318 = vshra.s32 %v316, 16
      %v319 = vcvt.s32.f32 %v317
      %v320 = vcvt.s32.f32 %v318
      %321 = vmin.xlane.f32.xlu0 %v320
      %v322 = vpop.xlane.xlu0 %321
      %vm323 = vcmp.eq.f32.partialorder %v320, %v322
      %v324 = vsel %vm323, %v319, inf
      %325 = vmin.xlane.f32.xlu0 %v324
      %v326 = vpop.xlane.xlu0 %325
      %v327 = vcvt.f32.s32 %v326
      %v328 = vcvt.f32.s32 %v322
      %v329 = vshll.u32 %v328, 16
      %v330 = vadd.s32 %v329, %v327
      %v331 = vsel %vm315, %v314, 2147483647
      %v332 = vand.u32 %v331, 65535
      %v333 = vshra.s32 %v331, 16
      %v334 = vcvt.s32.f32 %v332
      %v335 = vcvt.s32.f32 %v333
      %336 = vmin.xlane.f32.xlu0 %v335
      %v337 = vpop.xlane.xlu0 %336
      %vm338 = vcmp.eq.f32.partialorder %v335, %v337
      %v339 = vsel %vm338, %v334, inf
      %340 = vmin.xlane.f32.xlu0 %v339
      %v341 = vpop.xlane.xlu0 %340
      %v342 = vcvt.f32.s32 %v341
      %v343 = vcvt.f32.s32 %v337
      %v344 = vshll.u32 %v343, 16
      %v345 = vadd.s32 %v344, %v342
      %v346 = vand.u32 %v330, 7
      %v347 = vand.u32 %v345, 7
      %v348 = vand.u32 %v330, 4294967288
      %v349 = vand.u32 %v345, 4294967288
      %v352 = vmax.f32 %v348, 1e-10
      %v353 = vmax.f32 %v349, 1e-10
      %v354 = vrcp.pop %v352
      %v355 = vmul.f32 1.0, %v354
      %v356 = vrcp.pop %v353
      %v357 = vmul.f32 1.0, %v356
      %vm358 = vcmp.eq.s32.totalorder %v308, %v346
      %vm359 = vcmp.eq.s32.totalorder %v308, %v347
      %v360 = vsel %vm358, %v355, 0.0
      %v361 = vsel %vm359, %v357, 0.0
      %v362 = vadd.f32 %v360, 0.0
      %v363 = vadd.f32 %v361, 0.0
      %v364 = vadd.f32 %v355, 0.0
      %v365 = vadd.f32 %v357, 0.0
      %v366 = vsel %vm358, 2147483647, %v313
      %v367 = vsel %vm359, 2147483647, %v314
      %v368 = vsel %vm315, %v366, 2147483647
      %v369 = vand.u32 %v368, 65535
      %v370 = vshra.s32 %v368, 16
      %v371 = vcvt.s32.f32 %v369
      %v372 = vcvt.s32.f32 %v370
      %373 = vmin.xlane.f32.xlu0 %v372
      %v374 = vpop.xlane.xlu0 %373
      %vm375 = vcmp.eq.f32.partialorder %v372, %v374
      %v376 = vsel %vm375, %v371, inf
      %377 = vmin.xlane.f32.xlu0 %v376
      %v378 = vpop.xlane.xlu0 %377
      %v379 = vcvt.f32.s32 %v378
      %v380 = vcvt.f32.s32 %v374
      %v381 = vshll.u32 %v380, 16
      %v382 = vadd.s32 %v381, %v379
      %v383 = vsel %vm315, %v367, 2147483647
      %v384 = vand.u32 %v383, 65535
      %v385 = vshra.s32 %v383, 16
      %v386 = vcvt.s32.f32 %v384
      %v387 = vcvt.s32.f32 %v385
      %388 = vmin.xlane.f32.xlu0 %v387
      %v389 = vpop.xlane.xlu0 %388
      %vm390 = vcmp.eq.f32.partialorder %v387, %v389
      %v391 = vsel %vm390, %v386, inf
      %392 = vmin.xlane.f32.xlu0 %v391
      %v393 = vpop.xlane.xlu0 %392
      %v394 = vcvt.f32.s32 %v393
      %v395 = vcvt.f32.s32 %v389
      %v396 = vshll.u32 %v395, 16
      %v397 = vadd.s32 %v396, %v394
      %v398 = vand.u32 %v382, 7
      %v399 = vand.u32 %v397, 7
      %v400 = vand.u32 %v382, 4294967288
      %v401 = vand.u32 %v397, 4294967288
      %v404 = vmax.f32 %v400, 1e-10
      %v405 = vmax.f32 %v401, 1e-10
      %v406 = vrcp.pop %v404
      %v407 = vmul.f32 1.0, %v406
      %v408 = vrcp.pop %v405
      %v409 = vmul.f32 1.0, %v408
      %vm410 = vcmp.eq.s32.totalorder %v308, %v398
      %vm411 = vcmp.eq.s32.totalorder %v308, %v399
      %v412 = vsel %vm410, %v407, 0.0
      %v413 = vsel %vm411, %v409, 0.0
      %v414 = vadd.f32 %v362, %v412
      %v415 = vadd.f32 %v363, %v413
      %v416 = vadd.f32 %v364, %v407
      %v417 = vadd.f32 %v365, %v409
      %v418 = vsel %vm410, 2147483647, %v366
      %v419 = vsel %vm411, 2147483647, %v367
      %v420 = vsel %vm315, %v418, 2147483647
      %v421 = vand.u32 %v420, 65535
      %v422 = vshra.s32 %v420, 16
      %v423 = vcvt.s32.f32 %v421
      %v424 = vcvt.s32.f32 %v422
      %425 = vmin.xlane.f32.xlu0 %v424
      %v426 = vpop.xlane.xlu0 %425
      %vm427 = vcmp.eq.f32.partialorder %v424, %v426
      %v428 = vsel %vm427, %v423, inf
      %429 = vmin.xlane.f32.xlu0 %v428
      %v430 = vpop.xlane.xlu0 %429
      %v431 = vcvt.f32.s32 %v430
      %v432 = vcvt.f32.s32 %v426
      %v433 = vshll.u32 %v432, 16
      %v434 = vadd.s32 %v433, %v431
      %v435 = vsel %vm315, %v419, 2147483647
      %v436 = vand.u32 %v435, 65535
      %v437 = vshra.s32 %v435, 16
      %v438 = vcvt.s32.f32 %v436
      %v439 = vcvt.s32.f32 %v437
      %440 = vmin.xlane.f32.xlu0 %v439
      %v441 = vpop.xlane.xlu0 %440
      %vm442 = vcmp.eq.f32.partialorder %v439, %v441
      %v443 = vsel %vm442, %v438, inf
      %444 = vmin.xlane.f32.xlu0 %v443
      %v445 = vpop.xlane.xlu0 %444
      %v446 = vcvt.f32.s32 %v445
      %v447 = vcvt.f32.s32 %v441
      %v448 = vshll.u32 %v447, 16
      %v449 = vadd.s32 %v448, %v446
      %v450 = vand.u32 %v434, 7
      %v451 = vand.u32 %v449, 7
      %v452 = vand.u32 %v434, 4294967288
      %v453 = vand.u32 %v449, 4294967288
      %v456 = vmax.f32 %v452, 1e-10
      %v457 = vmax.f32 %v453, 1e-10
      %v458 = vrcp.pop %v456
      %v459 = vmul.f32 1.0, %v458
      %v460 = vrcp.pop %v457
      %v461 = vmul.f32 1.0, %v460
      %vm462 = vcmp.eq.s32.totalorder %v308, %v450
      %vm463 = vcmp.eq.s32.totalorder %v308, %v451
      %v464 = vsel %vm462, %v459, 0.0
      %v465 = vsel %vm463, %v461, 0.0
      %v466 = vadd.f32 %v414, %v464
      %v467 = vadd.f32 %v415, %v465
      %v468 = vadd.f32 %v416, %v459
      %v469 = vadd.f32 %v417, %v461
      %v470 = vrcp.pop %v468
      %v471 = vmul.f32 %v466, %v470
      %v472 = vrcp.pop %v469
      %v473 = vmul.f32 %v467, %v472
      %v474 = vpack.c.bf16 %v473, %v471
      %v475 = vld [vmem:[%s236] sm:$0xf]
      %v477 = vsel %vm315, %v474, 0
      %vm479 = vcmask 1043456
      %v481 = vsel %vm479, %v475, 0
      %483 = vmatprep.subr.bf16.mxu0 0
      %484 = vmatpush1.bf16.msra.mxu0 0
      %485 = vmatprep.subr.bf16.mxu0 0
      %486 = vmatpush1.bf16.msra.mxu0 0
      %487 = vmatprep.subr.bf16.mxu0 0
      %488 = vmatpush1.bf16.msra.mxu0 0
      %489 = vmatprep.subr.bf16.mxu0 0
      %490 = vmatpush1.bf16.msra.mxu0 0
      %491 = vmatprep.subr.bf16.mxu0 0
      %492 = vmatpush1.bf16.msra.mxu0 0
      %493 = vmatprep.subr.bf16.mxu0 0
      %494 = vmatpush1.bf16.msra.mxu0 0
      %495 = vmatprep.subr.bf16.mxu0 0
      %496 = vmatpush1.bf16.msra.mxu0 0
      %497 = vmatprep.subr.bf16.mxu0 0
      %498 = vmatpush1.bf16.msra.mxu0 %v481
      %499 = vmatprep.subr.bf16.mxu0 0
      %500 = vmatpush2.bf16.msra.mxu0 0
      %501 = vmatprep.subr.bf16.mxu0 0
      %502 = vmatpush2.bf16.msra.mxu0 0
      %503 = vmatprep.subr.bf16.mxu0 0
      %504 = vmatpush2.bf16.msra.mxu0 0
      %505 = vmatprep.subr.bf16.mxu0 0
      %506 = vmatpush2.bf16.msra.mxu0 0
      %507 = vmatprep.subr.bf16.mxu0 0
      %508 = vmatpush2.bf16.msra.mxu0 0
      %509 = vmatprep.subr.bf16.mxu0 0
      %510 = vmatpush2.bf16.msra.mxu0 0
      %511 = vmatprep.subr.bf16.mxu0 0
      %512 = vmatpush2.bf16.msra.mxu0 0
      %513 = vmatprep.subr.bf16.mxu0 0
      %514 = vmatpush2.bf16.msra.mxu0 0
      %515 = vmatprep.mubr.bf16.mxu0 0
      %516 = vmatmul.mubr.bf16.gmra.mxu0 %v477
      %v517 = vpop.f32.mrf.mxu0
      %v518 = vadd.f32 0.0, %v517
      %v519 = vpop.f32.mrf.mxu0
      %v520 = vpop.f32.mrf.mxu0
      %v521 = vadd.f32 0.0, %v520
      %v522 = vpop.f32.mrf.mxu0
      %523 = vdwg.mxu0
      %v524 = vpack.c.bf16 %v521, %v518
      %v526 = vunpack.c.l.b16 %v524
      %v527 = vunpack.c.h.b16 %v524
      %v528 = vpack.c.b16 %v526, %v526
      %v529 = vpack.c.b16 %v527, %v527
      %vm532 = vcmask 60416
      %533 = vst.msk [vmem:[%s245] sm:$0xf] %vm532, %v528
      %534 = vst.msk [vmem:[%s245 + $0x4] sm:$0xf] %vm532, %v529
      %s535 = scalar_lea.vmem %s236, 4
      %v536 = vld [vmem:[%s535] sm:$0xf]
      %v538 = vsel %vm479, %v536, 0
      %540 = vmatprep.subr.bf16.mxu0 0
      %541 = vmatpush1.bf16.msra.mxu0 0
      %542 = vmatprep.subr.bf16.mxu0 0
      %543 = vmatpush1.bf16.msra.mxu0 0
      %544 = vmatprep.subr.bf16.mxu0 0
      %545 = vmatpush1.bf16.msra.mxu0 0
      %546 = vmatprep.subr.bf16.mxu0 0
      %547 = vmatpush1.bf16.msra.mxu0 0
      %548 = vmatprep.subr.bf16.mxu0 0
      %549 = vmatpush1.bf16.msra.mxu0 0
      %550 = vmatprep.subr.bf16.mxu0 0
      %551 = vmatpush1.bf16.msra.mxu0 0
      %552 = vmatprep.subr.bf16.mxu0 0
      %553 = vmatpush1.bf16.msra.mxu0 0
      %554 = vmatprep.subr.bf16.mxu0 0
      %555 = vmatpush1.bf16.msra.mxu0 %v538
      %556 = vmatprep.subr.bf16.mxu0 0
      %557 = vmatpush2.bf16.msra.mxu0 0
      %558 = vmatprep.subr.bf16.mxu0 0
      %559 = vmatpush2.bf16.msra.mxu0 0
      %560 = vmatprep.subr.bf16.mxu0 0
      %561 = vmatpush2.bf16.msra.mxu0 0
      %562 = vmatprep.subr.bf16.mxu0 0
      %563 = vmatpush2.bf16.msra.mxu0 0
      %564 = vmatprep.subr.bf16.mxu0 0
      %565 = vmatpush2.bf16.msra.mxu0 0
      %566 = vmatprep.subr.bf16.mxu0 0
      %567 = vmatpush2.bf16.msra.mxu0 0
      %568 = vmatprep.subr.bf16.mxu0 0
      %569 = vmatpush2.bf16.msra.mxu0 0
      %570 = vmatprep.subr.bf16.mxu0 0
      %571 = vmatpush2.bf16.msra.mxu0 0
      %572 = vmatprep.mubr.bf16.mxu0 0
      %573 = vmatmul.mubr.bf16.gmra.mxu0 %v477
      %v574 = vpop.f32.mrf.mxu0
      %v575 = vadd.f32 0.0, %v574
      %v576 = vpop.f32.mrf.mxu0
      %v577 = vpop.f32.mrf.mxu0
      %v578 = vadd.f32 0.0, %v577
      %v579 = vpop.f32.mrf.mxu0
      %580 = vdwg.mxu0
      %v581 = vpack.c.bf16 %v578, %v575
      %v583 = vunpack.c.l.b16 %v581
      %v584 = vunpack.c.h.b16 %v581
      %v585 = vpack.c.b16 %v583, %v583
      %v586 = vpack.c.b16 %v584, %v584
      %s589 = scalar_lea.vmem %s245, 8
      %590 = vst.msk [vmem:[%s589] sm:$0xf] %vm532, %v585
      %591 = vst.msk [vmem:[%s589 + $0x4] sm:$0xf] %vm532, %v586
      %s592 = scalar_lea.vmem %s236, 8
      %v593 = vld [vmem:[%s592] sm:$0xf]
      %v595 = vsel %vm479, %v593, 0
      %597 = vmatprep.subr.bf16.mxu0 0
      %598 = vmatpush1.bf16.msra.mxu0 0
      %599 = vmatprep.subr.bf16.mxu0 0
      %600 = vmatpush1.bf16.msra.mxu0 0
      %601 = vmatprep.subr.bf16.mxu0 0
      %602 = vmatpush1.bf16.msra.mxu0 0
      %603 = vmatprep.subr.bf16.mxu0 0
      %604 = vmatpush1.bf16.msra.mxu0 0
      %605 = vmatprep.subr.bf16.mxu0 0
      %606 = vmatpush1.bf16.msra.mxu0 0
      %607 = vmatprep.subr.bf16.mxu0 0
      %608 = vmatpush1.bf16.msra.mxu0 0
      %609 = vmatprep.subr.bf16.mxu0 0
      %610 = vmatpush1.bf16.msra.mxu0 0
      %611 = vmatprep.subr.bf16.mxu0 0
      %612 = vmatpush1.bf16.msra.mxu0 %v595
      %613 = vmatprep.subr.bf16.mxu0 0
      %614 = vmatpush2.bf16.msra.mxu0 0
      %615 = vmatprep.subr.bf16.mxu0 0
      %616 = vmatpush2.bf16.msra.mxu0 0
      %617 = vmatprep.subr.bf16.mxu0 0
      %618 = vmatpush2.bf16.msra.mxu0 0
      %619 = vmatprep.subr.bf16.mxu0 0
      %620 = vmatpush2.bf16.msra.mxu0 0
      %621 = vmatprep.subr.bf16.mxu0 0
      %622 = vmatpush2.bf16.msra.mxu0 0
      %623 = vmatprep.subr.bf16.mxu0 0
      %624 = vmatpush2.bf16.msra.mxu0 0
      %625 = vmatprep.subr.bf16.mxu0 0
      %626 = vmatpush2.bf16.msra.mxu0 0
      %627 = vmatprep.subr.bf16.mxu0 0
      %628 = vmatpush2.bf16.msra.mxu0 0
      %629 = vmatprep.mubr.bf16.mxu0 0
      %630 = vmatmul.mubr.bf16.gmra.mxu0 %v477
      %v631 = vpop.f32.mrf.mxu0
      %v632 = vadd.f32 0.0, %v631
      %v633 = vpop.f32.mrf.mxu0
      %v634 = vpop.f32.mrf.mxu0
      %v635 = vadd.f32 0.0, %v634
      %v636 = vpop.f32.mrf.mxu0
      %637 = vdwg.mxu0
      %v638 = vpack.c.bf16 %v635, %v632
      %v640 = vunpack.c.l.b16 %v638
      %v641 = vunpack.c.h.b16 %v638
      %v642 = vpack.c.b16 %v640, %v640
      %v643 = vpack.c.b16 %v641, %v641
      %s646 = scalar_lea.vmem %s245, 16
      %647 = vst.msk [vmem:[%s646] sm:$0xf] %vm532, %v642
      %648 = vst.msk [vmem:[%s646 + $0x4] sm:$0xf] %vm532, %v643
      %s649 = smul.u32 2, %s19
      %p650 = scmp.lt.s32.totalorder %s18, 1
      %s651 = scalar_select %p650, %s18, 1
      %p652 = scmp.lt.s32.totalorder %s649, 1
      %s653 = scalar_select %p652, %s649, 1
      %s654 = smul.addr %s651, 6
      %s655 = sadd.s32 %s653, %s654
      %s656 = smul.addr %s655, 4
      %s657 = scalar_lea.vmem %s3, %s656
      // Predicated region
      $region33: #{pointnet_fp_q_forward.4} parent=31 // pred_check
        %p658 = pneg %p126
      $region34: #{pointnet_fp_q_forward.4} parent=31 // pred_check_branch
        %660 = sbr.rel (%p658) target = $region36
      $region35: #{pointnet_fp_q_forward.4} parent=31 // pred_region
        %s661 = smul.u32 2, %s19
      $region36: #{pointnet_fp_q_forward.4} parent=31 // pred_fallthru
        _
    $region32: #{pointnet_fp_q_forward.4} parent=5 // pred_fallthru
      _
    %p662 = scmp.le.s32.totalorder 2, %s9
    // Predicated region
    $region37: #{pointnet_fp_q_forward.4} parent=5 // pred_check
      %p663 = pneg %p662
    $region38: #{pointnet_fp_q_forward.4} parent=5 // pred_check_branch
      %665 = sbr.rel (%p663) target = $region40
    $region39: #{pointnet_fp_q_forward.4} parent=5 // pred_region
      %s666 = ssub.s32 %s9, 2
      // Predicated region
      $region41: #{pointnet_fp_q_forward.4} parent=39 // pred_check
        %p667 = pneg %p132
      $region42: #{pointnet_fp_q_forward.4} parent=39 // pred_check_branch
        %669 = sbr.rel (%p667) target = $region44
      $region43: #{pointnet_fp_q_forward.4} parent=39 // pred_region
        %s670 = smul.u32 2, %s21
        %p671 = scmp.lt.s32.totalorder %s20, 1
        %s672 = scalar_select %p671, %s20, 1
        %p673 = scmp.lt.s32.totalorder %s670, 1
        %s674 = scalar_select %p673, %s670, 1
        %s675 = smul.addr %s672, 6
        %s676 = sadd.s32 %s674, %s675
        %s677 = smul.addr %s676, 4
        %s678 = scalar_lea.vmem %s3, %s677
      $region44: #{pointnet_fp_q_forward.4} parent=39 // pred_fallthru
        _
    $region40: #{pointnet_fp_q_forward.4} parent=5 // pred_fallthru
      _
  $region6: #{pointnet_fp_q_forward.4} parent=0 // loop_footer
    %s13 = sadd.s32 1, %s9
  $region7: #{pointnet_fp_q_forward.4} parent=0 // loop_footer_branch
    %8 = sbr.rel target = $region3
  $region8: #{pointnet_fp_q_forward.4} parent=0 // loop_exit
    _

// kernel: pointnet_fp_q_forward.7
$region0: #{pointnet_fp_q_forward.7}
  #allocation0 [shape = 'u32[]', space=smem, size = 0x4, offset = 0x4, fixed_abs, tag = 'smem constant byte address 0x4 - core index']
  #allocation1 [shape = 'u32[144,128]{1,0:T(1,128)}', space=vmem, size = 0x12000, scoped, tag = 'internal scratch']
  %s0 = inlined_call_operand.vmem [shape: bf16[2,3,16,16], index: 0, kind: input, shape index: {}]
  %s1 = inlined_call_operand.vmem [shape: f32[1,16], index: 1, kind: input, shape index: {}]
  %s2 = inlined_call_operand.hbm [shape: f32[6,16,16], index: 2, kind: output, shape index: {}]
  %s3 = sld [smem:[#allocation0]]
  $region41: #{pointnet_fp_q_forward.7} parent=0
    _
  %s5 = ssub.s32 1, %s3
  %s6 = scalar_select 0, %s5, %s3
  $region1: #{pointnet_fp_q_forward.7} parent=0
    #allocation2 [shape = 'u8[49152]{0}', space=vmem, size = 0xc000, scoped, tag = 'output window, operand 0']
    #allocation3 [shape = 's32[2]{0}', space=sflag, size = 0x8, scoped, tag = 'scoped memory for pointnet_fp_q_forward.7']
    %7 = vsyncpa [#allocation3], 0
    %s8 = scalar_lea.sflag [#allocation3], 1
    %9 = vsyncpa %s8, 0
    loop: start=0, step=1, limit=4
    $region2: #{pointnet_fp_q_forward.7} parent=1 // loop_pre_header
      _
    $region3: #{pointnet_fp_q_forward.7} parent=1 // loop_header
      %s11 = sphi 0, %s15
      %p12 = scmp.ge.s32.totalorder %s11, 4
      %s18 = sphi 0, %s30
      %s19 = sphi 0, %s26
      %s20 = sphi 0, %s18
      %s21 = sphi 0, %s19
      %s22 = sphi 0, %s20
      %s23 = sphi 0, %s21
      %s35 = sphi 0, %s37
      %s38 = sphi 0, %s35
      %s39 = sphi 0, %s38
      %s55 = sphi 0, %s39
      %s59 = sphi 0, %s59
      %s61 = sphi 0, %s59
      %s62 = sphi 0, %s61
      %s76 = sphi 0, %s62
      %s84 = sphi 0, %s86
      %s87 = sphi 0, %s84
      %s88 = sphi 0, %s87
      %s104 = sphi 0, %s88
    $region4: #{pointnet_fp_q_forward.7} parent=1 // loop_header_branch
      %14 = sbr.rel (%p12) target = $region8
    $region5: #{pointnet_fp_q_forward.7} parent=1 // loop_body
      %s16 = ssub.s32 %s11, 1
      %s17 = ssub.s32 %s11, 2
      %s24 = sadd.s32 1, %s19
      %p25 = scmp.ge.s32.totalorder %s24, 1
      %s26 = scalar_select %p25, 0, %s24
      %s27 = sadd.s32 1, %s18
      %s28 = scalar_select %p25, %s27, %s18
      %p29 = scmp.ge.s32.totalorder %s28, 2
      %s30 = scalar_select %p29, 0, %s28
      %s31 = ssub.s32 %s18, %s30
      %s32 = ssub.s32 %s19, %s26
      %s33 = sor.u32 %s31, %s32
      %p34 = scmp.eq.s32.totalorder %s33, 0
      %s36 = sadd.s32 %s35, 1
      %s37 = scalar_select %p34, %s35, %s36
      %p40 = pneg %p34
      %p41 = scmp.eq.s32.totalorder %s11, 1
      %p42 = por %p40, %p41
      %p43 = scmp.ne.s32.totalorder %s35, %s38
      %p44 = scmp.eq.s32.totalorder %s11, 0
      %p45 = por %p43, %p44
      %p46 = scmp.ne.s32.totalorder %s35, %s38
      %p47 = scmp.eq.s32.totalorder %s16, 1
      %p48 = por %p46, %p47
      %p49 = scmp.ne.s32.totalorder %s38, %s39
      %p50 = scmp.eq.s32.totalorder %s16, 0
      %p51 = por %p49, %p50
      %p52 = scmp.ne.s32.totalorder %s38, %s39
      %p53 = scmp.eq.s32.totalorder %s17, 1
      %p54 = por %p52, %p53
      %p56 = scmp.ne.s32.totalorder %s39, %s55
      %p57 = scmp.eq.s32.totalorder %s17, 0
      %p58 = por %p56, %p57
      %s60 = sadd.s32 %s59, 1
      %p63 = scmp.eq.s32.totalorder %s11, 1
      %p64 = scmp.ne.s32.totalorder %s59, %s61
      %p65 = scmp.eq.s32.totalorder %s11, 0
      %p66 = por %p64, %p65
      %p67 = scmp.ne.s32.totalorder %s59, %s61
      %p68 = scmp.eq.s32.totalorder %s16, 1
      %p69 = por %p67, %p68
      %p70 = scmp.ne.s32.totalorder %s61, %s62
      %p71 = scmp.eq.s32.totalorder %s16, 0
      %p72 = por %p70, %p71
      %p73 = scmp.ne.s32.totalorder %s61, %s62
      %p74 = scmp.eq.s32.totalorder %s17, 1
      %p75 = por %p73, %p74
      %p77 = scmp.ne.s32.totalorder %s62, %s76
      %p78 = scmp.eq.s32.totalorder %s17, 0
      %p79 = por %p77, %p78
      %s80 = ssub.s32 %s18, %s30
      %s81 = ssub.s32 %s19, %s26
      %s82 = sor.u32 %s80, %s81
      %p83 = scmp.eq.s32.totalorder %s82, 0
      %s85 = sadd.s32 %s84, 1
      %s86 = scalar_select %p83, %s84, %s85
      %p89 = pneg %p83
      %p90 = scmp.eq.s32.totalorder %s11, 1
      %p91 = por %p89, %p90
      %p92 = scmp.ne.s32.totalorder %s84, %s87
      %p93 = scmp.eq.s32.totalorder %s11, 0
      %p94 = por %p92, %p93
      %p95 = scmp.ne.s32.totalorder %s84, %s87
      %p96 = scmp.eq.s32.totalorder %s16, 1
      %p97 = por %p95, %p96
      %p98 = scmp.ne.s32.totalorder %s87, %s88
      %p99 = scmp.eq.s32.totalorder %s16, 0
      %p100 = por %p98, %p99
      %p101 = scmp.ne.s32.totalorder %s87, %s88
      %p102 = scmp.eq.s32.totalorder %s17, 1
      %p103 = por %p101, %p102
      %p105 = scmp.ne.s32.totalorder %s88, %s104
      %p106 = scmp.eq.s32.totalorder %s17, 0
      %p107 = por %p105, %p106
      %p108 = scmp.le.s32.totalorder 1, %s11
      %p109 = scmp.lt.s32.totalorder %s11, 3
      %p110 = pnand %p108, %p109
      %p111 = pneg %p110
      // Predicated region
      $region9: #{pointnet_fp_q_forward.7} parent=5 // pred_check
        _
      $region10: #{pointnet_fp_q_forward.7} parent=5 // pred_check_branch
        %113 = sbr.rel (%p110) target = $region12
      $region11: #{pointnet_fp_q_forward.7} parent=5 // pred_region
        %s114 = ssub.s32 %s11, 1
        // Predicated region
        $region13: #{pointnet_fp_q_forward.7} parent=11 // pred_check
          %p115 = pneg %p72
        $region14: #{pointnet_fp_q_forward.7} parent=11 // pred_check_branch
          %117 = sbr.rel (%p115) target = $region16
        $region15: #{pointnet_fp_q_forward.7} parent=11 // pred_region
          _
        $region16: #{pointnet_fp_q_forward.7} parent=11 // pred_fallthru
          _
      $region12: #{pointnet_fp_q_forward.7} parent=5 // pred_fallthru
        _
      %p118 = scmp.lt.s32.totalorder %s11, 2
      // Predicated region
      $region17: #{pointnet_fp_q_forward.7} parent=5 // pred_check
        %p119 = pneg %p118
      $region18: #{pointnet_fp_q_forward.7} parent=5 // pred_check_branch
        %121 = sbr.rel (%p119) target = $region20
      $region19: #{pointnet_fp_q_forward.7} parent=5 // pred_region
        // Predicated region
        $region21: #{pointnet_fp_q_forward.7} parent=19 // pred_check
          %p122 = pneg %p45
        $region22: #{pointnet_fp_q_forward.7} parent=19 // pred_check_branch
          %124 = sbr.rel (%p122) target = $region24
        $region23: #{pointnet_fp_q_forward.7} parent=19 // pred_region
          %s125 = smul.u32 2, %s19
          %p126 = scmp.lt.s32.totalorder %s18, 1
          %s127 = scalar_select %p126, %s18, 1
          %p128 = scmp.lt.s32.totalorder %s125, 1
          %s129 = scalar_select %p128, %s125, 1
          %s130 = smul.addr %s127, 6
          %s131 = sadd.s32 %s129, %s130
          %s132 = smul.addr %s131, 4
          %s133 = scalar_lea.vmem %s0, %s132
          %s134 = smul.u32 2, %s19
        $region24: #{pointnet_fp_q_forward.7} parent=19 // pred_fallthru
          _
      $region20: #{pointnet_fp_q_forward.7} parent=5 // pred_fallthru
        _
      %p135 = scmp.le.s32.totalorder 1, %s11
      %p136 = scmp.lt.s32.totalorder %s11, 3
      %p137 = pnand %p135, %p136
      %p138 = pneg %p137
      // Predicated region
      $region25: #{pointnet_fp_q_forward.7} parent=5 // pred_check
        _
      $region26: #{pointnet_fp_q_forward.7} parent=5 // pred_check_branch
        %140 = sbr.rel (%p137) target = $region28
      $region27: #{pointnet_fp_q_forward.7} parent=5 // pred_region
        %s141 = ssub.s32 %s11, 1
        %s142 = smul.u32 2, %s21
        %p143 = scmp.lt.s32.totalorder %s20, 1
        %s144 = scalar_select %p143, %s20, 1
        %p145 = scmp.lt.s32.totalorder %s142, 1
        %s146 = scalar_select %p145, %s142, 1
        %s147 = smul.addr %s144, 6
        %s148 = sadd.s32 %s146, %s147
        %s149 = smul.addr %s148, 4
        %s150 = scalar_lea.vmem %s0, %s149
        %p151 = pneg %p51
        %p152 = pneg %p48
        %p153 = pneg %p72
        %p154 = pneg %p69
        %p155 = pneg %p100
        %p156 = pneg %p97
        %s157 = sand.u32 %s87, 1
        %s158 = scalar_lea.sflag [#allocation3], %s157
        %s159 = sand.u32 %s87, 1
        %s160 = smul.addr %s159, 48
        %s161 = scalar_lea.vmem [#allocation2], %s160
        %s162 = smul.u32 2, %s21
        %p163 = scmp.lt.s32.totalorder %s20, 1
        %s164 = scalar_select %p163, %s20, 1
        %p165 = scmp.lt.s32.totalorder %s162, 1
        %s166 = scalar_select %p165, %s162, 1
        %s167 = smul.addr %s164, 6
        %s168 = sadd.s32 %s166, %s167
        %s169 = smul.addr %s168, 4
        %s170 = scalar_lea.vmem %s0, %s169
        %s171 = smul.u32 2, %s21
        %s172 = smul.u32 3, %s20
        %v173 = vld [vmem:[%s170] sm:$0xf]
        %v174 = vld [vmem:[%s170 + $0x4] sm:$0xf]
        %v175 = vld [vmem:[%s170 + $0x8] sm:$0xf]
        %v176 = vld [vmem:[%s170 + $0xc] sm:$0xf]
        %v177 = vld [vmem:[%s170 + $0x10] sm:$0xf]
        %v178 = vld [vmem:[%s170 + $0x14] sm:$0xf]
        %v179 = vunpack.c.l.bf16 %v173
        %v180 = vunpack.c.l.bf16 %v174
        %v181 = vunpack.c.l.bf16 %v175
        %v182 = vunpack.c.l.bf16 %v176
        %v183 = vunpack.c.l.bf16 %v177
        %v184 = vunpack.c.l.bf16 %v178
        %v185 = vld [vmem:[%s1] sm:$0x1]
        %v187 = vlaneseq
        %v188 = vshrl.u32 %v187, 7
        %v189 = vsub.s32 0, %v188
        %v190 = vrot.slane %v185, %v189
        %v192 = vmul.f32 %v179, %v190
        %v193 = vmul.f32 %v180, %v190
        %v194 = vmul.f32 %v181, %v190
        %v195 = vmul.f32 %v182, %v190
        %v196 = vmul.f32 %v183, %v190
        %v197 = vmul.f32 %v184, %v190
        %v198 = vmul.f32 %v192, %v192
        %v199 = vmul.f32 %v193, %v193
        %v200 = vmul.f32 %v194, %v194
        %v201 = vmul.f32 %v195, %v195
        %v202 = vmul.f32 %v196, %v196
        %v203 = vmul.f32 %v197, %v197
        %vm204 = vcmask 130048
        %v205 = vsel %vm204, %v198, 0.0
        %v206 = vsel %vm204, %v200, 0.0
        %v207 = vadd.f32 %v205, %v206
        %v208 = vsel %vm204, %v202, 0.0
        %v209 = vadd.f32 %v207, %v208
        %v210 = vsel %vm204, %v199, 0.0
        %v211 = vsel %vm204, %v201, 0.0
        %v212 = vadd.f32 %v210, %v211
        %v213 = vsel %vm204, %v203, 0.0
        %v214 = vadd.f32 %v212, %v213
        %v215 = vrsqrt.pop %v209
        %v216 = vmul.f32 %v209, %v215
        %vm217 = vcmp.eq.f32.partialorder %v209, inf
        %v218 = vsel %vm217, %v209, %v216
        %vm219 = vcmp.eq.f32.partialorder %v209, 0.0
        %v220 = vand.u32 %v209, 2147483648
        %v221 = vsel %vm219, %v220, %v218
        %v222 = vrsqrt.pop %v214
        %v223 = vmul.f32 %v214, %v222
        %vm224 = vcmp.eq.f32.partialorder %v214, inf
        %v225 = vsel %vm224, %v214, %v223
        %vm226 = vcmp.eq.f32.partialorder %v214, 0.0
        %v227 = vand.u32 %v214, 2147483648
        %v228 = vsel %vm226, %v227, %v225
        %v229 = vmin.f32 %v221, 1.0
        %v230 = vmin.f32 %v228, 1.0
        %v231 = vmul.f32 %v192, %v229
        %v232 = vmul.f32 %v193, %v230
        %v233 = vmul.f32 %v194, %v229
        %v234 = vmul.f32 %v195, %v230
        %v235 = vmul.f32 %v196, %v229
        %v236 = vmul.f32 %v197, %v230
        %237 = vxpose.xlu0.b32.start [1/16] %v231, 128
        %238 = vxpose.xlu0.b32.cont [2/16] %v232, 128
        %239 = vxpose.xlu0.b32.cont [3/16] 0.0, 128
        %240 = vxpose.xlu0.b32.cont [4/16] 0.0, 128
        %241 = vxpose.xlu0.b32.cont [5/16] 0.0, 128
        %242 = vxpose.xlu0.b32.cont [6/16] 0.0, 128
        %243 = vxpose.xlu0.b32.cont [7/16] 0.0, 128
        %244 = vxpose.xlu0.b32.cont [8/16] 0.0, 128
        %245 = vxpose.xlu0.b32.cont [9/16] 0.0, 128
        %246 = vxpose.xlu0.b32.cont [10/16] 0.0, 128
        %247 = vxpose.xlu0.b32.cont [11/16] 0.0, 128
        %248 = vxpose.xlu0.b32.cont [12/16] 0.0, 128
        %249 = vxpose.xlu0.b32.cont [13/16] 0.0, 128
        %250 = vxpose.xlu0.b32.cont [14/16] 0.0, 128
        %251 = vxpose.xlu0.b32.cont [15/16] 0.0, 128
        %252 = vxpose.xlu0.b32.end [16/16] 0.0, 128
        %v253 = vpop.trf.xlu0
        %v254 = vpop.trf.xlu0
        %v255 = vpop.trf.xlu0
        %v256 = vpop.trf.xlu0
        %v257 = vpop.trf.xlu0
        %v258 = vpop.trf.xlu0
        %v259 = vpop.trf.xlu0
        %v260 = vpop.trf.xlu0
        %v261 = vpop.trf.xlu0
        %v262 = vpop.trf.xlu0
        %v263 = vpop.trf.xlu0
        %v264 = vpop.trf.xlu0
        %v265 = vpop.trf.xlu0
        %v266 = vpop.trf.xlu0
        %v267 = vpop.trf.xlu0
        %v268 = vpop.trf.xlu0
        %269 = vst.msk [vmem:[%s161] sm:$0xff] %vm204, %v253
        %270 = vst.msk [vmem:[%s161 + $0x8] sm:$0xff] %vm204, %v254
        %271 = vxpose.xlu0.b32.start [1/16] %v233, 128
        %272 = vxpose.xlu0.b32.cont [2/16] %v234, 128
        %273 = vxpose.xlu0.b32.cont [3/16] 0.0, 128
        %274 = vxpose.xlu0.b32.cont [4/16] 0.0, 128
        %275 = vxpose.xlu0.b32.cont [5/16] 0.0, 128
        %276 = vxpose.xlu0.b32.cont [6/16] 0.0, 128
        %277 = vxpose.xlu0.b32.cont [7/16] 0.0, 128
        %278 = vxpose.xlu0.b32.cont [8/16] 0.0, 128
        %279 = vxpose.xlu0.b32.cont [9/16] 0.0, 128
        %280 = vxpose.xlu0.b32.cont [10/16] 0.0, 128
        %281 = vxpose.xlu0.b32.cont [11/16] 0.0, 128
        %282 = vxpose.xlu0.b32.cont [12/16] 0.0, 128
        %283 = vxpose.xlu0.b32.cont [13/16] 0.0, 128
        %284 = vxpose.xlu0.b32.cont [14/16] 0.0, 128
        %285 = vxpose.xlu0.b32.cont [15/16] 0.0, 128
        %286 = vxpose.xlu0.b32.end [16/16] 0.0, 128
        %v287 = vpop.trf.xlu0
        %v288 = vpop.trf.xlu0
        %v289 = vpop.trf.xlu0
        %v290 = vpop.trf.xlu0
        %v291 = vpop.trf.xlu0
        %v292 = vpop.trf.xlu0
        %v293 = vpop.trf.xlu0
        %v294 = vpop.trf.xlu0
        %v295 = vpop.trf.xlu0
        %v296 = vpop.trf.xlu0
        %v297 = vpop.trf.xlu0
        %v298 = vpop.trf.xlu0
        %v299 = vpop.trf.xlu0
        %v300 = vpop.trf.xlu0
        %v301 = vpop.trf.xlu0
        %v302 = vpop.trf.xlu0
        %s303 = scalar_lea.vmem %s161, 16 [#allocation2]
        %304 = vst.msk [vmem:[%s303] sm:$0xff] %vm204, %v287
        %305 = vst.msk [vmem:[%s303 + $0x8] sm:$0xff] %vm204, %v288
        %306 = vxpose.xlu0.b32.start [1/16] %v235, 128
        %307 = vxpose.xlu0.b32.cont [2/16] %v236, 128
        %308 = vxpose.xlu0.b32.cont [3/16] 0.0, 128
        %309 = vxpose.xlu0.b32.cont [4/16] 0.0, 128
        %310 = vxpose.xlu0.b32.cont [5/16] 0.0, 128
        %311 = vxpose.xlu0.b32.cont [6/16] 0.0, 128
        %312 = vxpose.xlu0.b32.cont [7/16] 0.0, 128
        %313 = vxpose.xlu0.b32.cont [8/16] 0.0, 128
        %314 = vxpose.xlu0.b32.cont [9/16] 0.0, 128
        %315 = vxpose.xlu0.b32.cont [10/16] 0.0, 128
        %316 = vxpose.xlu0.b32.cont [11/16] 0.0, 128
        %317 = vxpose.xlu0.b32.cont [12/16] 0.0, 128
        %318 = vxpose.xlu0.b32.cont [13/16] 0.0, 128
        %319 = vxpose.xlu0.b32.cont [14/16] 0.0, 128
        %320 = vxpose.xlu0.b32.cont [15/16] 0.0, 128
        %321 = vxpose.xlu0.b32.end [16/16] 0.0, 128
        %v322 = vpop.trf.xlu0
        %v323 = vpop.trf.xlu0
        %v324 = vpop.trf.xlu0
        %v325 = vpop.trf.xlu0
        %v326 = vpop.trf.xlu0
        %v327 = vpop.trf.xlu0
        %v328 = vpop.trf.xlu0
        %v329 = vpop.trf.xlu0
        %v330 = vpop.trf.xlu0
        %v331 = vpop.trf.xlu0
        %v332 = vpop.trf.xlu0
        %v333 = vpop.trf.xlu0
        %v334 = vpop.trf.xlu0
        %v335 = vpop.trf.xlu0
        %v336 = vpop.trf.xlu0
        %v337 = vpop.trf.xlu0
        %s338 = scalar_lea.vmem %s161, 32 [#allocation2]
        %339 = vst.msk [vmem:[%s338] sm:$0xff] %vm204, %v322
        %340 = vst.msk [vmem:[%s338 + $0x8] sm:$0xff] %vm204, %v323
        %s341 = sand.u32 %s87, 1
        %s342 = scalar_lea.sflag [#allocation3], %s341
        %s343 = sand.u32 %s87, 1
        %s344 = smul.addr %s343, 48
        %s345 = scalar_lea.vmem [#allocation2], %s344
        // Predicated region
        $region29: #{pointnet_fp_q_forward.7} parent=27 // pred_check
          %p346 = pneg %p97
        $region30: #{pointnet_fp_q_forward.7} parent=27 // pred_check_branch
          %348 = sbr.rel (%p346) target = $region32
        $region31: #{pointnet_fp_q_forward.7} parent=27 // pred_region
          %s349 = smul.u32 3, %s20
          %s351 = ssub.s32 768, 768
          %352 = vsyncadd %s342, %s351
          %s353 = smul.addr %s349, 2
          %s354 = sadd.s32 %s21, %s353
          %s355 = smul.addr %s354, 128
          %s356 = scalar_lea.hbm %s2, %s355
          %s357 = sshll.u32 %s345, 4
          %s358 = int_to_ptr.vmem [resolvable:$true] %s357
          %363 = dma.vmem_to_hbm [thread:$0]  %s358, 768, %s356, %s342, 128, 128, 8
        $region32: #{pointnet_fp_q_forward.7} parent=27 // pred_fallthru
          _
      $region28: #{pointnet_fp_q_forward.7} parent=5 // pred_fallthru
        _
      %p364 = scmp.le.s32.totalorder 2, %s11
      // Predicated region
      $region33: #{pointnet_fp_q_forward.7} parent=5 // pred_check
        %p365 = pneg %p364
      $region34: #{pointnet_fp_q_forward.7} parent=5 // pred_check_branch
        %367 = sbr.rel (%p365) target = $region36
      $region35: #{pointnet_fp_q_forward.7} parent=5 // pred_region
        %s368 = ssub.s32 %s11, 2
        // Predicated region
        $region37: #{pointnet_fp_q_forward.7} parent=35 // pred_check
          %p369 = pneg %p103
        $region38: #{pointnet_fp_q_forward.7} parent=35 // pred_check_branch
          %371 = sbr.rel (%p369) target = $region40
        $region39: #{pointnet_fp_q_forward.7} parent=35 // pred_region
          %s372 = sand.u32 %s88, 1
          %s373 = scalar_lea.sflag [#allocation3], %s372
          %s374 = sand.u32 %s88, 1
          %s375 = smul.addr %s374, 48
          %s376 = scalar_lea.vmem [#allocation2], %s375
          %377 = dma.done %s373, 768
        $region40: #{pointnet_fp_q_forward.7} parent=35 // pred_fallthru
          _
      $region36: #{pointnet_fp_q_forward.7} parent=5 // pred_fallthru
        _
    $region6: #{pointnet_fp_q_forward.7} parent=1 // loop_footer
      %s15 = sadd.s32 1, %s11
    $region7: #{pointnet_fp_q_forward.7} parent=1 // loop_footer_branch
      %10 = sbr.rel target = $region3
    $region8: #{pointnet_fp_q_forward.7} parent=1 // loop_exit
      _
    %378 = vsyncpa [#allocation3], 1
    %s379 = scalar_lea.sflag [#allocation3], 1
    %380 = vsyncpa %s379, 1

</llo_original>
